<compile_context>
chip_gen: v6e
topology: v6e:2x2x1
jax: 0.10.0
libtpu: 0.0.40
codegen_flags: <defaults>
</compile_context>

<pallas_src>
import jax
import jax.numpy as jnp
from jax.experimental import pallas as pl
from jax.experimental.pallas import tpu as pltpu


# --------------------------------------------------------------------------
# Generation-aware scoped VMEM limit
# --------------------------------------------------------------------------
def _vmem_limit_bytes():
    # v7x has only 64 MiB physical VMEM per TensorCore; stay well under it and
    # scale up on v5e/v6e (128 MiB) where extra headroom buys bigger tiles.
    try:
        cap = int(pltpu.get_tpu_info().vmem_capacity_bytes)
        return min((cap * 3) // 4, 96 * 1024 * 1024)
    except Exception:
        return 48 * 1024 * 1024


_VMEM_LIMIT = _vmem_limit_bytes()


def _pick_tile(extent, target):
    """Largest multiple-of-8 divisor of `extent` that is <= target (else extent)."""
    t = min(target, extent)
    while t > 8 and extent % t != 0:
        t -= 8
    return t if (t > 0 and extent % t == 0) else extent


# --------------------------------------------------------------------------
# Pallas kernel: M-tiled matmul + bias  (1x1 conv projection)
# --------------------------------------------------------------------------
def _mm_bias_kernel(a_ref, w_ref, b_ref, o_ref):
    acc = jnp.dot(a_ref[...], w_ref[...], preferred_element_type=jnp.float32)
    acc = acc + b_ref[...]
    o_ref[...] = acc.astype(o_ref.dtype)


def mm_bias(a, w, b, *, out_dtype=jnp.float32, tm=256):
    """(M,K) @ (K,N) + bias(1,N); rows tiled, weight block resident in VMEM."""
    M, K = a.shape
    N = w.shape[1]
    tm = _pick_tile(M, tm)
    return pl.pallas_call(
        _mm_bias_kernel,
        out_shape=jax.ShapeDtypeStruct((M, N), out_dtype),
        grid=(M // tm,),
        in_specs=[
            pl.BlockSpec((tm, K), lambda i: (i, 0)),
            pl.BlockSpec((K, N), lambda i: (0, 0)),
            pl.BlockSpec((1, N), lambda i: (0, 0)),
        ],
        out_specs=pl.BlockSpec((tm, N), lambda i: (i, 0)),
        compiler_params=pltpu.CompilerParams(
            dimension_semantics=("parallel",),
            vmem_limit_bytes=_VMEM_LIMIT),
    )(a, w, b)


# --------------------------------------------------------------------------
# Pallas kernel: flash-style positional attention
#   out[b, q, :] = softmax_k(Q[b,q,:] . K[b,k,:]) @ V[b,k,:]  +  x[b,q,:]
# (equivalent to torch.bmm(values, attn.permute(0,2,1)) + x, position-major)
# --------------------------------------------------------------------------
def _pam_flash_kernel(q_ref, k_ref, v_ref, x_ref, o_ref, m_sc, l_sc, acc_sc):
    ki = pl.program_id(2)

    @pl.when(ki == 0)
    def _():
        m_sc[...] = jnp.full_like(m_sc, -jnp.inf)
        l_sc[...] = jnp.zeros_like(l_sc)
        acc_sc[...] = jnp.zeros_like(acc_sc)

    q = q_ref[0]                                   # (tq, C8) bf16
    k = k_ref[0]                                   # (tk, C8) bf16
    s = jax.lax.dot_general(                       # (tq, tk)  = Q K^T, f32
        q, k, dimension_numbers=(((1,), (1,)), ((), ())),
        preferred_element_type=jnp.float32)

    m_prev = m_sc[...]                             # (tq, 1)
    m_new = jnp.maximum(m_prev, jnp.max(s, axis=-1, keepdims=True))
    alpha = jnp.exp(m_prev - m_new)
    p = jnp.exp(s - m_new)
    l_sc[...] = alpha * l_sc[...] + jnp.sum(p, axis=-1, keepdims=True)
    acc_sc[...] = alpha * acc_sc[...] + jnp.dot(
        p.astype(v_ref.dtype), v_ref[0], preferred_element_type=jnp.float32)
    m_sc[...] = m_new

    @pl.when(ki == pl.num_programs(2) - 1)
    def _():
        inv_l = pl.reciprocal(l_sc[...], approx=True)
        o_ref[0] = (acc_sc[...] * inv_l
                    + x_ref[0].astype(jnp.float32)).astype(o_ref.dtype)


def pam_attention(q, k, v, x_res, *, tq=128, tk=128):
    """q,k: (B,HW,C8) bf16; v: (B,HW,C) bf16; x_res: (B,HW,C) f32 residual."""
    B, HW, C8 = q.shape
    C = v.shape[2]
    tq = _pick_tile(HW, tq)
    tk = _pick_tile(HW, tk)
    return pl.pallas_call(
        _pam_flash_kernel,
        out_shape=jax.ShapeDtypeStruct((B, HW, C), jnp.float32),
        grid=(B, HW // tq, HW // tk),
        in_specs=[
            pl.BlockSpec((1, tq, C8), lambda b, qi, ki: (b, qi, 0)),
            pl.BlockSpec((1, tk, C8), lambda b, qi, ki: (b, ki, 0)),
            pl.BlockSpec((1, tk, C), lambda b, qi, ki: (b, ki, 0)),
            pl.BlockSpec((1, tq, C), lambda b, qi, ki: (b, qi, 0)),
        ],
        out_specs=pl.BlockSpec((1, tq, C), lambda b, qi, ki: (b, qi, 0)),
        scratch_shapes=[
            pltpu.VMEM((tq, 1), jnp.float32),      # running max
            pltpu.VMEM((tq, 1), jnp.float32),      # running denom
            pltpu.VMEM((tq, C), jnp.float32),      # output accumulator
        ],
        compiler_params=pltpu.CompilerParams(
            dimension_semantics=("parallel", "parallel", "arbitrary"),
            vmem_limit_bytes=_VMEM_LIMIT),
    )(q, k, v, x_res)


# --------------------------------------------------------------------------
# Module: PositionalAttentionModule forward
# --------------------------------------------------------------------------
def pam_forward(x_nchw, params, *, tm=256, tq=128, tk=128):
    """PositionalAttentionModule(in_channels) forward.  x: (B, C, H, W) f32."""
    x = jnp.transpose(x_nchw, (0, 2, 3, 1)).astype(jnp.float32)   # NHWC
    B, H, W, C = x.shape
    HW = H * W
    C8 = params["Wq"].shape[1]

    x2 = x.reshape(B * HW, C)
    x_bf = x2.astype(jnp.bfloat16)
    wq = params["Wq"].astype(jnp.bfloat16)
    wk = params["Wk"].astype(jnp.bfloat16)
    wv = params["Wv"].astype(jnp.bfloat16)

    # 1x1 conv projections (bf16 in, f32 MXU accumulate, bf16 out).
    q = mm_bias(x_bf, wq, params["bq"], out_dtype=jnp.bfloat16, tm=tm)
    k = mm_bias(x_bf, wk, params["bk"], out_dtype=jnp.bfloat16, tm=tm)
    v = mm_bias(x_bf, wv, params["bv"], out_dtype=jnp.bfloat16, tm=tm)

    q = q.reshape(B, HW, C8)
    k = k.reshape(B, HW, C8)
    v = v.reshape(B, HW, C)
    x_res = x.reshape(B, HW, C)

    # fused: softmax(Q K^T) @ V + x   (flash-style, attn never hits HBM)
    out = pam_attention(q, k, v, x_res, tq=tq, tk=tk)              # (B,HW,C) f32
    out = out.reshape(B, H, W, C)
    return jnp.transpose(out, (0, 3, 1, 2))                        # NCHW


# --------------------------------------------------------------------------
# Deterministic parameters + pure-JAX reference
# --------------------------------------------------------------------------
def init_pam_params(key, in_channels):
    c8 = in_channels // 8
    ks = jax.random.split(key, 6)
    sq = 0.25 * (in_channels ** -0.5)   # mild scale -> well-conditioned softmax
    sv = in_channels ** -0.5
    return dict(
        Wq=sq * jax.random.normal(ks[0], (in_channels, c8), jnp.float32),
        bq=0.1 * jax.random.normal(ks[1], (1, c8), jnp.float32),
        Wk=sq * jax.random.normal(ks[2], (in_channels, c8), jnp.float32),
        bk=0.1 * jax.random.normal(ks[3], (1, c8), jnp.float32),
        Wv=sv * jax.random.normal(ks[4], (in_channels, in_channels), jnp.float32),
        bv=0.1 * jax.random.normal(ks[5], (1, in_channels), jnp.float32),
    )


def pam_reference(x_nchw, p):
    """Pure-jnp f32 reference matching the PyTorch module exactly."""
    B, C, H, W = x_nchw.shape
    HW = H * W
    xh = jnp.transpose(x_nchw, (0, 2, 3, 1)).reshape(B, HW, C)
    q = xh @ p["Wq"] + p["bq"]
    k = xh @ p["Wk"] + p["bk"]
    v = xh @ p["Wv"] + p["bv"]
    attn = jax.nn.softmax(jnp.einsum("bqc,bkc->bqk", q, k), axis=-1)
    out = jnp.einsum("bqk,bkc->bqc", attn, v) + xh
    return jnp.transpose(out.reshape(B, H, W, C), (0, 3, 1, 2))


# --------------------------------------------------------------------------
if __name__ == "__main__":
    key = jax.random.PRNGKey(0)
    kx, kp = jax.random.split(key)

    B, C, H, W = 2, 256, 16, 16          # small, but C//8 >= 8 and lane-dense
    x = jax.random.normal(kx, (B, C, H, W), jnp.float32)
    params = init_pam_params(kp, C)

    fwd = jax.jit(pam_forward)
    out = jax.block_until_ready(fwd(x, params))

    assert out.shape == (B, C, H, W), out.shape
    assert bool(jnp.all(jnp.isfinite(out)))

    ref = pam_reference(x, params)
    rel = float(jnp.linalg.norm(out - ref) / jnp.linalg.norm(ref))
    assert rel < 0.1, f"relative error too large: {rel}"

    print("KERNEL_OK")
</pallas_src>

<mosaic_0001>
module attributes {stable_mosaic.version = 11 : i64} {
  func.func @_mm_bias_kernel(%arg0: i32, %arg1: memref<256x256xbf16, #tpu.memory_space<vmem>>, %arg2: memref<256x256xbf16, #tpu.memory_space<vmem>>, %arg3: memref<1x256xf32, #tpu.memory_space<vmem>>, %arg4: memref<256x256xbf16, #tpu.memory_space<vmem>>) attributes {dimension_semantics = [#tpu.dimension_semantics<parallel>], iteration_bounds = array<i64: 2>, scalar_prefetch = 0 : i64, scratch_operands = 0 : i64, tpu.core_type = #tpu.core_type<tc>, window_params = [{transform_indices = @transform_0, window_bounds = array<i64: 256, 256>}, {pipeline_mode = #tpu.pipeline_mode<synchronous>, transform_indices = @transform_1, window_bounds = array<i64: 256, 256>}, {pipeline_mode = #tpu.pipeline_mode<synchronous>, transform_indices = @transform_2, window_bounds = array<i64: 1, 256>}, {transform_indices = @transform_3, window_bounds = array<i64: 256, 256>}]} {
    %c0 = arith.constant 0 : index
    %c0_0 = arith.constant 0 : index
    %0 = vector.load %arg1[%c0, %c0_0] : memref<256x256xbf16, #tpu.memory_space<vmem>>, vector<256x256xbf16>
    %c0_1 = arith.constant 0 : index
    %c0_2 = arith.constant 0 : index
    %1 = vector.load %arg2[%c0_1, %c0_2] : memref<256x256xbf16, #tpu.memory_space<vmem>>, vector<256x256xbf16>
    %cst = arith.constant dense<0.000000e+00> : vector<256x256xf32>
    %2 = tpu.matmul %0, %1, %cst {dimension_numbers = #tpu.dot_dimension_numbers<[1], [0], [0], [1], [0, 0, 1, 1], [], []>} : vector<256x256xbf16>, vector<256x256xbf16>, vector<256x256xf32> -> vector<256x256xf32>
    %c0_3 = arith.constant 0 : index
    %c0_4 = arith.constant 0 : index
    %3 = vector.load %arg3[%c0_3, %c0_4] : memref<1x256xf32, #tpu.memory_space<vmem>>, vector<1x256xf32>
    %4 = vector.broadcast %3 : vector<1x256xf32> to vector<256x256xf32>
    %5 = arith.addf %2, %4 : vector<256x256xf32>
    %6 = arith.truncf %5 : vector<256x256xf32> to vector<256x256xbf16>
    %c0_5 = arith.constant 0 : index
    %c0_6 = arith.constant 0 : index
    %7 = vector.load %arg4[%c0_5, %c0_6] : memref<256x256xbf16, #tpu.memory_space<vmem>>, vector<256x256xbf16>
    tpu.vector_store %arg4[%c0_5, %c0_6], %6 {strides = array<i32>} : memref<256x256xbf16, #tpu.memory_space<vmem>>, vector<256x256xbf16>,
    return
  }
  func.func @transform_0(%arg0: i32) -> (i32, i32) {
    %c0_i32 = arith.constant 0 : i32
    %c0_i32_0 = arith.constant 0 : i32
    return %arg0, %c0_i32 : i32, i32
  }
  func.func @transform_1(%arg0: i32) -> (i32, i32) {
    %c0_i32 = arith.constant 0 : i32
    %c0_i32_0 = arith.constant 0 : i32
    %c0_i32_1 = arith.constant 0 : i32
    return %c0_i32, %c0_i32_0 : i32, i32
  }
  func.func @transform_2(%arg0: i32) -> (i32, i32) {
    %c0_i32 = arith.constant 0 : i32
    %c0_i32_0 = arith.constant 0 : i32
    %c0_i32_1 = arith.constant 0 : i32
    return %c0_i32, %c0_i32_0 : i32, i32
  }
  func.func @transform_3(%arg0: i32) -> (i32, i32) {
    %c0_i32 = arith.constant 0 : i32
    %c0_i32_0 = arith.constant 0 : i32
    return %arg0, %c0_i32 : i32, i32
  }
}

module attributes {stable_mosaic.version = 11 : i64} {
  func.func @_mm_bias_kernel(%arg0: i32, %arg1: memref<256x256xbf16, #tpu.memory_space<vmem>>, %arg2: memref<256x32xbf16, #tpu.memory_space<vmem>>, %arg3: memref<1x32xf32, #tpu.memory_space<vmem>>, %arg4: memref<256x32xbf16, #tpu.memory_space<vmem>>) attributes {dimension_semantics = [#tpu.dimension_semantics<parallel>], iteration_bounds = array<i64: 2>, scalar_prefetch = 0 : i64, scratch_operands = 0 : i64, tpu.core_type = #tpu.core_type<tc>, window_params = [{transform_indices = @transform_0, window_bounds = array<i64: 256, 256>}, {pipeline_mode = #tpu.pipeline_mode<synchronous>, transform_indices = @transform_1, window_bounds = array<i64: 256, 32>}, {pipeline_mode = #tpu.pipeline_mode<synchronous>, transform_indices = @transform_2, window_bounds = array<i64: 1, 32>}, {transform_indices = @transform_3, window_bounds = array<i64: 256, 32>}]} {
    %c0 = arith.constant 0 : index
    %c0_0 = arith.constant 0 : index
    %0 = vector.load %arg1[%c0, %c0_0] : memref<256x256xbf16, #tpu.memory_space<vmem>>, vector<256x256xbf16>
    %c0_1 = arith.constant 0 : index
    %c0_2 = arith.constant 0 : index
    %1 = vector.load %arg2[%c0_1, %c0_2] : memref<256x32xbf16, #tpu.memory_space<vmem>>, vector<256x32xbf16>
    %cst = arith.constant dense<0.000000e+00> : vector<256x32xf32>
    %2 = tpu.matmul %0, %1, %cst {dimension_numbers = #tpu.dot_dimension_numbers<[1], [0], [0], [1], [0, 0, 1, 1], [], []>} : vector<256x256xbf16>, vector<256x32xbf16>, vector<256x32xf32> -> vector<256x32xf32>
    %c0_3 = arith.constant 0 : index
    %c0_4 = arith.constant 0 : index
    %3 = vector.load %arg3[%c0_3, %c0_4] : memref<1x32xf32, #tpu.memory_space<vmem>>, vector<1x32xf32>
    %4 = vector.broadcast %3 : vector<1x32xf32> to vector<256x32xf32>
    %5 = arith.addf %2, %4 : vector<256x32xf32>
    %6 = arith.truncf %5 : vector<256x32xf32> to vector<256x32xbf16>
    %c0_5 = arith.constant 0 : index
    %c0_6 = arith.constant 0 : index
    %7 = vector.load %arg4[%c0_5, %c0_6] : memref<256x32xbf16, #tpu.memory_space<vmem>>, vector<256x32xbf16>
    tpu.vector_store %arg4[%c0_5, %c0_6], %6 {strides = array<i32>} : memref<256x32xbf16, #tpu.memory_space<vmem>>, vector<256x32xbf16>,
    return
  }
  func.func @transform_0(%arg0: i32) -> (i32, i32) {
    %c0_i32 = arith.constant 0 : i32
    %c0_i32_0 = arith.constant 0 : i32
    return %arg0, %c0_i32 : i32, i32
  }
  func.func @transform_1(%arg0: i32) -> (i32, i32) {
    %c0_i32 = arith.constant 0 : i32
    %c0_i32_0 = arith.constant 0 : i32
    %c0_i32_1 = arith.constant 0 : i32
    return %c0_i32, %c0_i32_0 : i32, i32
  }
  func.func @transform_2(%arg0: i32) -> (i32, i32) {
    %c0_i32 = arith.constant 0 : i32
    %c0_i32_0 = arith.constant 0 : i32
    %c0_i32_1 = arith.constant 0 : i32
    return %c0_i32, %c0_i32_0 : i32, i32
  }
  func.func @transform_3(%arg0: i32) -> (i32, i32) {
    %c0_i32 = arith.constant 0 : i32
    %c0_i32_0 = arith.constant 0 : i32
    return %arg0, %c0_i32 : i32, i32
  }
}

module attributes {stable_mosaic.version = 11 : i64} {
  func.func @_pam_flash_kernel(%arg0: i32, %arg1: i32, %arg2: i32, %arg3: memref<1x128x32xbf16, #tpu.memory_space<vmem>>, %arg4: memref<1x128x32xbf16, #tpu.memory_space<vmem>>, %arg5: memref<1x128x256xbf16, #tpu.memory_space<vmem>>, %arg6: memref<1x128x256xf32, #tpu.memory_space<vmem>>, %arg7: memref<1x128x256xf32, #tpu.memory_space<vmem>>, %arg8: memref<128x1xf32, #tpu.memory_space<vmem>>, %arg9: memref<128x1xf32, #tpu.memory_space<vmem>>, %arg10: memref<128x256xf32, #tpu.memory_space<vmem>>) attributes {dimension_semantics = [#tpu.dimension_semantics<parallel>, #tpu.dimension_semantics<parallel>, #tpu.dimension_semantics<arbitrary>], iteration_bounds = array<i64: 2, 2, 2>, scalar_prefetch = 0 : i64, scratch_operands = 3 : i64, tpu.core_type = #tpu.core_type<tc>, window_params = [{transform_indices = @transform_0, window_bounds = array<i64: 1, 128, 32>}, {transform_indices = @transform_1, window_bounds = array<i64: 1, 128, 32>}, {transform_indices = @transform_2, window_bounds = array<i64: 1, 128, 256>}, {transform_indices = @transform_3, window_bounds = array<i64: 1, 128, 256>}, {transform_indices = @transform_4, window_bounds = array<i64: 1, 128, 256>}]} {
    %c0_i32 = arith.constant 0 : i32
    %0 = arith.cmpi eq, %arg2, %c0_i32 : i32
    %1 = arith.extui %0 : i1 to i32
    %c0_i32_0 = arith.constant 0 : i32
    %2 = arith.cmpi ne, %1, %c0_i32_0 : i32
    scf.if %2 {
      %cst_25 = arith.constant 0xFF800000 : f32
      %36 = vector.broadcast %cst_25 : f32 to vector<128x1xf32>
      %c0_26 = arith.constant 0 : index
      %c0_27 = arith.constant 0 : index
      %37 = vector.load %arg8[%c0_26, %c0_27] : memref<128x1xf32, #tpu.memory_space<vmem>>, vector<128x1xf32>
      tpu.vector_store %arg8[%c0_26, %c0_27], %36 {strides = array<i32>} : memref<128x1xf32, #tpu.memory_space<vmem>>, vector<128x1xf32>,
      %cst_28 = arith.constant 0.000000e+00 : f32
      %38 = vector.broadcast %cst_28 : f32 to vector<128x1xf32>
      %c0_29 = arith.constant 0 : index
      %c0_30 = arith.constant 0 : index
      %39 = vector.load %arg9[%c0_29, %c0_30] : memref<128x1xf32, #tpu.memory_space<vmem>>, vector<128x1xf32>
      tpu.vector_store %arg9[%c0_29, %c0_30], %38 {strides = array<i32>} : memref<128x1xf32, #tpu.memory_space<vmem>>, vector<128x1xf32>,
      %cst_31 = arith.constant 0.000000e+00 : f32
      %40 = vector.broadcast %cst_31 : f32 to vector<128x256xf32>
      %c0_32 = arith.constant 0 : index
      %c0_33 = arith.constant 0 : index
      %41 = vector.load %arg10[%c0_32, %c0_33] : memref<128x256xf32, #tpu.memory_space<vmem>>, vector<128x256xf32>
      tpu.vector_store %arg10[%c0_32, %c0_33], %40 {strides = array<i32>} : memref<128x256xf32, #tpu.memory_space<vmem>>, vector<128x256xf32>,
    } else {
    }
    %c0 = arith.constant 0 : index
    %c0_1 = arith.constant 0 : index
    %c0_2 = arith.constant 0 : index
    %3 = vector.load %arg3[%c0, %c0_1, %c0_2] : memref<1x128x32xbf16, #tpu.memory_space<vmem>>, vector<1x128x32xbf16>
    %4 = vector.shape_cast %3 : vector<1x128x32xbf16> to vector<128x32xbf16>
    %c0_3 = arith.constant 0 : index
    %c0_4 = arith.constant 0 : index
    %c0_5 = arith.constant 0 : index
    %5 = vector.load %arg4[%c0_3, %c0_4, %c0_5] : memref<1x128x32xbf16, #tpu.memory_space<vmem>>, vector<1x128x32xbf16>
    %6 = vector.shape_cast %5 : vector<1x128x32xbf16> to vector<128x32xbf16>
    %cst = arith.constant dense<0.000000e+00> : vector<128x128xf32>
    %7 = tpu.matmul %4, %6, %cst {dimension_numbers = #tpu.dot_dimension_numbers<[1], [1], [0], [0], [0, 0, 1, 0], [], []>} : vector<128x32xbf16>, vector<128x32xbf16>, vector<128x128xf32> -> vector<128x128xf32>
    %c0_6 = arith.constant 0 : index
    %c0_7 = arith.constant 0 : index
    %8 = vector.load %arg8[%c0_6, %c0_7] : memref<128x1xf32, #tpu.memory_space<vmem>>, vector<128x1xf32>
    %cst_8 = arith.constant dense<0xFF800000> : vector<128xf32>
    %9 = vector.multi_reduction <maximumf>, %7, %cst_8 [1] : vector<128x128xf32> to vector<128xf32>
    %10 = vector.shape_cast %9 : vector<128xf32> to vector<128x1xf32>
    %11 = arith.maximumf %8, %10 : vector<128x1xf32>
    %12 = arith.subf %8, %11 : vector<128x1xf32>
    %13 = math.exp %12 : vector<128x1xf32>
    %14 = vector.broadcast %11 : vector<128x1xf32> to vector<128x128xf32>
    %15 = arith.subf %7, %14 : vector<128x128xf32>
    %16 = math.exp %15 : vector<128x128xf32>
    %c0_9 = arith.constant 0 : index
    %c0_10 = arith.constant 0 : index
    %17 = vector.load %arg9[%c0_9, %c0_10] : memref<128x1xf32, #tpu.memory_space<vmem>>, vector<128x1xf32>
    %18 = arith.mulf %13, %17 : vector<128x1xf32>
    %cst_11 = arith.constant dense<0.000000e+00> : vector<128xf32>
    %19 = vector.multi_reduction <add>, %16, %cst_11 [1] : vector<128x128xf32> to vector<128xf32>
    %20 = vector.shape_cast %19 : vector<128xf32> to vector<128x1xf32>
    %21 = arith.addf %18, %20 : vector<128x1xf32>
    %c0_12 = arith.constant 0 : index
    %c0_13 = arith.constant 0 : index
    %22 = vector.load %arg9[%c0_12, %c0_13] : memref<128x1xf32, #tpu.memory_space<vmem>>, vector<128x1xf32>
    tpu.vector_store %arg9[%c0_12, %c0_13], %21 {strides = array<i32>} : memref<128x1xf32, #tpu.memory_space<vmem>>, vector<128x1xf32>,
    %c0_14 = arith.constant 0 : index
    %c0_15 = arith.constant 0 : index
    %23 = vector.load %arg10[%c0_14, %c0_15] : memref<128x256xf32, #tpu.memory_space<vmem>>, vector<128x256xf32>
    %24 = vector.broadcast %13 : vector<128x1xf32> to vector<128x256xf32>
    %25 = arith.mulf %24, %23 : vector<128x256xf32>
    %26 = arith.truncf %16 : vector<128x128xf32> to vector<128x128xbf16>
    %c0_16 = arith.constant 0 : index
    %c0_17 = arith.constant 0 : index
    %c0_18 = arith.constant 0 : index
    %27 = vector.load %arg5[%c0_16, %c0_17, %c0_18] : memref<1x128x256xbf16, #tpu.memory_space<vmem>>, vector<1x128x256xbf16>
    %28 = vector.shape_cast %27 : vector<1x128x256xbf16> to vector<128x256xbf16>
    %cst_19 = arith.constant dense<0.000000e+00> : vector<128x256xf32>
    %29 = tpu.matmul %26, %28, %cst_19 {dimension_numbers = #tpu.dot_dimension_numbers<[1], [0], [0], [1], [0, 0, 1, 1], [], []>} : vector<128x128xbf16>, vector<128x256xbf16>, vector<128x256xf32> -> vector<128x256xf32>
    %30 = arith.addf %25, %29 : vector<128x256xf32>
    %c0_20 = arith.constant 0 : index
    %c0_21 = arith.constant 0 : index
    %31 = vector.load %arg10[%c0_20, %c0_21] : memref<128x256xf32, #tpu.memory_space<vmem>>, vector<128x256xf32>
    tpu.vector_store %arg10[%c0_20, %c0_21], %30 {strides = array<i32>} : memref<128x256xf32, #tpu.memory_space<vmem>>, vector<128x256xf32>,
    %c0_22 = arith.constant 0 : index
    %c0_23 = arith.constant 0 : index
    %32 = vector.load %arg8[%c0_22, %c0_23] : memref<128x1xf32, #tpu.memory_space<vmem>>, vector<128x1xf32>
    tpu.vector_store %arg8[%c0_22, %c0_23], %11 {strides = array<i32>} : memref<128x1xf32, #tpu.memory_space<vmem>>, vector<128x1xf32>,
    %c1_i32 = arith.constant 1 : i32
    %33 = arith.cmpi eq, %arg2, %c1_i32 : i32
    %34 = arith.extui %33 : i1 to i32
    %c0_i32_24 = arith.constant 0 : i32
    %35 = arith.cmpi ne, %34, %c0_i32_24 : i32
    scf.if %35 {
      %c0_25 = arith.constant 0 : index
      %c0_26 = arith.constant 0 : index
      %36 = vector.load %arg9[%c0_25, %c0_26] : memref<128x1xf32, #tpu.memory_space<vmem>>, vector<128x1xf32>
      %37 = tpu.reciprocal %36 {approx = true} : vector<128x1xf32> -> vector<128x1xf32>
      %c0_27 = arith.constant 0 : index
      %c0_28 = arith.constant 0 : index
      %38 = vector.load %arg10[%c0_27, %c0_28] : memref<128x256xf32, #tpu.memory_space<vmem>>, vector<128x256xf32>
      %39 = vector.broadcast %37 : vector<128x1xf32> to vector<128x256xf32>
      %40 = arith.mulf %38, %39 : vector<128x256xf32>
      %c0_29 = arith.constant 0 : index
      %c0_30 = arith.constant 0 : index
      %c0_31 = arith.constant 0 : index
      %41 = vector.load %arg6[%c0_29, %c0_30, %c0_31] : memref<1x128x256xf32, #tpu.memory_space<vmem>>, vector<1x128x256xf32>
      %42 = vector.shape_cast %41 : vector<1x128x256xf32> to vector<128x256xf32>
      %43 = arith.addf %40, %42 : vector<128x256xf32>
      %c0_32 = arith.constant 0 : index
      %c0_33 = arith.constant 0 : index
      %c0_34 = arith.constant 0 : index
      %44 = vector.load %arg7[%c0_32, %c0_33, %c0_34] : memref<1x128x256xf32, #tpu.memory_space<vmem>>, vector<1x128x256xf32>
      %45 = vector.shape_cast %44 : vector<1x128x256xf32> to vector<128x256xf32>
      %46 = vector.shape_cast %43 : vector<128x256xf32> to vector<1x128x256xf32>
      tpu.vector_store %arg7[%c0_32, %c0_33, %c0_34], %46 {strides = array<i32>} : memref<1x128x256xf32, #tpu.memory_space<vmem>>, vector<1x128x256xf32>,
    } else {
    }
    return
  }
  func.func @transform_0(%arg0: i32, %arg1: i32, %arg2: i32) -> (i32, i32, i32) {
    %c0_i32 = arith.constant 0 : i32
    %c0_i32_0 = arith.constant 0 : i32
    return %arg0, %arg1, %c0_i32 : i32, i32, i32
  }
  func.func @transform_1(%arg0: i32, %arg1: i32, %arg2: i32) -> (i32, i32, i32) {
    %c0_i32 = arith.constant 0 : i32
    %c0_i32_0 = arith.constant 0 : i32
    return %arg0, %arg2, %c0_i32 : i32, i32, i32
  }
  func.func @transform_2(%arg0: i32, %arg1: i32, %arg2: i32) -> (i32, i32, i32) {
    %c0_i32 = arith.constant 0 : i32
    %c0_i32_0 = arith.constant 0 : i32
    return %arg0, %arg2, %c0_i32 : i32, i32, i32
  }
  func.func @transform_3(%arg0: i32, %arg1: i32, %arg2: i32) -> (i32, i32, i32) {
    %c0_i32 = arith.constant 0 : i32
    %c0_i32_0 = arith.constant 0 : i32
    return %arg0, %arg1, %c0_i32 : i32, i32, i32
  }
  func.func @transform_4(%arg0: i32, %arg1: i32, %arg2: i32) -> (i32, i32, i32) {
    %c0_i32 = arith.constant 0 : i32
    %c0_i32_0 = arith.constant 0 : i32
    return %arg0, %arg1, %c0_i32 : i32, i32, i32
  }
}

</mosaic_0001>

<llo_original>
// kernel: pam_forward.6
$region0: #{pam_forward.6}
  #allocation0 [shape = 'u32[]', space=smem, size = 0x4, offset = 0x4, fixed_abs, tag = 'smem constant byte address 0x4 - core index']
  #allocation1 [shape = 'u32[144,128]{1,0:T(1,128)}', space=vmem, size = 0x12000, scoped, tag = 'internal scratch']
  %s0 = inlined_call_operand.vmem [shape: bf16[512,256], index: 0, kind: input, shape index: {}]
  %s1 = inlined_call_operand.vmem [shape: bf16[256,256], index: 1, kind: input, shape index: {}]
  %s2 = inlined_call_operand.vmem [shape: f32[1,256], index: 2, kind: input, shape index: {}]
  %s3 = inlined_call_operand.vmem [shape: bf16[512,256], index: 3, kind: output, shape index: {}]
  %s4 = sld [smem:[#allocation0]]
  $region45: #{pam_forward.6} parent=0
    _
  %s6 = ssub.s32 1, %s4
  %s7 = scalar_select 0, %s6, %s4
  loop: start=0, step=1, limit=4
  $region2: #{pam_forward.6} parent=0 // loop_pre_header
    _
  $region3: #{pam_forward.6} parent=0 // loop_header
    %s9 = sphi 0, %s13
    %p10 = scmp.ge.s32.totalorder %s9, 4
    %s19 = sphi 0, %s21
    %s22 = sphi 0, %s19
    %s23 = sphi 0, %s22
    %s39 = sphi 0, %s23
    %s43 = sphi 0, %s43
    %s45 = sphi 0, %s43
    %s46 = sphi 0, %s45
    %s60 = sphi 0, %s46
    %s64 = sphi 0, %s64
    %s66 = sphi 0, %s64
    %s67 = sphi 0, %s66
    %s81 = sphi 0, %s67
    %s87 = sphi 0, %s89
    %s90 = sphi 0, %s87
    %s91 = sphi 0, %s90
    %s107 = sphi 0, %s91
  $region4: #{pam_forward.6} parent=0 // loop_header_branch
    %12 = sbr.rel (%p10) target = $region8
  $region5: #{pam_forward.6} parent=0 // loop_body
    %s14 = ssub.s32 %s9, 1
    %s15 = ssub.s32 %s9, 2
    %s16 = sadd.s32 %s9, 1
    %s17 = ssub.s32 %s9, %s16
    %p18 = scmp.eq.s32.totalorder %s17, 0
    %s20 = sadd.s32 %s19, 1
    %s21 = scalar_select %p18, %s19, %s20
    %p24 = pneg %p18
    %p25 = scmp.eq.s32.totalorder %s9, 1
    %p26 = por %p24, %p25
    %p27 = scmp.ne.s32.totalorder %s19, %s22
    %p28 = scmp.eq.s32.totalorder %s9, 0
    %p29 = por %p27, %p28
    %p30 = scmp.ne.s32.totalorder %s19, %s22
    %p31 = scmp.eq.s32.totalorder %s14, 1
    %p32 = por %p30, %p31
    %p33 = scmp.ne.s32.totalorder %s22, %s23
    %p34 = scmp.eq.s32.totalorder %s14, 0
    %p35 = por %p33, %p34
    %p36 = scmp.ne.s32.totalorder %s22, %s23
    %p37 = scmp.eq.s32.totalorder %s15, 1
    %p38 = por %p36, %p37
    %p40 = scmp.ne.s32.totalorder %s23, %s39
    %p41 = scmp.eq.s32.totalorder %s15, 0
    %p42 = por %p40, %p41
    %s44 = sadd.s32 %s43, 1
    %p47 = scmp.eq.s32.totalorder %s9, 1
    %p48 = scmp.ne.s32.totalorder %s43, %s45
    %p49 = scmp.eq.s32.totalorder %s9, 0
    %p50 = por %p48, %p49
    %p51 = scmp.ne.s32.totalorder %s43, %s45
    %p52 = scmp.eq.s32.totalorder %s14, 1
    %p53 = por %p51, %p52
    %p54 = scmp.ne.s32.totalorder %s45, %s46
    %p55 = scmp.eq.s32.totalorder %s14, 0
    %p56 = por %p54, %p55
    %p57 = scmp.ne.s32.totalorder %s45, %s46
    %p58 = scmp.eq.s32.totalorder %s15, 1
    %p59 = por %p57, %p58
    %p61 = scmp.ne.s32.totalorder %s46, %s60
    %p62 = scmp.eq.s32.totalorder %s15, 0
    %p63 = por %p61, %p62
    %s65 = sadd.s32 %s64, 1
    %p68 = scmp.eq.s32.totalorder %s9, 1
    %p69 = scmp.ne.s32.totalorder %s64, %s66
    %p70 = scmp.eq.s32.totalorder %s9, 0
    %p71 = por %p69, %p70
    %p72 = scmp.ne.s32.totalorder %s64, %s66
    %p73 = scmp.eq.s32.totalorder %s14, 1
    %p74 = por %p72, %p73
    %p75 = scmp.ne.s32.totalorder %s66, %s67
    %p76 = scmp.eq.s32.totalorder %s14, 0
    %p77 = por %p75, %p76
    %p78 = scmp.ne.s32.totalorder %s66, %s67
    %p79 = scmp.eq.s32.totalorder %s15, 1
    %p80 = por %p78, %p79
    %p82 = scmp.ne.s32.totalorder %s67, %s81
    %p83 = scmp.eq.s32.totalorder %s15, 0
    %p84 = por %p82, %p83
    %s85 = ssub.s32 %s9, %s16
    %p86 = scmp.eq.s32.totalorder %s85, 0
    %s88 = sadd.s32 %s87, 1
    %s89 = scalar_select %p86, %s87, %s88
    %p92 = pneg %p86
    %p93 = scmp.eq.s32.totalorder %s9, 1
    %p94 = por %p92, %p93
    %p95 = scmp.ne.s32.totalorder %s87, %s90
    %p96 = scmp.eq.s32.totalorder %s9, 0
    %p97 = por %p95, %p96
    %p98 = scmp.ne.s32.totalorder %s87, %s90
    %p99 = scmp.eq.s32.totalorder %s14, 1
    %p100 = por %p98, %p99
    %p101 = scmp.ne.s32.totalorder %s90, %s91
    %p102 = scmp.eq.s32.totalorder %s14, 0
    %p103 = por %p101, %p102
    %p104 = scmp.ne.s32.totalorder %s90, %s91
    %p105 = scmp.eq.s32.totalorder %s15, 1
    %p106 = por %p104, %p105
    %p108 = scmp.ne.s32.totalorder %s91, %s107
    %p109 = scmp.eq.s32.totalorder %s15, 0
    %p110 = por %p108, %p109
    %p111 = scmp.le.s32.totalorder 1, %s9
    %p112 = scmp.lt.s32.totalorder %s9, 3
    %p113 = pnand %p111, %p112
    %p114 = pneg %p113
    // Predicated region
    $region9: #{pam_forward.6} parent=5 // pred_check
      _
    $region10: #{pam_forward.6} parent=5 // pred_check_branch
      %116 = sbr.rel (%p113) target = $region12
    $region11: #{pam_forward.6} parent=5 // pred_region
      %s117 = ssub.s32 %s9, 1
      // Predicated region
      $region13: #{pam_forward.6} parent=11 // pred_check
        %p118 = pneg %p56
      $region14: #{pam_forward.6} parent=11 // pred_check_branch
        %120 = sbr.rel (%p118) target = $region16
      $region15: #{pam_forward.6} parent=11 // pred_region
        _
      $region16: #{pam_forward.6} parent=11 // pred_fallthru
        _
      // Predicated region
      $region17: #{pam_forward.6} parent=11 // pred_check
        %p121 = pneg %p77
      $region18: #{pam_forward.6} parent=11 // pred_check_branch
        %123 = sbr.rel (%p121) target = $region20
      $region19: #{pam_forward.6} parent=11 // pred_region
        _
      $region20: #{pam_forward.6} parent=11 // pred_fallthru
        _
    $region12: #{pam_forward.6} parent=5 // pred_fallthru
      _
    %p124 = scmp.lt.s32.totalorder %s9, 2
    // Predicated region
    $region21: #{pam_forward.6} parent=5 // pred_check
      %p125 = pneg %p124
    $region22: #{pam_forward.6} parent=5 // pred_check_branch
      %127 = sbr.rel (%p125) target = $region24
    $region23: #{pam_forward.6} parent=5 // pred_region
      // Predicated region
      $region25: #{pam_forward.6} parent=23 // pred_check
        %p128 = pneg %p29
      $region26: #{pam_forward.6} parent=23 // pred_check_branch
        %130 = sbr.rel (%p128) target = $region28
      $region27: #{pam_forward.6} parent=23 // pred_region
        %s131 = smul.u32 32, %s9
        %p132 = scmp.lt.s32.totalorder %s131, 63
        %s133 = scalar_select %p132, %s131, 63
        %s134 = smul.addr %s133, 2
        %s135 = smul.addr %s134, 4
        %s136 = scalar_lea.vmem %s0, %s135
        %s137 = smul.u32 32, %s9
      $region28: #{pam_forward.6} parent=23 // pred_fallthru
        _
    $region24: #{pam_forward.6} parent=5 // pred_fallthru
      _
    %p138 = scmp.le.s32.totalorder 1, %s9
    %p139 = scmp.lt.s32.totalorder %s9, 3
    %p140 = pnand %p138, %p139
    %p141 = pneg %p140
    // Predicated region
    $region29: #{pam_forward.6} parent=5 // pred_check
      _
    $region30: #{pam_forward.6} parent=5 // pred_check_branch
      %143 = sbr.rel (%p140) target = $region32
    $region31: #{pam_forward.6} parent=5 // pred_region
      %s144 = ssub.s32 %s9, 1
      %s145 = smul.u32 32, %s14
      %p146 = scmp.lt.s32.totalorder %s145, 63
      %s147 = scalar_select %p146, %s145, 63
      %s148 = smul.addr %s147, 2
      %s149 = smul.addr %s148, 4
      %s150 = scalar_lea.vmem %s0, %s149
      %p151 = pneg %p35
      %p152 = pneg %p32
      %p153 = pneg %p56
      %p154 = pneg %p53
      %p155 = pneg %p77
      %p156 = pneg %p74
      %p157 = pneg %p103
      %p158 = pneg %p100
      %s159 = smul.u32 32, %s14
      %p160 = scmp.lt.s32.totalorder %s159, 63
      %s161 = scalar_select %p160, %s159, 63
      %s162 = smul.addr %s161, 2
      %s163 = smul.addr %s162, 4
      %s164 = scalar_lea.vmem %s3, %s163
      %s165 = smul.u32 32, %s14
      %p166 = scmp.lt.s32.totalorder %s165, 63
      %s167 = scalar_select %p166, %s165, 63
      %s168 = smul.addr %s167, 2
      %s169 = smul.addr %s168, 4
      %s170 = scalar_lea.vmem %s0, %s169
      %s171 = smul.u32 32, %s14
      %s172 = smul.u32 32, %s14
      %p173 = scmp.lt.s32.totalorder %s172, 63
      %s174 = scalar_select %p173, %s172, 63
      %s175 = smul.addr %s174, 2
      %s176 = smul.addr %s175, 4
      %s177 = scalar_lea.vmem %s3, %s176
      %s178 = smul.u32 32, %s14
      %v179 = vld [vmem:[%s170] sm:$0xff]
      %v180 = vld [vmem:[%s170 + $0x8] sm:$0xff]
      %v181 = vld [vmem:[%s170 + $0x10] sm:$0xff]
      %v182 = vld [vmem:[%s170 + $0x18] sm:$0xff]
      %v183 = vld [vmem:[%s170 + $0x20] sm:$0xff]
      %v184 = vld [vmem:[%s170 + $0x28] sm:$0xff]
      %v185 = vld [vmem:[%s170 + $0x30] sm:$0xff]
      %v186 = vld [vmem:[%s170 + $0x38] sm:$0xff]
      %v187 = vld [vmem:[%s170 + $0x40] sm:$0xff]
      %v188 = vld [vmem:[%s170 + $0x48] sm:$0xff]
      %v189 = vld [vmem:[%s170 + $0x50] sm:$0xff]
      %v190 = vld [vmem:[%s170 + $0x58] sm:$0xff]
      %v191 = vld [vmem:[%s170 + $0x60] sm:$0xff]
      %v192 = vld [vmem:[%s170 + $0x68] sm:$0xff]
      %v193 = vld [vmem:[%s170 + $0x70] sm:$0xff]
      %v194 = vld [vmem:[%s170 + $0x78] sm:$0xff]
      %v195 = vld [vmem:[%s170 + $0x80] sm:$0xff]
      %v196 = vld [vmem:[%s170 + $0x88] sm:$0xff]
      %v197 = vld [vmem:[%s170 + $0x90] sm:$0xff]
      %v198 = vld [vmem:[%s170 + $0x98] sm:$0xff]
      %v199 = vld [vmem:[%s170 + $0xa0] sm:$0xff]
      %v200 = vld [vmem:[%s170 + $0xa8] sm:$0xff]
      %v201 = vld [vmem:[%s170 + $0xb0] sm:$0xff]
      %v202 = vld [vmem:[%s170 + $0xb8] sm:$0xff]
      %v203 = vld [vmem:[%s170 + $0xc0] sm:$0xff]
      %v204 = vld [vmem:[%s170 + $0xc8] sm:$0xff]
      %v205 = vld [vmem:[%s170 + $0xd0] sm:$0xff]
      %v206 = vld [vmem:[%s170 + $0xd8] sm:$0xff]
      %v207 = vld [vmem:[%s170 + $0xe0] sm:$0xff]
      %v208 = vld [vmem:[%s170 + $0xe8] sm:$0xff]
      %v209 = vld [vmem:[%s170 + $0xf0] sm:$0xff]
      %v210 = vld [vmem:[%s170 + $0xf8] sm:$0xff]
      %v211 = vld [vmem:[%s1] sm:$0xff]
      %v212 = vld [vmem:[%s1 + $0x8] sm:$0xff]
      %v213 = vld [vmem:[%s1 + $0x10] sm:$0xff]
      %v214 = vld [vmem:[%s1 + $0x18] sm:$0xff]
      %v215 = vld [vmem:[%s1 + $0x20] sm:$0xff]
      %v216 = vld [vmem:[%s1 + $0x28] sm:$0xff]
      %v217 = vld [vmem:[%s1 + $0x30] sm:$0xff]
      %v218 = vld [vmem:[%s1 + $0x38] sm:$0xff]
      %v219 = vld [vmem:[%s1 + $0x40] sm:$0xff]
      %v220 = vld [vmem:[%s1 + $0x48] sm:$0xff]
      %v221 = vld [vmem:[%s1 + $0x50] sm:$0xff]
      %v222 = vld [vmem:[%s1 + $0x58] sm:$0xff]
      %v223 = vld [vmem:[%s1 + $0x60] sm:$0xff]
      %v224 = vld [vmem:[%s1 + $0x68] sm:$0xff]
      %v225 = vld [vmem:[%s1 + $0x70] sm:$0xff]
      %v226 = vld [vmem:[%s1 + $0x78] sm:$0xff]
      %v227 = vld [vmem:[%s1 + $0x80] sm:$0xff]
      %v228 = vld [vmem:[%s1 + $0x88] sm:$0xff]
      %v229 = vld [vmem:[%s1 + $0x90] sm:$0xff]
      %v230 = vld [vmem:[%s1 + $0x98] sm:$0xff]
      %v231 = vld [vmem:[%s1 + $0xa0] sm:$0xff]
      %v232 = vld [vmem:[%s1 + $0xa8] sm:$0xff]
      %v233 = vld [vmem:[%s1 + $0xb0] sm:$0xff]
      %v234 = vld [vmem:[%s1 + $0xb8] sm:$0xff]
      %v235 = vld [vmem:[%s1 + $0xc0] sm:$0xff]
      %v236 = vld [vmem:[%s1 + $0xc8] sm:$0xff]
      %v237 = vld [vmem:[%s1 + $0xd0] sm:$0xff]
      %v238 = vld [vmem:[%s1 + $0xd8] sm:$0xff]
      %v239 = vld [vmem:[%s1 + $0xe0] sm:$0xff]
      %v240 = vld [vmem:[%s1 + $0xe8] sm:$0xff]
      %v241 = vld [vmem:[%s1 + $0xf0] sm:$0xff]
      %v242 = vld [vmem:[%s1 + $0xf8] sm:$0xff]
      %v243 = vld [vmem:[%s2] sm:$0x3]
      %v245 = vlaneseq
      %v246 = vshrl.u32 %v245, 7
      %v247 = vsub.s32 0, %v246
      %v248 = vrot.slane %v243, %v247
      %v249 = vlaneseq
      %v250 = vshrl.u32 %v249, 7
      %v251 = vsub.s32 1, %v250
      %v252 = vrot.slane %v243, %v251
      %v287 = vunpack.c.l.b16 %v179
      %v288 = vunpack.c.h.b16 %v179
      %v289 = vunpack.c.l.b16 %v180
      %v290 = vunpack.c.h.b16 %v180
      %v291 = vunpack.c.l.b16 %v181
      %v292 = vunpack.c.h.b16 %v181
      %v293 = vunpack.c.l.b16 %v182
      %v294 = vunpack.c.h.b16 %v182
      %v295 = vunpack.c.l.b16 %v183
      %v296 = vunpack.c.h.b16 %v183
      %v297 = vunpack.c.l.b16 %v184
      %v298 = vunpack.c.h.b16 %v184
      %v299 = vunpack.c.l.b16 %v185
      %v300 = vunpack.c.h.b16 %v185
      %v301 = vunpack.c.l.b16 %v186
      %v302 = vunpack.c.h.b16 %v186
      %v303 = vunpack.c.l.b16 %v187
      %v304 = vunpack.c.h.b16 %v187
      %v305 = vunpack.c.l.b16 %v188
      %v306 = vunpack.c.h.b16 %v188
      %v307 = vunpack.c.l.b16 %v189
      %v308 = vunpack.c.h.b16 %v189
      %v309 = vunpack.c.l.b16 %v190
      %v310 = vunpack.c.h.b16 %v190
      %v311 = vunpack.c.l.b16 %v191
      %v312 = vunpack.c.h.b16 %v191
      %v313 = vunpack.c.l.b16 %v192
      %v314 = vunpack.c.h.b16 %v192
      %v315 = vunpack.c.l.b16 %v193
      %v316 = vunpack.c.h.b16 %v193
      %v317 = vunpack.c.l.b16 %v194
      %v318 = vunpack.c.h.b16 %v194
      %v319 = vunpack.c.l.b16 %v195
      %v320 = vunpack.c.h.b16 %v195
      %v321 = vunpack.c.l.b16 %v196
      %v322 = vunpack.c.h.b16 %v196
      %v323 = vunpack.c.l.b16 %v197
      %v324 = vunpack.c.h.b16 %v197
      %v325 = vunpack.c.l.b16 %v198
      %v326 = vunpack.c.h.b16 %v198
      %v327 = vunpack.c.l.b16 %v199
      %v328 = vunpack.c.h.b16 %v199
      %v329 = vunpack.c.l.b16 %v200
      %v330 = vunpack.c.h.b16 %v200
      %v331 = vunpack.c.l.b16 %v201
      %v332 = vunpack.c.h.b16 %v201
      %v333 = vunpack.c.l.b16 %v202
      %v334 = vunpack.c.h.b16 %v202
      %v335 = vunpack.c.l.b16 %v203
      %v336 = vunpack.c.h.b16 %v203
      %v337 = vunpack.c.l.b16 %v204
      %v338 = vunpack.c.h.b16 %v204
      %v339 = vunpack.c.l.b16 %v205
      %v340 = vunpack.c.h.b16 %v205
      %v341 = vunpack.c.l.b16 %v206
      %v342 = vunpack.c.h.b16 %v206
      %v343 = vunpack.c.l.b16 %v207
      %v344 = vunpack.c.h.b16 %v207
      %v345 = vunpack.c.l.b16 %v208
      %v346 = vunpack.c.h.b16 %v208
      %v347 = vunpack.c.l.b16 %v209
      %v348 = vunpack.c.h.b16 %v209
      %v349 = vunpack.c.l.b16 %v210
      %v350 = vunpack.c.h.b16 %v210
      %v351 = vpack.c.b16 %v289, %v287
      %v352 = vpack.c.b16 %v290, %v288
      %v353 = vpack.c.b16 %v293, %v291
      %v354 = vpack.c.b16 %v294, %v292
      %v355 = vpack.c.b16 %v297, %v295
      %v356 = vpack.c.b16 %v298, %v296
      %v357 = vpack.c.b16 %v301, %v299
      %v358 = vpack.c.b16 %v302, %v300
      %v359 = vpack.c.b16 %v305, %v303
      %v360 = vpack.c.b16 %v306, %v304
      %v361 = vpack.c.b16 %v309, %v307
      %v362 = vpack.c.b16 %v310, %v308
      %v363 = vpack.c.b16 %v313, %v311
      %v364 = vpack.c.b16 %v314, %v312
      %v365 = vpack.c.b16 %v317, %v315
      %v366 = vpack.c.b16 %v318, %v316
      %v367 = vpack.c.b16 %v321, %v319
      %v368 = vpack.c.b16 %v322, %v320
      %v369 = vpack.c.b16 %v325, %v323
      %v370 = vpack.c.b16 %v326, %v324
      %v371 = vpack.c.b16 %v329, %v327
      %v372 = vpack.c.b16 %v330, %v328
      %v373 = vpack.c.b16 %v333, %v331
      %v374 = vpack.c.b16 %v334, %v332
      %v375 = vpack.c.b16 %v337, %v335
      %v376 = vpack.c.b16 %v338, %v336
      %v377 = vpack.c.b16 %v341, %v339
      %v378 = vpack.c.b16 %v342, %v340
      %v379 = vpack.c.b16 %v345, %v343
      %v380 = vpack.c.b16 %v346, %v344
      %v381 = vpack.c.b16 %v349, %v347
      %v382 = vpack.c.b16 %v350, %v348
      %v447 = vunpack.c.l.b16 %v211
      %v448 = vunpack.c.h.b16 %v211
      %v449 = vunpack.c.l.b16 %v212
      %v450 = vunpack.c.h.b16 %v212
      %v451 = vunpack.c.l.b16 %v213
      %v452 = vunpack.c.h.b16 %v213
      %v453 = vunpack.c.l.b16 %v214
      %v454 = vunpack.c.h.b16 %v214
      %v455 = vunpack.c.l.b16 %v215
      %v456 = vunpack.c.h.b16 %v215
      %v457 = vunpack.c.l.b16 %v216
      %v458 = vunpack.c.h.b16 %v216
      %v459 = vunpack.c.l.b16 %v217
      %v460 = vunpack.c.h.b16 %v217
      %v461 = vunpack.c.l.b16 %v218
      %v462 = vunpack.c.h.b16 %v218
      %v463 = vunpack.c.l.b16 %v219
      %v464 = vunpack.c.h.b16 %v219
      %v465 = vunpack.c.l.b16 %v220
      %v466 = vunpack.c.h.b16 %v220
      %v467 = vunpack.c.l.b16 %v221
      %v468 = vunpack.c.h.b16 %v221
      %v469 = vunpack.c.l.b16 %v222
      %v470 = vunpack.c.h.b16 %v222
      %v471 = vunpack.c.l.b16 %v223
      %v472 = vunpack.c.h.b16 %v223
      %v473 = vunpack.c.l.b16 %v224
      %v474 = vunpack.c.h.b16 %v224
      %v475 = vunpack.c.l.b16 %v225
      %v476 = vunpack.c.h.b16 %v225
      %v477 = vunpack.c.l.b16 %v226
      %v478 = vunpack.c.h.b16 %v226
      %v479 = vunpack.c.l.b16 %v227
      %v480 = vunpack.c.h.b16 %v227
      %v481 = vunpack.c.l.b16 %v228
      %v482 = vunpack.c.h.b16 %v228
      %v483 = vunpack.c.l.b16 %v229
      %v484 = vunpack.c.h.b16 %v229
      %v485 = vunpack.c.l.b16 %v230
      %v486 = vunpack.c.h.b16 %v230
      %v487 = vunpack.c.l.b16 %v231
      %v488 = vunpack.c.h.b16 %v231
      %v489 = vunpack.c.l.b16 %v232
      %v490 = vunpack.c.h.b16 %v232
      %v491 = vunpack.c.l.b16 %v233
      %v492 = vunpack.c.h.b16 %v233
      %v493 = vunpack.c.l.b16 %v234
      %v494 = vunpack.c.h.b16 %v234
      %v495 = vunpack.c.l.b16 %v235
      %v496 = vunpack.c.h.b16 %v235
      %v497 = vunpack.c.l.b16 %v236
      %v498 = vunpack.c.h.b16 %v236
      %v499 = vunpack.c.l.b16 %v237
      %v500 = vunpack.c.h.b16 %v237
      %v501 = vunpack.c.l.b16 %v238
      %v502 = vunpack.c.h.b16 %v238
      %v503 = vunpack.c.l.b16 %v239
      %v504 = vunpack.c.h.b16 %v239
      %v505 = vunpack.c.l.b16 %v240
      %v506 = vunpack.c.h.b16 %v240
      %v507 = vunpack.c.l.b16 %v241
      %v508 = vunpack.c.h.b16 %v241
      %v509 = vunpack.c.l.b16 %v242
      %v510 = vunpack.c.h.b16 %v242
      %v511 = vpack.c.b16 %v449, %v447
      %v512 = vpack.c.b16 %v450, %v448
      %v513 = vpack.c.b16 %v453, %v451
      %v514 = vpack.c.b16 %v454, %v452
      %v515 = vpack.c.b16 %v457, %v455
      %v516 = vpack.c.b16 %v458, %v456
      %v517 = vpack.c.b16 %v461, %v459
      %v518 = vpack.c.b16 %v462, %v460
      %v519 = vpack.c.b16 %v465, %v463
      %v520 = vpack.c.b16 %v466, %v464
      %v521 = vpack.c.b16 %v469, %v467
      %v522 = vpack.c.b16 %v470, %v468
      %v523 = vpack.c.b16 %v473, %v471
      %v524 = vpack.c.b16 %v474, %v472
      %v525 = vpack.c.b16 %v477, %v475
      %v526 = vpack.c.b16 %v478, %v476
      %v527 = vpack.c.b16 %v481, %v479
      %v528 = vpack.c.b16 %v482, %v480
      %v529 = vpack.c.b16 %v485, %v483
      %v530 = vpack.c.b16 %v486, %v484
      %v531 = vpack.c.b16 %v489, %v487
      %v532 = vpack.c.b16 %v490, %v488
      %v533 = vpack.c.b16 %v493, %v491
      %v534 = vpack.c.b16 %v494, %v492
      %v535 = vpack.c.b16 %v497, %v495
      %v536 = vpack.c.b16 %v498, %v496
      %v537 = vpack.c.b16 %v501, %v499
      %v538 = vpack.c.b16 %v502, %v500
      %v539 = vpack.c.b16 %v505, %v503
      %v540 = vpack.c.b16 %v506, %v504
      %v541 = vpack.c.b16 %v509, %v507
      %v542 = vpack.c.b16 %v510, %v508
      %575 = vmatprep.subr.bf16.mxu0 %v526
      %576 = vmatpush1.bf16.msra.mxu0 %v525
      %577 = vmatprep.subr.bf16.mxu0 %v524
      %578 = vmatpush1.bf16.msra.mxu0 %v523
      %579 = vmatprep.subr.bf16.mxu0 %v522
      %580 = vmatpush1.bf16.msra.mxu0 %v521
      %581 = vmatprep.subr.bf16.mxu0 %v520
      %582 = vmatpush1.bf16.msra.mxu0 %v519
      %583 = vmatprep.subr.bf16.mxu0 %v518
      %584 = vmatpush1.bf16.msra.mxu0 %v517
      %585 = vmatprep.subr.bf16.mxu0 %v516
      %586 = vmatpush1.bf16.msra.mxu0 %v515
      %587 = vmatprep.subr.bf16.mxu0 %v514
      %588 = vmatpush1.bf16.msra.mxu0 %v513
      %589 = vmatprep.subr.bf16.mxu0 %v512
      %590 = vmatpush1.bf16.msra.mxu0 %v511
      %591 = vmatprep.subr.bf16.mxu0 %v542
      %592 = vmatpush2.bf16.msra.mxu0 %v541
      %593 = vmatprep.subr.bf16.mxu0 %v540
      %594 = vmatpush2.bf16.msra.mxu0 %v539
      %595 = vmatprep.subr.bf16.mxu0 %v538
      %596 = vmatpush2.bf16.msra.mxu0 %v537
      %597 = vmatprep.subr.bf16.mxu0 %v536
      %598 = vmatpush2.bf16.msra.mxu0 %v535
      %599 = vmatprep.subr.bf16.mxu0 %v534
      %600 = vmatpush2.bf16.msra.mxu0 %v533
      %601 = vmatprep.subr.bf16.mxu0 %v532
      %602 = vmatpush2.bf16.msra.mxu0 %v531
      %603 = vmatprep.subr.bf16.mxu0 %v530
      %604 = vmatpush2.bf16.msra.mxu0 %v529
      %605 = vmatprep.subr.bf16.mxu0 %v528
      %606 = vmatpush2.bf16.msra.mxu0 %v527
      %607 = vmatprep.mubr.bf16.mxu0 %v352
      %608 = vmatmul.mubr.bf16.gmra.mxu0 %v351
      %v609 = vpop.f32.mrf.mxu0
      %v610 = vadd.f32 %v248, %v609
      %v611 = vpop.f32.mrf.mxu0
      %v612 = vadd.f32 %v252, %v611
      %v613 = vpop.f32.mrf.mxu0
      %v614 = vadd.f32 %v248, %v613
      %v615 = vpop.f32.mrf.mxu0
      %v616 = vadd.f32 %v252, %v615
      %617 = vmatprep.mubr.bf16.mxu0 %v354
      %618 = vmatmul.mubr.bf16.gmra.mxu0 %v353
      %v619 = vpop.f32.mrf.mxu0
      %v620 = vadd.f32 %v248, %v619
      %v621 = vpop.f32.mrf.mxu0
      %v622 = vadd.f32 %v252, %v621
      %v623 = vpop.f32.mrf.mxu0
      %v624 = vadd.f32 %v248, %v623
      %v625 = vpop.f32.mrf.mxu0
      %v626 = vadd.f32 %v252, %v625
      %627 = vmatprep.mubr.bf16.mxu0 %v356
      %628 = vmatmul.mubr.bf16.gmra.mxu0 %v355
      %v629 = vpop.f32.mrf.mxu0
      %v630 = vadd.f32 %v248, %v629
      %v631 = vpop.f32.mrf.mxu0
      %v632 = vadd.f32 %v252, %v631
      %v633 = vpop.f32.mrf.mxu0
      %v634 = vadd.f32 %v248, %v633
      %v635 = vpop.f32.mrf.mxu0
      %v636 = vadd.f32 %v252, %v635
      %637 = vmatprep.mubr.bf16.mxu0 %v358
      %638 = vmatmul.mubr.bf16.gmra.mxu0 %v357
      %v639 = vpop.f32.mrf.mxu0
      %v640 = vadd.f32 %v248, %v639
      %v641 = vpop.f32.mrf.mxu0
      %v642 = vadd.f32 %v252, %v641
      %v643 = vpop.f32.mrf.mxu0
      %v644 = vadd.f32 %v248, %v643
      %v645 = vpop.f32.mrf.mxu0
      %v646 = vadd.f32 %v252, %v645
      %647 = vmatprep.mubr.bf16.mxu0 %v360
      %648 = vmatmul.mubr.bf16.gmra.mxu0 %v359
      %v649 = vpop.f32.mrf.mxu0
      %v650 = vadd.f32 %v248, %v649
      %v651 = vpop.f32.mrf.mxu0
      %v652 = vadd.f32 %v252, %v651
      %v653 = vpop.f32.mrf.mxu0
      %v654 = vadd.f32 %v248, %v653
      %v655 = vpop.f32.mrf.mxu0
      %v656 = vadd.f32 %v252, %v655
      %657 = vmatprep.mubr.bf16.mxu0 %v362
      %658 = vmatmul.mubr.bf16.gmra.mxu0 %v361
      %v659 = vpop.f32.mrf.mxu0
      %v660 = vadd.f32 %v248, %v659
      %v661 = vpop.f32.mrf.mxu0
      %v662 = vadd.f32 %v252, %v661
      %v663 = vpop.f32.mrf.mxu0
      %v664 = vadd.f32 %v248, %v663
      %v665 = vpop.f32.mrf.mxu0
      %v666 = vadd.f32 %v252, %v665
      %667 = vmatprep.mubr.bf16.mxu0 %v364
      %668 = vmatmul.mubr.bf16.gmra.mxu0 %v363
      %v669 = vpop.f32.mrf.mxu0
      %v670 = vadd.f32 %v248, %v669
      %v671 = vpop.f32.mrf.mxu0
      %v672 = vadd.f32 %v252, %v671
      %v673 = vpop.f32.mrf.mxu0
      %v674 = vadd.f32 %v248, %v673
      %v675 = vpop.f32.mrf.mxu0
      %v676 = vadd.f32 %v252, %v675
      %677 = vmatprep.mubr.bf16.mxu0 %v366
      %678 = vmatmul.mubr.bf16.gmra.mxu0 %v365
      %v679 = vpop.f32.mrf.mxu0
      %v680 = vadd.f32 %v248, %v679
      %v681 = vpop.f32.mrf.mxu0
      %v682 = vadd.f32 %v252, %v681
      %v683 = vpop.f32.mrf.mxu0
      %v684 = vadd.f32 %v248, %v683
      %v685 = vpop.f32.mrf.mxu0
      %v686 = vadd.f32 %v252, %v685
      %687 = vmatprep.mubr.bf16.mxu0 %v368
      %688 = vmatmul.mubr.bf16.gmra.mxu0 %v367
      %v689 = vpop.f32.mrf.mxu0
      %v690 = vadd.f32 %v248, %v689
      %v691 = vpop.f32.mrf.mxu0
      %v692 = vadd.f32 %v252, %v691
      %v693 = vpop.f32.mrf.mxu0
      %v694 = vadd.f32 %v248, %v693
      %v695 = vpop.f32.mrf.mxu0
      %v696 = vadd.f32 %v252, %v695
      %697 = vmatprep.mubr.bf16.mxu0 %v370
      %698 = vmatmul.mubr.bf16.gmra.mxu0 %v369
      %v699 = vpop.f32.mrf.mxu0
      %v700 = vadd.f32 %v248, %v699
      %v701 = vpop.f32.mrf.mxu0
      %v702 = vadd.f32 %v252, %v701
      %v703 = vpop.f32.mrf.mxu0
      %v704 = vadd.f32 %v248, %v703
      %v705 = vpop.f32.mrf.mxu0
      %v706 = vadd.f32 %v252, %v705
      %707 = vmatprep.mubr.bf16.mxu0 %v372
      %708 = vmatmul.mubr.bf16.gmra.mxu0 %v371
      %v709 = vpop.f32.mrf.mxu0
      %v710 = vadd.f32 %v248, %v709
      %v711 = vpop.f32.mrf.mxu0
      %v712 = vadd.f32 %v252, %v711
      %v713 = vpop.f32.mrf.mxu0
      %v714 = vadd.f32 %v248, %v713
      %v715 = vpop.f32.mrf.mxu0
      %v716 = vadd.f32 %v252, %v715
      %717 = vmatprep.mubr.bf16.mxu0 %v374
      %718 = vmatmul.mubr.bf16.gmra.mxu0 %v373
      %v719 = vpop.f32.mrf.mxu0
      %v720 = vadd.f32 %v248, %v719
      %v721 = vpop.f32.mrf.mxu0
      %v722 = vadd.f32 %v252, %v721
      %v723 = vpop.f32.mrf.mxu0
      %v724 = vadd.f32 %v248, %v723
      %v725 = vpop.f32.mrf.mxu0
      %v726 = vadd.f32 %v252, %v725
      %727 = vmatprep.mubr.bf16.mxu0 %v376
      %728 = vmatmul.mubr.bf16.gmra.mxu0 %v375
      %v729 = vpop.f32.mrf.mxu0
      %v730 = vadd.f32 %v248, %v729
      %v731 = vpop.f32.mrf.mxu0
      %v732 = vadd.f32 %v252, %v731
      %v733 = vpop.f32.mrf.mxu0
      %v734 = vadd.f32 %v248, %v733
      %v735 = vpop.f32.mrf.mxu0
      %v736 = vadd.f32 %v252, %v735
      %737 = vmatprep.mubr.bf16.mxu0 %v378
      %738 = vmatmul.mubr.bf16.gmra.mxu0 %v377
      %v739 = vpop.f32.mrf.mxu0
      %v740 = vadd.f32 %v248, %v739
      %v741 = vpop.f32.mrf.mxu0
      %v742 = vadd.f32 %v252, %v741
      %v743 = vpop.f32.mrf.mxu0
      %v744 = vadd.f32 %v248, %v743
      %v745 = vpop.f32.mrf.mxu0
      %v746 = vadd.f32 %v252, %v745
      %747 = vmatprep.mubr.bf16.mxu0 %v380
      %748 = vmatmul.mubr.bf16.gmra.mxu0 %v379
      %v749 = vpop.f32.mrf.mxu0
      %v750 = vadd.f32 %v248, %v749
      %v751 = vpop.f32.mrf.mxu0
      %v752 = vadd.f32 %v252, %v751
      %v753 = vpop.f32.mrf.mxu0
      %v754 = vadd.f32 %v248, %v753
      %v755 = vpop.f32.mrf.mxu0
      %v756 = vadd.f32 %v252, %v755
      %757 = vmatprep.mubr.bf16.mxu0 %v382
      %758 = vmatmul.mubr.bf16.gmra.mxu0 %v381
      %v759 = vpop.f32.mrf.mxu0
      %v760 = vadd.f32 %v248, %v759
      %v761 = vpop.f32.mrf.mxu0
      %v762 = vadd.f32 %v252, %v761
      %v763 = vpop.f32.mrf.mxu0
      %v764 = vadd.f32 %v248, %v763
      %v765 = vpop.f32.mrf.mxu0
      %v766 = vadd.f32 %v252, %v765
      %767 = vdwg.mxu0
      %v768 = vpack.c.bf16 %v614, %v610
      %v769 = vpack.c.bf16 %v616, %v612
      %v770 = vpack.c.bf16 %v624, %v620
      %v771 = vpack.c.bf16 %v626, %v622
      %v772 = vpack.c.bf16 %v634, %v630
      %v773 = vpack.c.bf16 %v636, %v632
      %v774 = vpack.c.bf16 %v644, %v640
      %v775 = vpack.c.bf16 %v646, %v642
      %v776 = vpack.c.bf16 %v654, %v650
      %v777 = vpack.c.bf16 %v656, %v652
      %v778 = vpack.c.bf16 %v664, %v660
      %v779 = vpack.c.bf16 %v666, %v662
      %v780 = vpack.c.bf16 %v674, %v670
      %v781 = vpack.c.bf16 %v676, %v672
      %v782 = vpack.c.bf16 %v684, %v680
      %v783 = vpack.c.bf16 %v686, %v682
      %v784 = vpack.c.bf16 %v694, %v690
      %v785 = vpack.c.bf16 %v696, %v692
      %v786 = vpack.c.bf16 %v704, %v700
      %v787 = vpack.c.bf16 %v706, %v702
      %v788 = vpack.c.bf16 %v714, %v710
      %v789 = vpack.c.bf16 %v716, %v712
      %v790 = vpack.c.bf16 %v724, %v720
      %v791 = vpack.c.bf16 %v726, %v722
      %v792 = vpack.c.bf16 %v734, %v730
      %v793 = vpack.c.bf16 %v736, %v732
      %v794 = vpack.c.bf16 %v744, %v740
      %v795 = vpack.c.bf16 %v746, %v742
      %v796 = vpack.c.bf16 %v754, %v750
      %v797 = vpack.c.bf16 %v756, %v752
      %v798 = vpack.c.bf16 %v764, %v760
      %v799 = vpack.c.bf16 %v766, %v762
      %v832 = vunpack.c.l.b16 %v768
      %v833 = vunpack.c.l.b16 %v769
      %v834 = vunpack.c.h.b16 %v768
      %v835 = vunpack.c.h.b16 %v769
      %v836 = vunpack.c.l.b16 %v770
      %v837 = vunpack.c.l.b16 %v771
      %v838 = vunpack.c.h.b16 %v770
      %v839 = vunpack.c.h.b16 %v771
      %v840 = vunpack.c.l.b16 %v772
      %v841 = vunpack.c.l.b16 %v773
      %v842 = vunpack.c.h.b16 %v772
      %v843 = vunpack.c.h.b16 %v773
      %v844 = vunpack.c.l.b16 %v774
      %v845 = vunpack.c.l.b16 %v775
      %v846 = vunpack.c.h.b16 %v774
      %v847 = vunpack.c.h.b16 %v775
      %v848 = vunpack.c.l.b16 %v776
      %v849 = vunpack.c.l.b16 %v777
      %v850 = vunpack.c.h.b16 %v776
      %v851 = vunpack.c.h.b16 %v777
      %v852 = vunpack.c.l.b16 %v778
      %v853 = vunpack.c.l.b16 %v779
      %v854 = vunpack.c.h.b16 %v778
      %v855 = vunpack.c.h.b16 %v779
      %v856 = vunpack.c.l.b16 %v780
      %v857 = vunpack.c.l.b16 %v781
      %v858 = vunpack.c.h.b16 %v780
      %v859 = vunpack.c.h.b16 %v781
      %v860 = vunpack.c.l.b16 %v782
      %v861 = vunpack.c.l.b16 %v783
      %v862 = vunpack.c.h.b16 %v782
      %v863 = vunpack.c.h.b16 %v783
      %v864 = vunpack.c.l.b16 %v784
      %v865 = vunpack.c.l.b16 %v785
      %v866 = vunpack.c.h.b16 %v784
      %v867 = vunpack.c.h.b16 %v785
      %v868 = vunpack.c.l.b16 %v786
      %v869 = vunpack.c.l.b16 %v787
      %v870 = vunpack.c.h.b16 %v786
      %v871 = vunpack.c.h.b16 %v787
      %v872 = vunpack.c.l.b16 %v788
      %v873 = vunpack.c.l.b16 %v789
      %v874 = vunpack.c.h.b16 %v788
      %v875 = vunpack.c.h.b16 %v789
      %v876 = vunpack.c.l.b16 %v790
      %v877 = vunpack.c.l.b16 %v791
      %v878 = vunpack.c.h.b16 %v790
      %v879 = vunpack.c.h.b16 %v791
      %v880 = vunpack.c.l.b16 %v792
      %v881 = vunpack.c.l.b16 %v793
      %v882 = vunpack.c.h.b16 %v792
      %v883 = vunpack.c.h.b16 %v793
      %v884 = vunpack.c.l.b16 %v794
      %v885 = vunpack.c.l.b16 %v795
      %v886 = vunpack.c.h.b16 %v794
      %v887 = vunpack.c.h.b16 %v795
      %v888 = vunpack.c.l.b16 %v796
      %v889 = vunpack.c.l.b16 %v797
      %v890 = vunpack.c.h.b16 %v796
      %v891 = vunpack.c.h.b16 %v797
      %v892 = vunpack.c.l.b16 %v798
      %v893 = vunpack.c.l.b16 %v799
      %v894 = vunpack.c.h.b16 %v798
      %v895 = vunpack.c.h.b16 %v799
      %v896 = vpack.c.b16 %v833, %v832
      %v897 = vpack.c.b16 %v835, %v834
      %v898 = vpack.c.b16 %v837, %v836
      %v899 = vpack.c.b16 %v839, %v838
      %v900 = vpack.c.b16 %v841, %v840
      %v901 = vpack.c.b16 %v843, %v842
      %v902 = vpack.c.b16 %v845, %v844
      %v903 = vpack.c.b16 %v847, %v846
      %v904 = vpack.c.b16 %v849, %v848
      %v905 = vpack.c.b16 %v851, %v850
      %v906 = vpack.c.b16 %v853, %v852
      %v907 = vpack.c.b16 %v855, %v854
      %v908 = vpack.c.b16 %v857, %v856
      %v909 = vpack.c.b16 %v859, %v858
      %v910 = vpack.c.b16 %v861, %v860
      %v911 = vpack.c.b16 %v863, %v862
      %v912 = vpack.c.b16 %v865, %v864
      %v913 = vpack.c.b16 %v867, %v866
      %v914 = vpack.c.b16 %v869, %v868
      %v915 = vpack.c.b16 %v871, %v870
      %v916 = vpack.c.b16 %v873, %v872
      %v917 = vpack.c.b16 %v875, %v874
      %v918 = vpack.c.b16 %v877, %v876
      %v919 = vpack.c.b16 %v879, %v878
      %v920 = vpack.c.b16 %v881, %v880
      %v921 = vpack.c.b16 %v883, %v882
      %v922 = vpack.c.b16 %v885, %v884
      %v923 = vpack.c.b16 %v887, %v886
      %v924 = vpack.c.b16 %v889, %v888
      %v925 = vpack.c.b16 %v891, %v890
      %v926 = vpack.c.b16 %v893, %v892
      %v927 = vpack.c.b16 %v895, %v894
      %960 = vst [vmem:[%s177] sm:$0xff] %v896
      %961 = vst [vmem:[%s177 + $0x8] sm:$0xff] %v897
      %962 = vst [vmem:[%s177 + $0x10] sm:$0xff] %v898
      %963 = vst [vmem:[%s177 + $0x18] sm:$0xff] %v899
      %964 = vst [vmem:[%s177 + $0x20] sm:$0xff] %v900
      %965 = vst [vmem:[%s177 + $0x28] sm:$0xff] %v901
      %966 = vst [vmem:[%s177 + $0x30] sm:$0xff] %v902
      %967 = vst [vmem:[%s177 + $0x38] sm:$0xff] %v903
      %968 = vst [vmem:[%s177 + $0x40] sm:$0xff] %v904
      %969 = vst [vmem:[%s177 + $0x48] sm:$0xff] %v905
      %970 = vst [vmem:[%s177 + $0x50] sm:$0xff] %v906
      %971 = vst [vmem:[%s177 + $0x58] sm:$0xff] %v907
      %972 = vst [vmem:[%s177 + $0x60] sm:$0xff] %v908
      %973 = vst [vmem:[%s177 + $0x68] sm:$0xff] %v909
      %974 = vst [vmem:[%s177 + $0x70] sm:$0xff] %v910
      %975 = vst [vmem:[%s177 + $0x78] sm:$0xff] %v911
      %976 = vst [vmem:[%s177 + $0x80] sm:$0xff] %v912
      %977 = vst [vmem:[%s177 + $0x88] sm:$0xff] %v913
      %978 = vst [vmem:[%s177 + $0x90] sm:$0xff] %v914
      %979 = vst [vmem:[%s177 + $0x98] sm:$0xff] %v915
      %980 = vst [vmem:[%s177 + $0xa0] sm:$0xff] %v916
      %981 = vst [vmem:[%s177 + $0xa8] sm:$0xff] %v917
      %982 = vst [vmem:[%s177 + $0xb0] sm:$0xff] %v918
      %983 = vst [vmem:[%s177 + $0xb8] sm:$0xff] %v919
      %984 = vst [vmem:[%s177 + $0xc0] sm:$0xff] %v920
      %985 = vst [vmem:[%s177 + $0xc8] sm:$0xff] %v921
      %986 = vst [vmem:[%s177 + $0xd0] sm:$0xff] %v922
      %987 = vst [vmem:[%s177 + $0xd8] sm:$0xff] %v923
      %988 = vst [vmem:[%s177 + $0xe0] sm:$0xff] %v924
      %989 = vst [vmem:[%s177 + $0xe8] sm:$0xff] %v925
      %990 = vst [vmem:[%s177 + $0xf0] sm:$0xff] %v926
      %991 = vst [vmem:[%s177 + $0xf8] sm:$0xff] %v927
      %s992 = smul.u32 32, %s14
      %p993 = scmp.lt.s32.totalorder %s992, 63
      %s994 = scalar_select %p993, %s992, 63
      %s995 = smul.addr %s994, 2
      %s996 = smul.addr %s995, 4
      %s997 = scalar_lea.vmem %s3, %s996
      // Predicated region
      $region33: #{pam_forward.6} parent=31 // pred_check
        %p998 = pneg %p100
      $region34: #{pam_forward.6} parent=31 // pred_check_branch
        %1000 = sbr.rel (%p998) target = $region36
      $region35: #{pam_forward.6} parent=31 // pred_region
        %s1001 = smul.u32 32, %s14
      $region36: #{pam_forward.6} parent=31 // pred_fallthru
        _
    $region32: #{pam_forward.6} parent=5 // pred_fallthru
      _
    %p1002 = scmp.le.s32.totalorder 2, %s9
    // Predicated region
    $region37: #{pam_forward.6} parent=5 // pred_check
      %p1003 = pneg %p1002
    $region38: #{pam_forward.6} parent=5 // pred_check_branch
      %1005 = sbr.rel (%p1003) target = $region40
    $region39: #{pam_forward.6} parent=5 // pred_region
      %s1006 = ssub.s32 %s9, 2
      // Predicated region
      $region41: #{pam_forward.6} parent=39 // pred_check
        %p1007 = pneg %p106
      $region42: #{pam_forward.6} parent=39 // pred_check_branch
        %1009 = sbr.rel (%p1007) target = $region44
      $region43: #{pam_forward.6} parent=39 // pred_region
        %s1010 = smul.u32 32, %s15
        %p1011 = scmp.lt.s32.totalorder %s1010, 63
        %s1012 = scalar_select %p1011, %s1010, 63
        %s1013 = smul.addr %s1012, 2
        %s1014 = smul.addr %s1013, 4
        %s1015 = scalar_lea.vmem %s3, %s1014
      $region44: #{pam_forward.6} parent=39 // pred_fallthru
        _
    $region40: #{pam_forward.6} parent=5 // pred_fallthru
      _
  $region6: #{pam_forward.6} parent=0 // loop_footer
    %s13 = sadd.s32 1, %s9
  $region7: #{pam_forward.6} parent=0 // loop_footer_branch
    %8 = sbr.rel target = $region3
  $region8: #{pam_forward.6} parent=0 // loop_exit
    _

// kernel: pam_forward.5
$region0: #{pam_forward.5}
  #allocation0 [shape = 'u32[]', space=smem, size = 0x4, offset = 0x4, fixed_abs, tag = 'smem constant byte address 0x4 - core index']
  #allocation1 [shape = 'u32[144,128]{1,0:T(1,128)}', space=vmem, size = 0x12000, scoped, tag = 'internal scratch']
  %s0 = inlined_call_operand.vmem [shape: bf16[512,256], index: 0, kind: input, shape index: {}]
  %s1 = inlined_call_operand.vmem [shape: bf16[256,32], index: 1, kind: input, shape index: {}]
  %s2 = inlined_call_operand.vmem [shape: f32[1,32], index: 2, kind: input, shape index: {}]
  %s3 = inlined_call_operand.vmem [shape: bf16[512,32], index: 3, kind: output, shape index: {}]
  %s4 = sld [smem:[#allocation0]]
  $region45: #{pam_forward.5} parent=0
    _
  %s6 = ssub.s32 1, %s4
  %s7 = scalar_select 0, %s6, %s4
  loop: start=0, step=1, limit=4
  $region2: #{pam_forward.5} parent=0 // loop_pre_header
    _
  $region3: #{pam_forward.5} parent=0 // loop_header
    %s9 = sphi 0, %s13
    %p10 = scmp.ge.s32.totalorder %s9, 4
    %s19 = sphi 0, %s21
    %s22 = sphi 0, %s19
    %s23 = sphi 0, %s22
    %s39 = sphi 0, %s23
    %s43 = sphi 0, %s43
    %s45 = sphi 0, %s43
    %s46 = sphi 0, %s45
    %s60 = sphi 0, %s46
    %s64 = sphi 0, %s64
    %s66 = sphi 0, %s64
    %s67 = sphi 0, %s66
    %s81 = sphi 0, %s67
    %s87 = sphi 0, %s89
    %s90 = sphi 0, %s87
    %s91 = sphi 0, %s90
    %s107 = sphi 0, %s91
  $region4: #{pam_forward.5} parent=0 // loop_header_branch
    %12 = sbr.rel (%p10) target = $region8
  $region5: #{pam_forward.5} parent=0 // loop_body
    %s14 = ssub.s32 %s9, 1
    %s15 = ssub.s32 %s9, 2
    %s16 = sadd.s32 %s9, 1
    %s17 = ssub.s32 %s9, %s16
    %p18 = scmp.eq.s32.totalorder %s17, 0
    %s20 = sadd.s32 %s19, 1
    %s21 = scalar_select %p18, %s19, %s20
    %p24 = pneg %p18
    %p25 = scmp.eq.s32.totalorder %s9, 1
    %p26 = por %p24, %p25
    %p27 = scmp.ne.s32.totalorder %s19, %s22
    %p28 = scmp.eq.s32.totalorder %s9, 0
    %p29 = por %p27, %p28
    %p30 = scmp.ne.s32.totalorder %s19, %s22
    %p31 = scmp.eq.s32.totalorder %s14, 1
    %p32 = por %p30, %p31
    %p33 = scmp.ne.s32.totalorder %s22, %s23
    %p34 = scmp.eq.s32.totalorder %s14, 0
    %p35 = por %p33, %p34
    %p36 = scmp.ne.s32.totalorder %s22, %s23
    %p37 = scmp.eq.s32.totalorder %s15, 1
    %p38 = por %p36, %p37
    %p40 = scmp.ne.s32.totalorder %s23, %s39
    %p41 = scmp.eq.s32.totalorder %s15, 0
    %p42 = por %p40, %p41
    %s44 = sadd.s32 %s43, 1
    %p47 = scmp.eq.s32.totalorder %s9, 1
    %p48 = scmp.ne.s32.totalorder %s43, %s45
    %p49 = scmp.eq.s32.totalorder %s9, 0
    %p50 = por %p48, %p49
    %p51 = scmp.ne.s32.totalorder %s43, %s45
    %p52 = scmp.eq.s32.totalorder %s14, 1
    %p53 = por %p51, %p52
    %p54 = scmp.ne.s32.totalorder %s45, %s46
    %p55 = scmp.eq.s32.totalorder %s14, 0
    %p56 = por %p54, %p55
    %p57 = scmp.ne.s32.totalorder %s45, %s46
    %p58 = scmp.eq.s32.totalorder %s15, 1
    %p59 = por %p57, %p58
    %p61 = scmp.ne.s32.totalorder %s46, %s60
    %p62 = scmp.eq.s32.totalorder %s15, 0
    %p63 = por %p61, %p62
    %s65 = sadd.s32 %s64, 1
    %p68 = scmp.eq.s32.totalorder %s9, 1
    %p69 = scmp.ne.s32.totalorder %s64, %s66
    %p70 = scmp.eq.s32.totalorder %s9, 0
    %p71 = por %p69, %p70
    %p72 = scmp.ne.s32.totalorder %s64, %s66
    %p73 = scmp.eq.s32.totalorder %s14, 1
    %p74 = por %p72, %p73
    %p75 = scmp.ne.s32.totalorder %s66, %s67
    %p76 = scmp.eq.s32.totalorder %s14, 0
    %p77 = por %p75, %p76
    %p78 = scmp.ne.s32.totalorder %s66, %s67
    %p79 = scmp.eq.s32.totalorder %s15, 1
    %p80 = por %p78, %p79
    %p82 = scmp.ne.s32.totalorder %s67, %s81
    %p83 = scmp.eq.s32.totalorder %s15, 0
    %p84 = por %p82, %p83
    %s85 = ssub.s32 %s9, %s16
    %p86 = scmp.eq.s32.totalorder %s85, 0
    %s88 = sadd.s32 %s87, 1
    %s89 = scalar_select %p86, %s87, %s88
    %p92 = pneg %p86
    %p93 = scmp.eq.s32.totalorder %s9, 1
    %p94 = por %p92, %p93
    %p95 = scmp.ne.s32.totalorder %s87, %s90
    %p96 = scmp.eq.s32.totalorder %s9, 0
    %p97 = por %p95, %p96
    %p98 = scmp.ne.s32.totalorder %s87, %s90
    %p99 = scmp.eq.s32.totalorder %s14, 1
    %p100 = por %p98, %p99
    %p101 = scmp.ne.s32.totalorder %s90, %s91
    %p102 = scmp.eq.s32.totalorder %s14, 0
    %p103 = por %p101, %p102
    %p104 = scmp.ne.s32.totalorder %s90, %s91
    %p105 = scmp.eq.s32.totalorder %s15, 1
    %p106 = por %p104, %p105
    %p108 = scmp.ne.s32.totalorder %s91, %s107
    %p109 = scmp.eq.s32.totalorder %s15, 0
    %p110 = por %p108, %p109
    %p111 = scmp.le.s32.totalorder 1, %s9
    %p112 = scmp.lt.s32.totalorder %s9, 3
    %p113 = pnand %p111, %p112
    %p114 = pneg %p113
    // Predicated region
    $region9: #{pam_forward.5} parent=5 // pred_check
      _
    $region10: #{pam_forward.5} parent=5 // pred_check_branch
      %116 = sbr.rel (%p113) target = $region12
    $region11: #{pam_forward.5} parent=5 // pred_region
      %s117 = ssub.s32 %s9, 1
      // Predicated region
      $region13: #{pam_forward.5} parent=11 // pred_check
        %p118 = pneg %p56
      $region14: #{pam_forward.5} parent=11 // pred_check_branch
        %120 = sbr.rel (%p118) target = $region16
      $region15: #{pam_forward.5} parent=11 // pred_region
        _
      $region16: #{pam_forward.5} parent=11 // pred_fallthru
        _
      // Predicated region
      $region17: #{pam_forward.5} parent=11 // pred_check
        %p121 = pneg %p77
      $region18: #{pam_forward.5} parent=11 // pred_check_branch
        %123 = sbr.rel (%p121) target = $region20
      $region19: #{pam_forward.5} parent=11 // pred_region
        _
      $region20: #{pam_forward.5} parent=11 // pred_fallthru
        _
    $region12: #{pam_forward.5} parent=5 // pred_fallthru
      _
    %p124 = scmp.lt.s32.totalorder %s9, 2
    // Predicated region
    $region21: #{pam_forward.5} parent=5 // pred_check
      %p125 = pneg %p124
    $region22: #{pam_forward.5} parent=5 // pred_check_branch
      %127 = sbr.rel (%p125) target = $region24
    $region23: #{pam_forward.5} parent=5 // pred_region
      // Predicated region
      $region25: #{pam_forward.5} parent=23 // pred_check
        %p128 = pneg %p29
      $region26: #{pam_forward.5} parent=23 // pred_check_branch
        %130 = sbr.rel (%p128) target = $region28
      $region27: #{pam_forward.5} parent=23 // pred_region
        %s131 = smul.u32 32, %s9
        %p132 = scmp.lt.s32.totalorder %s131, 63
        %s133 = scalar_select %p132, %s131, 63
        %s134 = smul.addr %s133, 2
        %s135 = smul.addr %s134, 4
        %s136 = scalar_lea.vmem %s0, %s135
        %s137 = smul.u32 32, %s9
      $region28: #{pam_forward.5} parent=23 // pred_fallthru
        _
    $region24: #{pam_forward.5} parent=5 // pred_fallthru
      _
    %p138 = scmp.le.s32.totalorder 1, %s9
    %p139 = scmp.lt.s32.totalorder %s9, 3
    %p140 = pnand %p138, %p139
    %p141 = pneg %p140
    // Predicated region
    $region29: #{pam_forward.5} parent=5 // pred_check
      _
    $region30: #{pam_forward.5} parent=5 // pred_check_branch
      %143 = sbr.rel (%p140) target = $region32
    $region31: #{pam_forward.5} parent=5 // pred_region
      %s144 = ssub.s32 %s9, 1
      %s145 = smul.u32 32, %s14
      %p146 = scmp.lt.s32.totalorder %s145, 63
      %s147 = scalar_select %p146, %s145, 63
      %s148 = smul.addr %s147, 2
      %s149 = smul.addr %s148, 4
      %s150 = scalar_lea.vmem %s0, %s149
      %p151 = pneg %p35
      %p152 = pneg %p32
      %p153 = pneg %p56
      %p154 = pneg %p53
      %p155 = pneg %p77
      %p156 = pneg %p74
      %p157 = pneg %p103
      %p158 = pneg %p100
      %s159 = smul.u32 32, %s14
      %p160 = scmp.lt.s32.totalorder %s159, 63
      %s161 = scalar_select %p160, %s159, 63
      %s162 = smul.addr %s161, 4
      %s163 = scalar_lea.vmem %s3, %s162
      %s164 = smul.u32 32, %s14
      %p165 = scmp.lt.s32.totalorder %s164, 63
      %s166 = scalar_select %p165, %s164, 63
      %s167 = smul.addr %s166, 2
      %s168 = smul.addr %s167, 4
      %s169 = scalar_lea.vmem %s0, %s168
      %s170 = smul.u32 32, %s14
      %s171 = smul.u32 32, %s14
      %p172 = scmp.lt.s32.totalorder %s171, 63
      %s173 = scalar_select %p172, %s171, 63
      %s174 = smul.addr %s173, 4
      %s175 = scalar_lea.vmem %s3, %s174
      %s176 = smul.u32 32, %s14
      %v178 = vld [vmem:[%s169] sm:$0xff]
      %v179 = vld [vmem:[%s169 + $0x8] sm:$0xff]
      %v180 = vld [vmem:[%s169 + $0x10] sm:$0xff]
      %v181 = vld [vmem:[%s169 + $0x18] sm:$0xff]
      %v182 = vld [vmem:[%s169 + $0x20] sm:$0xff]
      %v183 = vld [vmem:[%s169 + $0x28] sm:$0xff]
      %v184 = vld [vmem:[%s169 + $0x30] sm:$0xff]
      %v185 = vld [vmem:[%s169 + $0x38] sm:$0xff]
      %v186 = vld [vmem:[%s169 + $0x40] sm:$0xff]
      %v187 = vld [vmem:[%s169 + $0x48] sm:$0xff]
      %v188 = vld [vmem:[%s169 + $0x50] sm:$0xff]
      %v189 = vld [vmem:[%s169 + $0x58] sm:$0xff]
      %v190 = vld [vmem:[%s169 + $0x60] sm:$0xff]
      %v191 = vld [vmem:[%s169 + $0x68] sm:$0xff]
      %v192 = vld [vmem:[%s169 + $0x70] sm:$0xff]
      %v193 = vld [vmem:[%s169 + $0x78] sm:$0xff]
      %v194 = vld [vmem:[%s169 + $0x80] sm:$0xff]
      %v195 = vld [vmem:[%s169 + $0x88] sm:$0xff]
      %v196 = vld [vmem:[%s169 + $0x90] sm:$0xff]
      %v197 = vld [vmem:[%s169 + $0x98] sm:$0xff]
      %v198 = vld [vmem:[%s169 + $0xa0] sm:$0xff]
      %v199 = vld [vmem:[%s169 + $0xa8] sm:$0xff]
      %v200 = vld [vmem:[%s169 + $0xb0] sm:$0xff]
      %v201 = vld [vmem:[%s169 + $0xb8] sm:$0xff]
      %v202 = vld [vmem:[%s169 + $0xc0] sm:$0xff]
      %v203 = vld [vmem:[%s169 + $0xc8] sm:$0xff]
      %v204 = vld [vmem:[%s169 + $0xd0] sm:$0xff]
      %v205 = vld [vmem:[%s169 + $0xd8] sm:$0xff]
      %v206 = vld [vmem:[%s169 + $0xe0] sm:$0xff]
      %v207 = vld [vmem:[%s169 + $0xe8] sm:$0xff]
      %v208 = vld [vmem:[%s169 + $0xf0] sm:$0xff]
      %v209 = vld [vmem:[%s169 + $0xf8] sm:$0xff]
      %v210 = vld [vmem:[%s1] sm:$0xf]
      %v211 = vld [vmem:[%s1 + $0x4] sm:$0xf]
      %v212 = vld [vmem:[%s1 + $0x8] sm:$0xf]
      %v213 = vld [vmem:[%s1 + $0xc] sm:$0xf]
      %v214 = vld [vmem:[%s1 + $0x10] sm:$0xf]
      %v215 = vld [vmem:[%s1 + $0x14] sm:$0xf]
      %v216 = vld [vmem:[%s1 + $0x18] sm:$0xf]
      %v217 = vld [vmem:[%s1 + $0x1c] sm:$0xf]
      %v218 = vld [vmem:[%s1 + $0x20] sm:$0xf]
      %v219 = vld [vmem:[%s1 + $0x24] sm:$0xf]
      %v220 = vld [vmem:[%s1 + $0x28] sm:$0xf]
      %v221 = vld [vmem:[%s1 + $0x2c] sm:$0xf]
      %v222 = vld [vmem:[%s1 + $0x30] sm:$0xf]
      %v223 = vld [vmem:[%s1 + $0x34] sm:$0xf]
      %v224 = vld [vmem:[%s1 + $0x38] sm:$0xf]
      %v225 = vld [vmem:[%s1 + $0x3c] sm:$0xf]
      %v226 = vld [vmem:[%s1 + $0x40] sm:$0xf]
      %v227 = vld [vmem:[%s1 + $0x44] sm:$0xf]
      %v228 = vld [vmem:[%s1 + $0x48] sm:$0xf]
      %v229 = vld [vmem:[%s1 + $0x4c] sm:$0xf]
      %v230 = vld [vmem:[%s1 + $0x50] sm:$0xf]
      %v231 = vld [vmem:[%s1 + $0x54] sm:$0xf]
      %v232 = vld [vmem:[%s1 + $0x58] sm:$0xf]
      %v233 = vld [vmem:[%s1 + $0x5c] sm:$0xf]
      %v234 = vld [vmem:[%s1 + $0x60] sm:$0xf]
      %v235 = vld [vmem:[%s1 + $0x64] sm:$0xf]
      %v236 = vld [vmem:[%s1 + $0x68] sm:$0xf]
      %v237 = vld [vmem:[%s1 + $0x6c] sm:$0xf]
      %v238 = vld [vmem:[%s1 + $0x70] sm:$0xf]
      %v239 = vld [vmem:[%s1 + $0x74] sm:$0xf]
      %v240 = vld [vmem:[%s1 + $0x78] sm:$0xf]
      %v241 = vld [vmem:[%s1 + $0x7c] sm:$0xf]
      %v242 = vld [vmem:[%s2] sm:$0x1]
      %v244 = vlaneseq
      %v245 = vshrl.u32 %v244, 7
      %v246 = vsub.s32 0, %v245
      %v247 = vrot.slane %v242, %v246
      %v281 = vunpack.c.l.b16 %v178
      %v282 = vunpack.c.h.b16 %v178
      %v283 = vunpack.c.l.b16 %v179
      %v284 = vunpack.c.h.b16 %v179
      %v285 = vunpack.c.l.b16 %v180
      %v286 = vunpack.c.h.b16 %v180
      %v287 = vunpack.c.l.b16 %v181
      %v288 = vunpack.c.h.b16 %v181
      %v289 = vunpack.c.l.b16 %v182
      %v290 = vunpack.c.h.b16 %v182
      %v291 = vunpack.c.l.b16 %v183
      %v292 = vunpack.c.h.b16 %v183
      %v293 = vunpack.c.l.b16 %v184
      %v294 = vunpack.c.h.b16 %v184
      %v295 = vunpack.c.l.b16 %v185
      %v296 = vunpack.c.h.b16 %v185
      %v297 = vunpack.c.l.b16 %v186
      %v298 = vunpack.c.h.b16 %v186
      %v299 = vunpack.c.l.b16 %v187
      %v300 = vunpack.c.h.b16 %v187
      %v301 = vunpack.c.l.b16 %v188
      %v302 = vunpack.c.h.b16 %v188
      %v303 = vunpack.c.l.b16 %v189
      %v304 = vunpack.c.h.b16 %v189
      %v305 = vunpack.c.l.b16 %v190
      %v306 = vunpack.c.h.b16 %v190
      %v307 = vunpack.c.l.b16 %v191
      %v308 = vunpack.c.h.b16 %v191
      %v309 = vunpack.c.l.b16 %v192
      %v310 = vunpack.c.h.b16 %v192
      %v311 = vunpack.c.l.b16 %v193
      %v312 = vunpack.c.h.b16 %v193
      %v313 = vunpack.c.l.b16 %v194
      %v314 = vunpack.c.h.b16 %v194
      %v315 = vunpack.c.l.b16 %v195
      %v316 = vunpack.c.h.b16 %v195
      %v317 = vunpack.c.l.b16 %v196
      %v318 = vunpack.c.h.b16 %v196
      %v319 = vunpack.c.l.b16 %v197
      %v320 = vunpack.c.h.b16 %v197
      %v321 = vunpack.c.l.b16 %v198
      %v322 = vunpack.c.h.b16 %v198
      %v323 = vunpack.c.l.b16 %v199
      %v324 = vunpack.c.h.b16 %v199
      %v325 = vunpack.c.l.b16 %v200
      %v326 = vunpack.c.h.b16 %v200
      %v327 = vunpack.c.l.b16 %v201
      %v328 = vunpack.c.h.b16 %v201
      %v329 = vunpack.c.l.b16 %v202
      %v330 = vunpack.c.h.b16 %v202
      %v331 = vunpack.c.l.b16 %v203
      %v332 = vunpack.c.h.b16 %v203
      %v333 = vunpack.c.l.b16 %v204
      %v334 = vunpack.c.h.b16 %v204
      %v335 = vunpack.c.l.b16 %v205
      %v336 = vunpack.c.h.b16 %v205
      %v337 = vunpack.c.l.b16 %v206
      %v338 = vunpack.c.h.b16 %v206
      %v339 = vunpack.c.l.b16 %v207
      %v340 = vunpack.c.h.b16 %v207
      %v341 = vunpack.c.l.b16 %v208
      %v342 = vunpack.c.h.b16 %v208
      %v343 = vunpack.c.l.b16 %v209
      %v344 = vunpack.c.h.b16 %v209
      %v345 = vpack.c.b16 %v283, %v281
      %v346 = vpack.c.b16 %v284, %v282
      %v347 = vpack.c.b16 %v287, %v285
      %v348 = vpack.c.b16 %v288, %v286
      %v349 = vpack.c.b16 %v291, %v289
      %v350 = vpack.c.b16 %v292, %v290
      %v351 = vpack.c.b16 %v295, %v293
      %v352 = vpack.c.b16 %v296, %v294
      %v353 = vpack.c.b16 %v299, %v297
      %v354 = vpack.c.b16 %v300, %v298
      %v355 = vpack.c.b16 %v303, %v301
      %v356 = vpack.c.b16 %v304, %v302
      %v357 = vpack.c.b16 %v307, %v305
      %v358 = vpack.c.b16 %v308, %v306
      %v359 = vpack.c.b16 %v311, %v309
      %v360 = vpack.c.b16 %v312, %v310
      %v361 = vpack.c.b16 %v315, %v313
      %v362 = vpack.c.b16 %v316, %v314
      %v363 = vpack.c.b16 %v319, %v317
      %v364 = vpack.c.b16 %v320, %v318
      %v365 = vpack.c.b16 %v323, %v321
      %v366 = vpack.c.b16 %v324, %v322
      %v367 = vpack.c.b16 %v327, %v325
      %v368 = vpack.c.b16 %v328, %v326
      %v369 = vpack.c.b16 %v331, %v329
      %v370 = vpack.c.b16 %v332, %v330
      %v371 = vpack.c.b16 %v335, %v333
      %v372 = vpack.c.b16 %v336, %v334
      %v373 = vpack.c.b16 %v339, %v337
      %v374 = vpack.c.b16 %v340, %v338
      %v375 = vpack.c.b16 %v343, %v341
      %v376 = vpack.c.b16 %v344, %v342
      %v441 = vunpack.c.l.b16 %v210
      %v442 = vunpack.c.l.b16 %v211
      %v443 = vunpack.c.l.b16 %v212
      %v444 = vunpack.c.l.b16 %v213
      %v445 = vunpack.c.l.b16 %v214
      %v446 = vunpack.c.l.b16 %v215
      %v447 = vunpack.c.l.b16 %v216
      %v448 = vunpack.c.l.b16 %v217
      %v449 = vunpack.c.l.b16 %v218
      %v450 = vunpack.c.l.b16 %v219
      %v451 = vunpack.c.l.b16 %v220
      %v452 = vunpack.c.l.b16 %v221
      %v453 = vunpack.c.l.b16 %v222
      %v454 = vunpack.c.l.b16 %v223
      %v455 = vunpack.c.l.b16 %v224
      %v456 = vunpack.c.l.b16 %v225
      %v457 = vunpack.c.l.b16 %v226
      %v458 = vunpack.c.l.b16 %v227
      %v459 = vunpack.c.l.b16 %v228
      %v460 = vunpack.c.l.b16 %v229
      %v461 = vunpack.c.l.b16 %v230
      %v462 = vunpack.c.l.b16 %v231
      %v463 = vunpack.c.l.b16 %v232
      %v464 = vunpack.c.l.b16 %v233
      %v465 = vunpack.c.l.b16 %v234
      %v466 = vunpack.c.l.b16 %v235
      %v467 = vunpack.c.l.b16 %v236
      %v468 = vunpack.c.l.b16 %v237
      %v469 = vunpack.c.l.b16 %v238
      %v470 = vunpack.c.l.b16 %v239
      %v471 = vunpack.c.l.b16 %v240
      %v472 = vunpack.c.l.b16 %v241
      %v473 = vpack.c.b16 %v442, %v441
      %v474 = vpack.c.b16 %v444, %v443
      %v475 = vpack.c.b16 %v446, %v445
      %v476 = vpack.c.b16 %v448, %v447
      %v477 = vpack.c.b16 %v450, %v449
      %v478 = vpack.c.b16 %v452, %v451
      %v479 = vpack.c.b16 %v454, %v453
      %v480 = vpack.c.b16 %v456, %v455
      %v481 = vpack.c.b16 %v458, %v457
      %v482 = vpack.c.b16 %v460, %v459
      %v483 = vpack.c.b16 %v462, %v461
      %v484 = vpack.c.b16 %v464, %v463
      %v485 = vpack.c.b16 %v466, %v465
      %v486 = vpack.c.b16 %v468, %v467
      %v487 = vpack.c.b16 %v470, %v469
      %v488 = vpack.c.b16 %v472, %v471
      %505 = vmatprep.subr.bf16.mxu0 0
      %506 = vmatpush1.bf16.msra.mxu0 %v480
      %507 = vmatprep.subr.bf16.mxu0 0
      %508 = vmatpush1.bf16.msra.mxu0 %v479
      %509 = vmatprep.subr.bf16.mxu0 0
      %510 = vmatpush1.bf16.msra.mxu0 %v478
      %511 = vmatprep.subr.bf16.mxu0 0
      %512 = vmatpush1.bf16.msra.mxu0 %v477
      %513 = vmatprep.subr.bf16.mxu0 0
      %514 = vmatpush1.bf16.msra.mxu0 %v476
      %515 = vmatprep.subr.bf16.mxu0 0
      %516 = vmatpush1.bf16.msra.mxu0 %v475
      %517 = vmatprep.subr.bf16.mxu0 0
      %518 = vmatpush1.bf16.msra.mxu0 %v474
      %519 = vmatprep.subr.bf16.mxu0 0
      %520 = vmatpush1.bf16.msra.mxu0 %v473
      %521 = vmatprep.subr.bf16.mxu0 0
      %522 = vmatpush2.bf16.msra.mxu0 %v488
      %523 = vmatprep.subr.bf16.mxu0 0
      %524 = vmatpush2.bf16.msra.mxu0 %v487
      %525 = vmatprep.subr.bf16.mxu0 0
      %526 = vmatpush2.bf16.msra.mxu0 %v486
      %527 = vmatprep.subr.bf16.mxu0 0
      %528 = vmatpush2.bf16.msra.mxu0 %v485
      %529 = vmatprep.subr.bf16.mxu0 0
      %530 = vmatpush2.bf16.msra.mxu0 %v484
      %531 = vmatprep.subr.bf16.mxu0 0
      %532 = vmatpush2.bf16.msra.mxu0 %v483
      %533 = vmatprep.subr.bf16.mxu0 0
      %534 = vmatpush2.bf16.msra.mxu0 %v482
      %535 = vmatprep.subr.bf16.mxu0 0
      %536 = vmatpush2.bf16.msra.mxu0 %v481
      %537 = vmatprep.mubr.bf16.mxu0 %v346
      %538 = vmatmul.mubr.bf16.gmra.mxu0 %v345
      %v539 = vpop.f32.mrf.mxu0
      %v540 = vadd.f32 %v247, %v539
      %v541 = vpop.f32.mrf.mxu0
      %v542 = vpop.f32.mrf.mxu0
      %v543 = vadd.f32 %v247, %v542
      %v544 = vpop.f32.mrf.mxu0
      %545 = vmatprep.mubr.bf16.mxu0 %v348
      %546 = vmatmul.mubr.bf16.gmra.mxu0 %v347
      %v547 = vpop.f32.mrf.mxu0
      %v548 = vadd.f32 %v247, %v547
      %v549 = vpop.f32.mrf.mxu0
      %v550 = vpop.f32.mrf.mxu0
      %v551 = vadd.f32 %v247, %v550
      %v552 = vpop.f32.mrf.mxu0
      %553 = vmatprep.mubr.bf16.mxu0 %v350
      %554 = vmatmul.mubr.bf16.gmra.mxu0 %v349
      %v555 = vpop.f32.mrf.mxu0
      %v556 = vadd.f32 %v247, %v555
      %v557 = vpop.f32.mrf.mxu0
      %v558 = vpop.f32.mrf.mxu0
      %v559 = vadd.f32 %v247, %v558
      %v560 = vpop.f32.mrf.mxu0
      %561 = vmatprep.mubr.bf16.mxu0 %v352
      %562 = vmatmul.mubr.bf16.gmra.mxu0 %v351
      %v563 = vpop.f32.mrf.mxu0
      %v564 = vadd.f32 %v247, %v563
      %v565 = vpop.f32.mrf.mxu0
      %v566 = vpop.f32.mrf.mxu0
      %v567 = vadd.f32 %v247, %v566
      %v568 = vpop.f32.mrf.mxu0
      %569 = vmatprep.mubr.bf16.mxu0 %v354
      %570 = vmatmul.mubr.bf16.gmra.mxu0 %v353
      %v571 = vpop.f32.mrf.mxu0
      %v572 = vadd.f32 %v247, %v571
      %v573 = vpop.f32.mrf.mxu0
      %v574 = vpop.f32.mrf.mxu0
      %v575 = vadd.f32 %v247, %v574
      %v576 = vpop.f32.mrf.mxu0
      %577 = vmatprep.mubr.bf16.mxu0 %v356
      %578 = vmatmul.mubr.bf16.gmra.mxu0 %v355
      %v579 = vpop.f32.mrf.mxu0
      %v580 = vadd.f32 %v247, %v579
      %v581 = vpop.f32.mrf.mxu0
      %v582 = vpop.f32.mrf.mxu0
      %v583 = vadd.f32 %v247, %v582
      %v584 = vpop.f32.mrf.mxu0
      %585 = vmatprep.mubr.bf16.mxu0 %v358
      %586 = vmatmul.mubr.bf16.gmra.mxu0 %v357
      %v587 = vpop.f32.mrf.mxu0
      %v588 = vadd.f32 %v247, %v587
      %v589 = vpop.f32.mrf.mxu0
      %v590 = vpop.f32.mrf.mxu0
      %v591 = vadd.f32 %v247, %v590
      %v592 = vpop.f32.mrf.mxu0
      %593 = vmatprep.mubr.bf16.mxu0 %v360
      %594 = vmatmul.mubr.bf16.gmra.mxu0 %v359
      %v595 = vpop.f32.mrf.mxu0
      %v596 = vadd.f32 %v247, %v595
      %v597 = vpop.f32.mrf.mxu0
      %v598 = vpop.f32.mrf.mxu0
      %v599 = vadd.f32 %v247, %v598
      %v600 = vpop.f32.mrf.mxu0
      %601 = vmatprep.mubr.bf16.mxu0 %v362
      %602 = vmatmul.mubr.bf16.gmra.mxu0 %v361
      %v603 = vpop.f32.mrf.mxu0
      %v604 = vadd.f32 %v247, %v603
      %v605 = vpop.f32.mrf.mxu0
      %v606 = vpop.f32.mrf.mxu0
      %v607 = vadd.f32 %v247, %v606
      %v608 = vpop.f32.mrf.mxu0
      %609 = vmatprep.mubr.bf16.mxu0 %v364
      %610 = vmatmul.mubr.bf16.gmra.mxu0 %v363
      %v611 = vpop.f32.mrf.mxu0
      %v612 = vadd.f32 %v247, %v611
      %v613 = vpop.f32.mrf.mxu0
      %v614 = vpop.f32.mrf.mxu0
      %v615 = vadd.f32 %v247, %v614
      %v616 = vpop.f32.mrf.mxu0
      %617 = vmatprep.mubr.bf16.mxu0 %v366
      %618 = vmatmul.mubr.bf16.gmra.mxu0 %v365
      %v619 = vpop.f32.mrf.mxu0
      %v620 = vadd.f32 %v247, %v619
      %v621 = vpop.f32.mrf.mxu0
      %v622 = vpop.f32.mrf.mxu0
      %v623 = vadd.f32 %v247, %v622
      %v624 = vpop.f32.mrf.mxu0
      %625 = vmatprep.mubr.bf16.mxu0 %v368
      %626 = vmatmul.mubr.bf16.gmra.mxu0 %v367
      %v627 = vpop.f32.mrf.mxu0
      %v628 = vadd.f32 %v247, %v627
      %v629 = vpop.f32.mrf.mxu0
      %v630 = vpop.f32.mrf.mxu0
      %v631 = vadd.f32 %v247, %v630
      %v632 = vpop.f32.mrf.mxu0
      %633 = vmatprep.mubr.bf16.mxu0 %v370
      %634 = vmatmul.mubr.bf16.gmra.mxu0 %v369
      %v635 = vpop.f32.mrf.mxu0
      %v636 = vadd.f32 %v247, %v635
      %v637 = vpop.f32.mrf.mxu0
      %v638 = vpop.f32.mrf.mxu0
      %v639 = vadd.f32 %v247, %v638
      %v640 = vpop.f32.mrf.mxu0
      %641 = vmatprep.mubr.bf16.mxu0 %v372
      %642 = vmatmul.mubr.bf16.gmra.mxu0 %v371
      %v643 = vpop.f32.mrf.mxu0
      %v644 = vadd.f32 %v247, %v643
      %v645 = vpop.f32.mrf.mxu0
      %v646 = vpop.f32.mrf.mxu0
      %v647 = vadd.f32 %v247, %v646
      %v648 = vpop.f32.mrf.mxu0
      %649 = vmatprep.mubr.bf16.mxu0 %v374
      %650 = vmatmul.mubr.bf16.gmra.mxu0 %v373
      %v651 = vpop.f32.mrf.mxu0
      %v652 = vadd.f32 %v247, %v651
      %v653 = vpop.f32.mrf.mxu0
      %v654 = vpop.f32.mrf.mxu0
      %v655 = vadd.f32 %v247, %v654
      %v656 = vpop.f32.mrf.mxu0
      %657 = vmatprep.mubr.bf16.mxu0 %v376
      %658 = vmatmul.mubr.bf16.gmra.mxu0 %v375
      %v659 = vpop.f32.mrf.mxu0
      %v660 = vadd.f32 %v247, %v659
      %v661 = vpop.f32.mrf.mxu0
      %v662 = vpop.f32.mrf.mxu0
      %v663 = vadd.f32 %v247, %v662
      %v664 = vpop.f32.mrf.mxu0
      %665 = vdwg.mxu0
      %v666 = vpack.c.bf16 %v543, %v540
      %v667 = vpack.c.bf16 %v551, %v548
      %v668 = vpack.c.bf16 %v559, %v556
      %v669 = vpack.c.bf16 %v567, %v564
      %v670 = vpack.c.bf16 %v575, %v572
      %v671 = vpack.c.bf16 %v583, %v580
      %v672 = vpack.c.bf16 %v591, %v588
      %v673 = vpack.c.bf16 %v599, %v596
      %v674 = vpack.c.bf16 %v607, %v604
      %v675 = vpack.c.bf16 %v615, %v612
      %v676 = vpack.c.bf16 %v623, %v620
      %v677 = vpack.c.bf16 %v631, %v628
      %v678 = vpack.c.bf16 %v639, %v636
      %v679 = vpack.c.bf16 %v647, %v644
      %v680 = vpack.c.bf16 %v655, %v652
      %v681 = vpack.c.bf16 %v663, %v660
      %v698 = vunpack.c.l.b16 %v666
      %v699 = vunpack.c.h.b16 %v666
      %v700 = vunpack.c.l.b16 %v667
      %v701 = vunpack.c.h.b16 %v667
      %v702 = vunpack.c.l.b16 %v668
      %v703 = vunpack.c.h.b16 %v668
      %v704 = vunpack.c.l.b16 %v669
      %v705 = vunpack.c.h.b16 %v669
      %v706 = vunpack.c.l.b16 %v670
      %v707 = vunpack.c.h.b16 %v670
      %v708 = vunpack.c.l.b16 %v671
      %v709 = vunpack.c.h.b16 %v671
      %v710 = vunpack.c.l.b16 %v672
      %v711 = vunpack.c.h.b16 %v672
      %v712 = vunpack.c.l.b16 %v673
      %v713 = vunpack.c.h.b16 %v673
      %v714 = vunpack.c.l.b16 %v674
      %v715 = vunpack.c.h.b16 %v674
      %v716 = vunpack.c.l.b16 %v675
      %v717 = vunpack.c.h.b16 %v675
      %v718 = vunpack.c.l.b16 %v676
      %v719 = vunpack.c.h.b16 %v676
      %v720 = vunpack.c.l.b16 %v677
      %v721 = vunpack.c.h.b16 %v677
      %v722 = vunpack.c.l.b16 %v678
      %v723 = vunpack.c.h.b16 %v678
      %v724 = vunpack.c.l.b16 %v679
      %v725 = vunpack.c.h.b16 %v679
      %v726 = vunpack.c.l.b16 %v680
      %v727 = vunpack.c.h.b16 %v680
      %v728 = vunpack.c.l.b16 %v681
      %v729 = vunpack.c.h.b16 %v681
      %v730 = vpack.c.b16 %v698, %v698
      %v731 = vpack.c.b16 %v699, %v699
      %v732 = vpack.c.b16 %v700, %v700
      %v733 = vpack.c.b16 %v701, %v701
      %v734 = vpack.c.b16 %v702, %v702
      %v735 = vpack.c.b16 %v703, %v703
      %v736 = vpack.c.b16 %v704, %v704
      %v737 = vpack.c.b16 %v705, %v705
      %v738 = vpack.c.b16 %v706, %v706
      %v739 = vpack.c.b16 %v707, %v707
      %v740 = vpack.c.b16 %v708, %v708
      %v741 = vpack.c.b16 %v709, %v709
      %v742 = vpack.c.b16 %v710, %v710
      %v743 = vpack.c.b16 %v711, %v711
      %v744 = vpack.c.b16 %v712, %v712
      %v745 = vpack.c.b16 %v713, %v713
      %v746 = vpack.c.b16 %v714, %v714
      %v747 = vpack.c.b16 %v715, %v715
      %v748 = vpack.c.b16 %v716, %v716
      %v749 = vpack.c.b16 %v717, %v717
      %v750 = vpack.c.b16 %v718, %v718
      %v751 = vpack.c.b16 %v719, %v719
      %v752 = vpack.c.b16 %v720, %v720
      %v753 = vpack.c.b16 %v721, %v721
      %v754 = vpack.c.b16 %v722, %v722
      %v755 = vpack.c.b16 %v723, %v723
      %v756 = vpack.c.b16 %v724, %v724
      %v757 = vpack.c.b16 %v725, %v725
      %v758 = vpack.c.b16 %v726, %v726
      %v759 = vpack.c.b16 %v727, %v727
      %v760 = vpack.c.b16 %v728, %v728
      %v761 = vpack.c.b16 %v729, %v729
      %vm794 = vcmask 257024
      %795 = vst.msk [vmem:[%s175] sm:$0xf] %vm794, %v730
      %796 = vst.msk [vmem:[%s175 + $0x4] sm:$0xf] %vm794, %v731
      %797 = vst.msk [vmem:[%s175 + $0x8] sm:$0xf] %vm794, %v732
      %798 = vst.msk [vmem:[%s175 + $0xc] sm:$0xf] %vm794, %v733
      %799 = vst.msk [vmem:[%s175 + $0x10] sm:$0xf] %vm794, %v734
      %800 = vst.msk [vmem:[%s175 + $0x14] sm:$0xf] %vm794, %v735
      %801 = vst.msk [vmem:[%s175 + $0x18] sm:$0xf] %vm794, %v736
      %802 = vst.msk [vmem:[%s175 + $0x1c] sm:$0xf] %vm794, %v737
      %803 = vst.msk [vmem:[%s175 + $0x20] sm:$0xf] %vm794, %v738
      %804 = vst.msk [vmem:[%s175 + $0x24] sm:$0xf] %vm794, %v739
      %805 = vst.msk [vmem:[%s175 + $0x28] sm:$0xf] %vm794, %v740
      %806 = vst.msk [vmem:[%s175 + $0x2c] sm:$0xf] %vm794, %v741
      %807 = vst.msk [vmem:[%s175 + $0x30] sm:$0xf] %vm794, %v742
      %808 = vst.msk [vmem:[%s175 + $0x34] sm:$0xf] %vm794, %v743
      %809 = vst.msk [vmem:[%s175 + $0x38] sm:$0xf] %vm794, %v744
      %810 = vst.msk [vmem:[%s175 + $0x3c] sm:$0xf] %vm794, %v745
      %811 = vst.msk [vmem:[%s175 + $0x40] sm:$0xf] %vm794, %v746
      %812 = vst.msk [vmem:[%s175 + $0x44] sm:$0xf] %vm794, %v747
      %813 = vst.msk [vmem:[%s175 + $0x48] sm:$0xf] %vm794, %v748
      %814 = vst.msk [vmem:[%s175 + $0x4c] sm:$0xf] %vm794, %v749
      %815 = vst.msk [vmem:[%s175 + $0x50] sm:$0xf] %vm794, %v750
      %816 = vst.msk [vmem:[%s175 + $0x54] sm:$0xf] %vm794, %v751
      %817 = vst.msk [vmem:[%s175 + $0x58] sm:$0xf] %vm794, %v752
      %818 = vst.msk [vmem:[%s175 + $0x5c] sm:$0xf] %vm794, %v753
      %819 = vst.msk [vmem:[%s175 + $0x60] sm:$0xf] %vm794, %v754
      %820 = vst.msk [vmem:[%s175 + $0x64] sm:$0xf] %vm794, %v755
      %821 = vst.msk [vmem:[%s175 + $0x68] sm:$0xf] %vm794, %v756
      %822 = vst.msk [vmem:[%s175 + $0x6c] sm:$0xf] %vm794, %v757
      %823 = vst.msk [vmem:[%s175 + $0x70] sm:$0xf] %vm794, %v758
      %824 = vst.msk [vmem:[%s175 + $0x74] sm:$0xf] %vm794, %v759
      %825 = vst.msk [vmem:[%s175 + $0x78] sm:$0xf] %vm794, %v760
      %826 = vst.msk [vmem:[%s175 + $0x7c] sm:$0xf] %vm794, %v761
      %s827 = smul.u32 32, %s14
      %p828 = scmp.lt.s32.totalorder %s827, 63
      %s829 = scalar_select %p828, %s827, 63
      %s830 = smul.addr %s829, 4
      %s831 = scalar_lea.vmem %s3, %s830
      // Predicated region
      $region33: #{pam_forward.5} parent=31 // pred_check
        %p832 = pneg %p100
      $region34: #{pam_forward.5} parent=31 // pred_check_branch
        %834 = sbr.rel (%p832) target = $region36
      $region35: #{pam_forward.5} parent=31 // pred_region
        %s835 = smul.u32 32, %s14
      $region36: #{pam_forward.5} parent=31 // pred_fallthru
        _
    $region32: #{pam_forward.5} parent=5 // pred_fallthru
      _
    %p836 = scmp.le.s32.totalorder 2, %s9
    // Predicated region
    $region37: #{pam_forward.5} parent=5 // pred_check
      %p837 = pneg %p836
    $region38: #{pam_forward.5} parent=5 // pred_check_branch
      %839 = sbr.rel (%p837) target = $region40
    $region39: #{pam_forward.5} parent=5 // pred_region
      %s840 = ssub.s32 %s9, 2
      // Predicated region
      $region41: #{pam_forward.5} parent=39 // pred_check
        %p841 = pneg %p106
      $region42: #{pam_forward.5} parent=39 // pred_check_branch
        %843 = sbr.rel (%p841) target = $region44
      $region43: #{pam_forward.5} parent=39 // pred_region
        %s844 = smul.u32 32, %s15
        %p845 = scmp.lt.s32.totalorder %s844, 63
        %s846 = scalar_select %p845, %s844, 63
        %s847 = smul.addr %s846, 4
        %s848 = scalar_lea.vmem %s3, %s847
      $region44: #{pam_forward.5} parent=39 // pred_fallthru
        _
    $region40: #{pam_forward.5} parent=5 // pred_fallthru
      _
  $region6: #{pam_forward.5} parent=0 // loop_footer
    %s13 = sadd.s32 1, %s9
  $region7: #{pam_forward.5} parent=0 // loop_footer_branch
    %8 = sbr.rel target = $region3
  $region8: #{pam_forward.5} parent=0 // loop_exit
    _

// kernel: pam_forward.7
$region0: #{pam_forward.7}
  #allocation0 [shape = 'u32[]', space=smem, size = 0x4, offset = 0x4, fixed_abs, tag = 'smem constant byte address 0x4 - core index']
  #allocation1 [shape = 'u32[144,128]{1,0:T(1,128)}', space=vmem, size = 0x12000, scoped, tag = 'internal scratch']
  #allocation2 [shape = 'f32[128,1]{1,0:T(8,128)}', space=vmem, size = 0x10000, scoped, tag = 'scratch operand']
  #allocation3 [shape = 'f32[128,1]{1,0:T(8,128)}', space=vmem, size = 0x10000, scoped, tag = 'scratch operand']
  #allocation4 [shape = 'f32[128,256]{1,0:T(8,128)}', space=vmem, size = 0x20000, scoped, tag = 'scratch operand']
  %s0 = inlined_call_operand.vmem [shape: bf16[2,256,32], index: 0, kind: input, shape index: {}]
  %s1 = inlined_call_operand.vmem [shape: bf16[2,256,32], index: 1, kind: input, shape index: {}]
  %s2 = inlined_call_operand.vmem [shape: bf16[2,256,256], index: 2, kind: input, shape index: {}]
  %s3 = inlined_call_operand.vmem [shape: f32[2,256,256], index: 3, kind: input, shape index: {}]
  %s4 = inlined_call_operand.hbm [shape: f32[2,256,256], index: 4, kind: output, shape index: {}]
  %s5 = sld [smem:[#allocation0]]
  $region57: #{pam_forward.7} parent=0
    _
  %s7 = ssub.s32 1, %s5
  %s8 = scalar_select 0, %s7, %s5
  $region1: #{pam_forward.7} parent=0
    #allocation5 [shape = 'u8[262144]{0}', space=vmem, size = 0x40000, scoped, tag = 'output window, operand 0']
    #allocation6 [shape = 's32[2]{0}', space=sflag, size = 0x8, scoped, tag = 'scoped memory for pam_forward.7']
    %9 = vsyncpa [#allocation6], 0
    %s10 = scalar_lea.sflag [#allocation6], 1
    %11 = vsyncpa %s10, 0
    loop: start=0, step=1, limit=10
    $region2: #{pam_forward.7} parent=1 // loop_pre_header
      _
    $region3: #{pam_forward.7} parent=1 // loop_header
      %s13 = sphi 0, %s17
      %p14 = scmp.ge.s32.totalorder %s13, 10
      %s20 = sphi 0, %s39
      %s21 = sphi 0, %s35
      %s22 = sphi 0, %s31
      %s23 = sphi 0, %s20
      %s24 = sphi 0, %s21
      %s25 = sphi 0, %s22
      %s26 = sphi 0, %s23
      %s27 = sphi 0, %s24
      %s28 = sphi 0, %s25
      %s44 = sphi 0, %s46
      %s47 = sphi 0, %s44
      %s48 = sphi 0, %s47
      %s64 = sphi 0, %s48
      %s72 = sphi 0, %s74
      %s75 = sphi 0, %s72
      %s76 = sphi 0, %s75
      %s92 = sphi 0, %s76
      %s100 = sphi 0, %s102
      %s103 = sphi 0, %s100
      %s104 = sphi 0, %s103
      %s120 = sphi 0, %s104
      %s128 = sphi 0, %s130
      %s131 = sphi 0, %s128
      %s132 = sphi 0, %s131
      %s148 = sphi 0, %s132
      %s156 = sphi 0, %s158
      %s159 = sphi 0, %s156
      %s160 = sphi 0, %s159
      %s176 = sphi 0, %s160
    $region4: #{pam_forward.7} parent=1 // loop_header_branch
      %16 = sbr.rel (%p14) target = $region8
    $region5: #{pam_forward.7} parent=1 // loop_body
      %s18 = ssub.s32 %s13, 1
      %s19 = ssub.s32 %s13, 2
      %s29 = sadd.s32 1, %s22
      %p30 = scmp.ge.s32.totalorder %s29, 2
      %s31 = scalar_select %p30, 0, %s29
      %s32 = sadd.s32 1, %s21
      %s33 = scalar_select %p30, %s32, %s21
      %p34 = scmp.ge.s32.totalorder %s33, 2
      %s35 = scalar_select %p34, 0, %s33
      %s36 = sadd.s32 1, %s20
      %s37 = scalar_select %p34, %s36, %s20
      %p38 = scmp.ge.s32.totalorder %s37, 2
      %s39 = scalar_select %p38, 0, %s37
      %s40 = ssub.s32 %s20, %s39
      %s41 = ssub.s32 %s21, %s35
      %s42 = sor.u32 %s40, %s41
      %p43 = scmp.eq.s32.totalorder %s42, 0
      %s45 = sadd.s32 %s44, 1
      %s46 = scalar_select %p43, %s44, %s45
      %p49 = pneg %p43
      %p50 = scmp.eq.s32.totalorder %s13, 7
      %p51 = por %p49, %p50
      %p52 = scmp.ne.s32.totalorder %s44, %s47
      %p53 = scmp.eq.s32.totalorder %s13, 0
      %p54 = por %p52, %p53
      %p55 = scmp.ne.s32.totalorder %s44, %s47
      %p56 = scmp.eq.s32.totalorder %s18, 7
      %p57 = por %p55, %p56
      %p58 = scmp.ne.s32.totalorder %s47, %s48
      %p59 = scmp.eq.s32.totalorder %s18, 0
      %p60 = por %p58, %p59
      %p61 = scmp.ne.s32.totalorder %s47, %s48
      %p62 = scmp.eq.s32.totalorder %s19, 7
      %p63 = por %p61, %p62
      %p65 = scmp.ne.s32.totalorder %s48, %s64
      %p66 = scmp.eq.s32.totalorder %s19, 0
      %p67 = por %p65, %p66
      %s68 = ssub.s32 %s20, %s39
      %s69 = ssub.s32 %s22, %s31
      %s70 = sor.u32 %s68, %s69
      %p71 = scmp.eq.s32.totalorder %s70, 0
      %s73 = sadd.s32 %s72, 1
      %s74 = scalar_select %p71, %s72, %s73
      %p77 = pneg %p71
      %p78 = scmp.eq.s32.totalorder %s13, 7
      %p79 = por %p77, %p78
      %p80 = scmp.ne.s32.totalorder %s72, %s75
      %p81 = scmp.eq.s32.totalorder %s13, 0
      %p82 = por %p80, %p81
      %p83 = scmp.ne.s32.totalorder %s72, %s75
      %p84 = scmp.eq.s32.totalorder %s18, 7
      %p85 = por %p83, %p84
      %p86 = scmp.ne.s32.totalorder %s75, %s76
      %p87 = scmp.eq.s32.totalorder %s18, 0
      %p88 = por %p86, %p87
      %p89 = scmp.ne.s32.totalorder %s75, %s76
      %p90 = scmp.eq.s32.totalorder %s19, 7
      %p91 = por %p89, %p90
      %p93 = scmp.ne.s32.totalorder %s76, %s92
      %p94 = scmp.eq.s32.totalorder %s19, 0
      %p95 = por %p93, %p94
      %s96 = ssub.s32 %s20, %s39
      %s97 = ssub.s32 %s22, %s31
      %s98 = sor.u32 %s96, %s97
      %p99 = scmp.eq.s32.totalorder %s98, 0
      %s101 = sadd.s32 %s100, 1
      %s102 = scalar_select %p99, %s100, %s101
      %p105 = pneg %p99
      %p106 = scmp.eq.s32.totalorder %s13, 7
      %p107 = por %p105, %p106
      %p108 = scmp.ne.s32.totalorder %s100, %s103
      %p109 = scmp.eq.s32.totalorder %s13, 0
      %p110 = por %p108, %p109
      %p111 = scmp.ne.s32.totalorder %s100, %s103
      %p112 = scmp.eq.s32.totalorder %s18, 7
      %p113 = por %p111, %p112
      %p114 = scmp.ne.s32.totalorder %s103, %s104
      %p115 = scmp.eq.s32.totalorder %s18, 0
      %p116 = por %p114, %p115
      %p117 = scmp.ne.s32.totalorder %s103, %s104
      %p118 = scmp.eq.s32.totalorder %s19, 7
      %p119 = por %p117, %p118
      %p121 = scmp.ne.s32.totalorder %s104, %s120
      %p122 = scmp.eq.s32.totalorder %s19, 0
      %p123 = por %p121, %p122
      %s124 = ssub.s32 %s20, %s39
      %s125 = ssub.s32 %s21, %s35
      %s126 = sor.u32 %s124, %s125
      %p127 = scmp.eq.s32.totalorder %s126, 0
      %s129 = sadd.s32 %s128, 1
      %s130 = scalar_select %p127, %s128, %s129
      %p133 = pneg %p127
      %p134 = scmp.eq.s32.totalorder %s13, 7
      %p135 = por %p133, %p134
      %p136 = scmp.ne.s32.totalorder %s128, %s131
      %p137 = scmp.eq.s32.totalorder %s13, 0
      %p138 = por %p136, %p137
      %p139 = scmp.ne.s32.totalorder %s128, %s131
      %p140 = scmp.eq.s32.totalorder %s18, 7
      %p141 = por %p139, %p140
      %p142 = scmp.ne.s32.totalorder %s131, %s132
      %p143 = scmp.eq.s32.totalorder %s18, 0
      %p144 = por %p142, %p143
      %p145 = scmp.ne.s32.totalorder %s131, %s132
      %p146 = scmp.eq.s32.totalorder %s19, 7
      %p147 = por %p145, %p146
      %p149 = scmp.ne.s32.totalorder %s132, %s148
      %p150 = scmp.eq.s32.totalorder %s19, 0
      %p151 = por %p149, %p150
      %s152 = ssub.s32 %s20, %s39
      %s153 = ssub.s32 %s21, %s35
      %s154 = sor.u32 %s152, %s153
      %p155 = scmp.eq.s32.totalorder %s154, 0
      %s157 = sadd.s32 %s156, 1
      %s158 = scalar_select %p155, %s156, %s157
      %p161 = pneg %p155
      %p162 = scmp.eq.s32.totalorder %s13, 7
      %p163 = por %p161, %p162
      %p164 = scmp.ne.s32.totalorder %s156, %s159
      %p165 = scmp.eq.s32.totalorder %s13, 0
      %p166 = por %p164, %p165
      %p167 = scmp.ne.s32.totalorder %s156, %s159
      %p168 = scmp.eq.s32.totalorder %s18, 7
      %p169 = por %p167, %p168
      %p170 = scmp.ne.s32.totalorder %s159, %s160
      %p171 = scmp.eq.s32.totalorder %s18, 0
      %p172 = por %p170, %p171
      %p173 = scmp.ne.s32.totalorder %s159, %s160
      %p174 = scmp.eq.s32.totalorder %s19, 7
      %p175 = por %p173, %p174
      %p177 = scmp.ne.s32.totalorder %s160, %s176
      %p178 = scmp.eq.s32.totalorder %s19, 0
      %p179 = por %p177, %p178
      %p180 = scmp.le.s32.totalorder 1, %s13
      %p181 = scmp.lt.s32.totalorder %s13, 9
      %p182 = pnand %p180, %p181
      %p183 = pneg %p182
      // Predicated region
      $region9: #{pam_forward.7} parent=5 // pred_check
        _
      $region10: #{pam_forward.7} parent=5 // pred_check_branch
        %185 = sbr.rel (%p182) target = $region12
      $region11: #{pam_forward.7} parent=5 // pred_region
        %s186 = ssub.s32 %s13, 1
      $region12: #{pam_forward.7} parent=5 // pred_fallthru
        _
      %p187 = scmp.lt.s32.totalorder %s13, 8
      // Predicated region
      $region13: #{pam_forward.7} parent=5 // pred_check
        %p188 = pneg %p187
      $region14: #{pam_forward.7} parent=5 // pred_check_branch
        %190 = sbr.rel (%p188) target = $region16
      $region15: #{pam_forward.7} parent=5 // pred_region
        // Predicated region
        $region17: #{pam_forward.7} parent=15 // pred_check
          %p191 = pneg %p54
        $region18: #{pam_forward.7} parent=15 // pred_check_branch
          %193 = sbr.rel (%p191) target = $region20
        $region19: #{pam_forward.7} parent=15 // pred_region
          %s194 = smul.u32 16, %s21
          %p195 = scmp.lt.s32.totalorder %s20, 1
          %s196 = scalar_select %p195, %s20, 1
          %p197 = scmp.lt.s32.totalorder %s194, 31
          %s198 = scalar_select %p197, %s194, 31
          %s199 = smul.addr %s196, 32
          %s200 = sadd.s32 %s198, %s199
          %s201 = smul.addr %s200, 4
          %s202 = scalar_lea.vmem %s0, %s201
          %s203 = smul.u32 16, %s21
        $region20: #{pam_forward.7} parent=15 // pred_fallthru
          _
        // Predicated region
        $region21: #{pam_forward.7} parent=15 // pred_check
          %p204 = pneg %p82
        $region22: #{pam_forward.7} parent=15 // pred_check_branch
          %206 = sbr.rel (%p204) target = $region24
        $region23: #{pam_forward.7} parent=15 // pred_region
          %s207 = smul.u32 16, %s22
          %p208 = scmp.lt.s32.totalorder %s20, 1
          %s209 = scalar_select %p208, %s20, 1
          %p210 = scmp.lt.s32.totalorder %s207, 31
          %s211 = scalar_select %p210, %s207, 31
          %s212 = smul.addr %s209, 32
          %s213 = sadd.s32 %s211, %s212
          %s214 = smul.addr %s213, 4
          %s215 = scalar_lea.vmem %s1, %s214
          %s216 = smul.u32 16, %s22
        $region24: #{pam_forward.7} parent=15 // pred_fallthru
          _
        // Predicated region
        $region25: #{pam_forward.7} parent=15 // pred_check
          %p217 = pneg %p110
        $region26: #{pam_forward.7} parent=15 // pred_check_branch
          %219 = sbr.rel (%p217) target = $region28
        $region27: #{pam_forward.7} parent=15 // pred_region
          %s220 = smul.u32 16, %s22
          %p221 = scmp.lt.s32.totalorder %s20, 1
          %s222 = scalar_select %p221, %s20, 1
          %p223 = scmp.lt.s32.totalorder %s220, 31
          %s224 = scalar_select %p223, %s220, 31
          %s225 = smul.addr %s224, 2
          %s226 = smul.addr %s222, 64
          %s227 = sadd.s32 %s225, %s226
          %s228 = smul.addr %s227, 4
          %s229 = scalar_lea.vmem %s2, %s228
          %s230 = smul.u32 16, %s22
        $region28: #{pam_forward.7} parent=15 // pred_fallthru
          _
        // Predicated region
        $region29: #{pam_forward.7} parent=15 // pred_check
          %p231 = pneg %p138
        $region30: #{pam_forward.7} parent=15 // pred_check_branch
          %233 = sbr.rel (%p231) target = $region32
        $region31: #{pam_forward.7} parent=15 // pred_region
          %s234 = smul.u32 16, %s21
          %p235 = scmp.lt.s32.totalorder %s20, 1
          %s236 = scalar_select %p235, %s20, 1
          %p237 = scmp.lt.s32.totalorder %s234, 31
          %s238 = scalar_select %p237, %s234, 31
          %s239 = smul.addr %s238, 2
          %s240 = smul.addr %s236, 64
          %s241 = sadd.s32 %s239, %s240
          %s242 = smul.addr %s241, 8
          %s243 = scalar_lea.vmem %s3, %s242
          %s244 = smul.u32 16, %s21
        $region32: #{pam_forward.7} parent=15 // pred_fallthru
          _
      $region16: #{pam_forward.7} parent=5 // pred_fallthru
        _
      %p245 = scmp.le.s32.totalorder 1, %s13
      %p246 = scmp.lt.s32.totalorder %s13, 9
      %p247 = pnand %p245, %p246
      %p248 = pneg %p247
      // Predicated region
      $region33: #{pam_forward.7} parent=5 // pred_check
        _
      $region34: #{pam_forward.7} parent=5 // pred_check_branch
        %250 = sbr.rel (%p247) target = $region36
      $region35: #{pam_forward.7} parent=5 // pred_region
        %s251 = ssub.s32 %s13, 1
        %s252 = smul.u32 16, %s24
        %p253 = scmp.lt.s32.totalorder %s23, 1
        %s254 = scalar_select %p253, %s23, 1
        %p255 = scmp.lt.s32.totalorder %s252, 31
        %s256 = scalar_select %p255, %s252, 31
        %s257 = smul.addr %s254, 32
        %s258 = sadd.s32 %s256, %s257
        %s259 = smul.addr %s258, 4
        %s260 = scalar_lea.vmem %s0, %s259
        %p261 = pneg %p60
        %p262 = pneg %p57
        %s263 = smul.u32 16, %s25
        %p264 = scmp.lt.s32.totalorder %s23, 1
        %s265 = scalar_select %p264, %s23, 1
        %p266 = scmp.lt.s32.totalorder %s263, 31
        %s267 = scalar_select %p266, %s263, 31
        %s268 = smul.addr %s265, 32
        %s269 = sadd.s32 %s267, %s268
        %s270 = smul.addr %s269, 4
        %s271 = scalar_lea.vmem %s1, %s270
        %p272 = pneg %p88
        %p273 = pneg %p85
        %s274 = smul.u32 16, %s25
        %p275 = scmp.lt.s32.totalorder %s23, 1
        %s276 = scalar_select %p275, %s23, 1
        %p277 = scmp.lt.s32.totalorder %s274, 31
        %s278 = scalar_select %p277, %s274, 31
        %s279 = smul.addr %s278, 2
        %s280 = smul.addr %s276, 64
        %s281 = sadd.s32 %s279, %s280
        %s282 = smul.addr %s281, 4
        %s283 = scalar_lea.vmem %s2, %s282
        %p284 = pneg %p116
        %p285 = pneg %p113
        %s286 = smul.u32 16, %s24
        %p287 = scmp.lt.s32.totalorder %s23, 1
        %s288 = scalar_select %p287, %s23, 1
        %p289 = scmp.lt.s32.totalorder %s286, 31
        %s290 = scalar_select %p289, %s286, 31
        %s291 = smul.addr %s290, 2
        %s292 = smul.addr %s288, 64
        %s293 = sadd.s32 %s291, %s292
        %s294 = smul.addr %s293, 8
        %s295 = scalar_lea.vmem %s3, %s294
        %p296 = pneg %p144
        %p297 = pneg %p141
        %p298 = pneg %p172
        %p299 = pneg %p169
        %s300 = sand.u32 %s159, 1
        %s301 = scalar_lea.sflag [#allocation6], %s300
        %s302 = sand.u32 %s159, 1
        %s303 = smul.addr %s302, 256
        %s304 = scalar_lea.vmem [#allocation5], %s303
        %s305 = smul.u32 16, %s24
        %p306 = scmp.lt.s32.totalorder %s23, 1
        %s307 = scalar_select %p306, %s23, 1
        %p308 = scmp.lt.s32.totalorder %s305, 31
        %s309 = scalar_select %p308, %s305, 31
        %s310 = smul.addr %s307, 32
        %s311 = sadd.s32 %s309, %s310
        %s312 = smul.addr %s311, 4
        %s313 = scalar_lea.vmem %s0, %s312
        %s314 = smul.u32 16, %s24
        %s315 = smul.u32 16, %s25
        %p316 = scmp.lt.s32.totalorder %s23, 1
        %s317 = scalar_select %p316, %s23, 1
        %p318 = scmp.lt.s32.totalorder %s315, 31
        %s319 = scalar_select %p318, %s315, 31
        %s320 = smul.addr %s317, 32
        %s321 = sadd.s32 %s319, %s320
        %s322 = smul.addr %s321, 4
        %s323 = scalar_lea.vmem %s1, %s322
        %s324 = smul.u32 16, %s25
        %s325 = smul.u32 16, %s25
        %p326 = scmp.lt.s32.totalorder %s23, 1
        %s327 = scalar_select %p326, %s23, 1
        %p328 = scmp.lt.s32.totalorder %s325, 31
        %s329 = scalar_select %p328, %s325, 31
        %s330 = smul.addr %s329, 2
        %s331 = smul.addr %s327, 64
        %s332 = sadd.s32 %s330, %s331
        %s333 = smul.addr %s332, 4
        %s334 = scalar_lea.vmem %s2, %s333
        %s335 = smul.u32 16, %s25
        %s336 = smul.u32 16, %s24
        %p337 = scmp.lt.s32.totalorder %s23, 1
        %s338 = scalar_select %p337, %s23, 1
        %p339 = scmp.lt.s32.totalorder %s336, 31
        %s340 = scalar_select %p339, %s336, 31
        %s341 = smul.addr %s340, 2
        %s342 = smul.addr %s338, 64
        %s343 = sadd.s32 %s341, %s342
        %s344 = smul.addr %s343, 8
        %s345 = scalar_lea.vmem %s3, %s344
        %s346 = smul.u32 16, %s24
        %s347 = smul.u32 16, %s24
        %p349 = scmp.eq.s32.totalorder %s25, 0
        // Predicated region
        $region37: #{pam_forward.7} parent=35 // pred_check
          %p350 = pneg %p349
        $region38: #{pam_forward.7} parent=35 // pred_check_branch
          %352 = sbr.rel (%p350) target = $region40
        $region39: #{pam_forward.7} parent=35 // pred_region
          %vm353 = vcmask 7168
          %354 = vst.msk [vmem:[#allocation2] sm:$0xff] %vm353, -inf
          %355 = vst.msk [vmem:[#allocation2 + $0x8] sm:$0xff] %vm353, -inf
          %356 = vst.msk [vmem:[#allocation2 + $0x10] sm:$0xff] %vm353, -inf
          %357 = vst.msk [vmem:[#allocation2 + $0x18] sm:$0xff] %vm353, -inf
          %358 = vst.msk [vmem:[#allocation2 + $0x20] sm:$0xff] %vm353, -inf
          %359 = vst.msk [vmem:[#allocation2 + $0x28] sm:$0xff] %vm353, -inf
          %360 = vst.msk [vmem:[#allocation2 + $0x30] sm:$0xff] %vm353, -inf
          %361 = vst.msk [vmem:[#allocation2 + $0x38] sm:$0xff] %vm353, -inf
          %362 = vst.msk [vmem:[#allocation2 + $0x40] sm:$0xff] %vm353, -inf
          %363 = vst.msk [vmem:[#allocation2 + $0x48] sm:$0xff] %vm353, -inf
          %364 = vst.msk [vmem:[#allocation2 + $0x50] sm:$0xff] %vm353, -inf
          %365 = vst.msk [vmem:[#allocation2 + $0x58] sm:$0xff] %vm353, -inf
          %366 = vst.msk [vmem:[#allocation2 + $0x60] sm:$0xff] %vm353, -inf
          %367 = vst.msk [vmem:[#allocation2 + $0x68] sm:$0xff] %vm353, -inf
          %368 = vst.msk [vmem:[#allocation2 + $0x70] sm:$0xff] %vm353, -inf
          %369 = vst.msk [vmem:[#allocation2 + $0x78] sm:$0xff] %vm353, -inf
          %370 = vst.msk [vmem:[#allocation3] sm:$0xff] %vm353, 0.0
          %371 = vst.msk [vmem:[#allocation3 + $0x8] sm:$0xff] %vm353, 0.0
          %372 = vst.msk [vmem:[#allocation3 + $0x10] sm:$0xff] %vm353, 0.0
          %373 = vst.msk [vmem:[#allocation3 + $0x18] sm:$0xff] %vm353, 0.0
          %374 = vst.msk [vmem:[#allocation3 + $0x20] sm:$0xff] %vm353, 0.0
          %375 = vst.msk [vmem:[#allocation3 + $0x28] sm:$0xff] %vm353, 0.0
          %376 = vst.msk [vmem:[#allocation3 + $0x30] sm:$0xff] %vm353, 0.0
          %377 = vst.msk [vmem:[#allocation3 + $0x38] sm:$0xff] %vm353, 0.0
          %378 = vst.msk [vmem:[#allocation3 + $0x40] sm:$0xff] %vm353, 0.0
          %379 = vst.msk [vmem:[#allocation3 + $0x48] sm:$0xff] %vm353, 0.0
          %380 = vst.msk [vmem:[#allocation3 + $0x50] sm:$0xff] %vm353, 0.0
          %381 = vst.msk [vmem:[#allocation3 + $0x58] sm:$0xff] %vm353, 0.0
          %382 = vst.msk [vmem:[#allocation3 + $0x60] sm:$0xff] %vm353, 0.0
          %383 = vst.msk [vmem:[#allocation3 + $0x68] sm:$0xff] %vm353, 0.0
          %384 = vst.msk [vmem:[#allocation3 + $0x70] sm:$0xff] %vm353, 0.0
          %385 = vst.msk [vmem:[#allocation3 + $0x78] sm:$0xff] %vm353, 0.0
          %386 = vst [vmem:[#allocation4] sm:$0xff] 0.0
          %387 = vst [vmem:[#allocation4 + $0x8] sm:$0xff] 0.0
          %388 = vst [vmem:[#allocation4 + $0x10] sm:$0xff] 0.0
          %389 = vst [vmem:[#allocation4 + $0x18] sm:$0xff] 0.0
          %390 = vst [vmem:[#allocation4 + $0x20] sm:$0xff] 0.0
          %391 = vst [vmem:[#allocation4 + $0x28] sm:$0xff] 0.0
          %392 = vst [vmem:[#allocation4 + $0x30] sm:$0xff] 0.0
          %393 = vst [vmem:[#allocation4 + $0x38] sm:$0xff] 0.0
          %394 = vst [vmem:[#allocation4 + $0x40] sm:$0xff] 0.0
          %395 = vst [vmem:[#allocation4 + $0x48] sm:$0xff] 0.0
          %396 = vst [vmem:[#allocation4 + $0x50] sm:$0xff] 0.0
          %397 = vst [vmem:[#allocation4 + $0x58] sm:$0xff] 0.0
          %398 = vst [vmem:[#allocation4 + $0x60] sm:$0xff] 0.0
          %399 = vst [vmem:[#allocation4 + $0x68] sm:$0xff] 0.0
          %400 = vst [vmem:[#allocation4 + $0x70] sm:$0xff] 0.0
          %401 = vst [vmem:[#allocation4 + $0x78] sm:$0xff] 0.0
          %402 = vst [vmem:[#allocation4 + $0x80] sm:$0xff] 0.0
          %403 = vst [vmem:[#allocation4 + $0x88] sm:$0xff] 0.0
          %404 = vst [vmem:[#allocation4 + $0x90] sm:$0xff] 0.0
          %405 = vst [vmem:[#allocation4 + $0x98] sm:$0xff] 0.0
          %406 = vst [vmem:[#allocation4 + $0xa0] sm:$0xff] 0.0
          %407 = vst [vmem:[#allocation4 + $0xa8] sm:$0xff] 0.0
          %408 = vst [vmem:[#allocation4 + $0xb0] sm:$0xff] 0.0
          %409 = vst [vmem:[#allocation4 + $0xb8] sm:$0xff] 0.0
          %410 = vst [vmem:[#allocation4 + $0xc0] sm:$0xff] 0.0
          %411 = vst [vmem:[#allocation4 + $0xc8] sm:$0xff] 0.0
          %412 = vst [vmem:[#allocation4 + $0xd0] sm:$0xff] 0.0
          %413 = vst [vmem:[#allocation4 + $0xd8] sm:$0xff] 0.0
          %414 = vst [vmem:[#allocation4 + $0xe0] sm:$0xff] 0.0
          %415 = vst [vmem:[#allocation4 + $0xe8] sm:$0xff] 0.0
          %416 = vst [vmem:[#allocation4 + $0xf0] sm:$0xff] 0.0
          %417 = vst [vmem:[#allocation4 + $0xf8] sm:$0xff] 0.0
        $region40: #{pam_forward.7} parent=35 // pred_fallthru
          _
        %v418 = vld [vmem:[%s313] sm:$0xf]
        %v419 = vld [vmem:[%s313 + $0x4] sm:$0xf]
        %v420 = vld [vmem:[%s313 + $0x8] sm:$0xf]
        %v421 = vld [vmem:[%s313 + $0xc] sm:$0xf]
        %v422 = vld [vmem:[%s313 + $0x10] sm:$0xf]
        %v423 = vld [vmem:[%s313 + $0x14] sm:$0xf]
        %v424 = vld [vmem:[%s313 + $0x18] sm:$0xf]
        %v425 = vld [vmem:[%s313 + $0x1c] sm:$0xf]
        %v426 = vld [vmem:[%s313 + $0x20] sm:$0xf]
        %v427 = vld [vmem:[%s313 + $0x24] sm:$0xf]
        %v428 = vld [vmem:[%s313 + $0x28] sm:$0xf]
        %v429 = vld [vmem:[%s313 + $0x2c] sm:$0xf]
        %v430 = vld [vmem:[%s313 + $0x30] sm:$0xf]
        %v431 = vld [vmem:[%s313 + $0x34] sm:$0xf]
        %v432 = vld [vmem:[%s313 + $0x38] sm:$0xf]
        %v433 = vld [vmem:[%s313 + $0x3c] sm:$0xf]
        %v434 = vld [vmem:[%s323] sm:$0xf]
        %v435 = vld [vmem:[%s323 + $0x4] sm:$0xf]
        %v436 = vld [vmem:[%s323 + $0x8] sm:$0xf]
        %v437 = vld [vmem:[%s323 + $0xc] sm:$0xf]
        %v438 = vld [vmem:[%s323 + $0x10] sm:$0xf]
        %v439 = vld [vmem:[%s323 + $0x14] sm:$0xf]
        %v440 = vld [vmem:[%s323 + $0x18] sm:$0xf]
        %v441 = vld [vmem:[%s323 + $0x1c] sm:$0xf]
        %v442 = vld [vmem:[%s323 + $0x20] sm:$0xf]
        %v443 = vld [vmem:[%s323 + $0x24] sm:$0xf]
        %v444 = vld [vmem:[%s323 + $0x28] sm:$0xf]
        %v445 = vld [vmem:[%s323 + $0x2c] sm:$0xf]
        %v446 = vld [vmem:[%s323 + $0x30] sm:$0xf]
        %v447 = vld [vmem:[%s323 + $0x34] sm:$0xf]
        %v448 = vld [vmem:[%s323 + $0x38] sm:$0xf]
        %v449 = vld [vmem:[%s323 + $0x3c] sm:$0xf]
        %v466 = vunpack.c.l.b16 %v418
        %v467 = vunpack.c.l.b16 %v419
        %v468 = vunpack.c.l.b16 %v420
        %v469 = vunpack.c.l.b16 %v421
        %v470 = vunpack.c.l.b16 %v422
        %v471 = vunpack.c.l.b16 %v423
        %v472 = vunpack.c.l.b16 %v424
        %v473 = vunpack.c.l.b16 %v425
        %v474 = vunpack.c.l.b16 %v426
        %v475 = vunpack.c.l.b16 %v427
        %v476 = vunpack.c.l.b16 %v428
        %v477 = vunpack.c.l.b16 %v429
        %v478 = vunpack.c.l.b16 %v430
        %v479 = vunpack.c.l.b16 %v431
        %v480 = vunpack.c.l.b16 %v432
        %v481 = vunpack.c.l.b16 %v433
        %v482 = vpack.c.b16 %v467, %v466
        %v483 = vpack.c.b16 %v469, %v468
        %v484 = vpack.c.b16 %v471, %v470
        %v485 = vpack.c.b16 %v473, %v472
        %v486 = vpack.c.b16 %v475, %v474
        %v487 = vpack.c.b16 %v477, %v476
        %v488 = vpack.c.b16 %v479, %v478
        %v489 = vpack.c.b16 %v481, %v480
        %v506 = vunpack.c.l.b16 %v434
        %v507 = vunpack.c.l.b16 %v435
        %v508 = vunpack.c.l.b16 %v436
        %v509 = vunpack.c.l.b16 %v437
        %v510 = vunpack.c.l.b16 %v438
        %v511 = vunpack.c.l.b16 %v439
        %v512 = vunpack.c.l.b16 %v440
        %v513 = vunpack.c.l.b16 %v441
        %v514 = vunpack.c.l.b16 %v442
        %v515 = vunpack.c.l.b16 %v443
        %v516 = vunpack.c.l.b16 %v444
        %v517 = vunpack.c.l.b16 %v445
        %v518 = vunpack.c.l.b16 %v446
        %v519 = vunpack.c.l.b16 %v447
        %v520 = vunpack.c.l.b16 %v448
        %v521 = vunpack.c.l.b16 %v449
        %v522 = vpack.c.b16 %v507, %v506
        %v523 = vpack.c.b16 %v509, %v508
        %v524 = vpack.c.b16 %v511, %v510
        %v525 = vpack.c.b16 %v513, %v512
        %v526 = vpack.c.b16 %v515, %v514
        %v527 = vpack.c.b16 %v517, %v516
        %v528 = vpack.c.b16 %v519, %v518
        %v529 = vpack.c.b16 %v521, %v520
        %vm530 = vcmask 261120
        %v532 = vsel %vm530, %v482, 0
        %v535 = vsel %vm530, %v483, 0
        %v538 = vsel %vm530, %v484, 0
        %v541 = vsel %vm530, %v485, 0
        %v544 = vsel %vm530, %v486, 0
        %v547 = vsel %vm530, %v487, 0
        %v550 = vsel %vm530, %v488, 0
        %v553 = vsel %vm530, %v489, 0
        %v556 = vsel %vm530, %v522, 0
        %v559 = vsel %vm530, %v523, 0
        %v562 = vsel %vm530, %v524, 0
        %v565 = vsel %vm530, %v525, 0
        %v568 = vsel %vm530, %v526, 0
        %v571 = vsel %vm530, %v527, 0
        %v574 = vsel %vm530, %v528, 0
        %v577 = vsel %vm530, %v529, 0
        %579 = vmatprep.subr.bf16.mxu0 0
        %580 = vmatpush1.bf16.xpose.msra.mxu0 %v577
        %581 = vmatprep.subr.bf16.mxu0 0
        %582 = vmatpush1.bf16.xpose.msra.mxu0 %v574
        %583 = vmatprep.subr.bf16.mxu0 0
        %584 = vmatpush1.bf16.xpose.msra.mxu0 %v571
        %585 = vmatprep.subr.bf16.mxu0 0
        %586 = vmatpush1.bf16.xpose.msra.mxu0 %v568
        %587 = vmatprep.subr.bf16.mxu0 0
        %588 = vmatpush1.bf16.xpose.msra.mxu0 %v565
        %589 = vmatprep.subr.bf16.mxu0 0
        %590 = vmatpush1.bf16.xpose.msra.mxu0 %v562
        %591 = vmatprep.subr.bf16.mxu0 0
        %592 = vmatpush1.bf16.xpose.msra.mxu0 %v559
        %593 = vmatprep.subr.bf16.mxu0 0
        %594 = vmatpush1.bf16.xpose.msra.mxu0 %v556
        %595 = vmatprep.subr.bf16.mxu0 0
        %596 = vmatpush2.bf16.xpose.msra.mxu0 0
        %597 = vmatprep.subr.bf16.mxu0 0
        %598 = vmatpush2.bf16.xpose.msra.mxu0 0
        %599 = vmatprep.subr.bf16.mxu0 0
        %600 = vmatpush2.bf16.xpose.msra.mxu0 0
        %601 = vmatprep.subr.bf16.mxu0 0
        %602 = vmatpush2.bf16.xpose.msra.mxu0 0
        %603 = vmatprep.subr.bf16.mxu0 0
        %604 = vmatpush2.bf16.xpose.msra.mxu0 0
        %605 = vmatprep.subr.bf16.mxu0 0
        %606 = vmatpush2.bf16.xpose.msra.mxu0 0
        %607 = vmatprep.subr.bf16.mxu0 0
        %608 = vmatpush2.bf16.xpose.msra.mxu0 0
        %609 = vmatprep.subr.bf16.mxu0 0
        %610 = vmatpush2.bf16.xpose.msra.mxu0 0
        %611 = vmatprep.mubr.bf16.mxu0 0
        %612 = vmatmul.mubr.bf16.gmra.mxu0 %v532
        %v613 = vpop.f32.mrf.mxu0
        %v614 = vadd.f32 0.0, %v613
        %v615 = vpop.f32.mrf.mxu0
        %v616 = vpop.f32.mrf.mxu0
        %v617 = vadd.f32 0.0, %v616
        %v618 = vpop.f32.mrf.mxu0
        %619 = vmatprep.mubr.bf16.mxu0 0
        %620 = vmatmul.mubr.bf16.gmra.mxu0 %v535
        %v621 = vpop.f32.mrf.mxu0
        %v622 = vadd.f32 0.0, %v621
        %v623 = vpop.f32.mrf.mxu0
        %v624 = vpop.f32.mrf.mxu0
        %v625 = vadd.f32 0.0, %v624
        %v626 = vpop.f32.mrf.mxu0
        %627 = vmatprep.mubr.bf16.mxu0 0
        %628 = vmatmul.mubr.bf16.gmra.mxu0 %v538
        %v629 = vpop.f32.mrf.mxu0
        %v630 = vadd.f32 0.0, %v629
        %v631 = vpop.f32.mrf.mxu0
        %v632 = vpop.f32.mrf.mxu0
        %v633 = vadd.f32 0.0, %v632
        %v634 = vpop.f32.mrf.mxu0
        %635 = vmatprep.mubr.bf16.mxu0 0
        %636 = vmatmul.mubr.bf16.gmra.mxu0 %v541
        %v637 = vpop.f32.mrf.mxu0
        %v638 = vadd.f32 0.0, %v637
        %v639 = vpop.f32.mrf.mxu0
        %v640 = vpop.f32.mrf.mxu0
        %v641 = vadd.f32 0.0, %v640
        %v642 = vpop.f32.mrf.mxu0
        %643 = vmatprep.mubr.bf16.mxu0 0
        %644 = vmatmul.mubr.bf16.gmra.mxu0 %v544
        %v645 = vpop.f32.mrf.mxu0
        %v646 = vadd.f32 0.0, %v645
        %v647 = vpop.f32.mrf.mxu0
        %v648 = vpop.f32.mrf.mxu0
        %v649 = vadd.f32 0.0, %v648
        %v650 = vpop.f32.mrf.mxu0
        %651 = vmatprep.mubr.bf16.mxu0 0
        %652 = vmatmul.mubr.bf16.gmra.mxu0 %v547
        %v653 = vpop.f32.mrf.mxu0
        %v654 = vadd.f32 0.0, %v653
        %v655 = vpop.f32.mrf.mxu0
        %v656 = vpop.f32.mrf.mxu0
        %v657 = vadd.f32 0.0, %v656
        %v658 = vpop.f32.mrf.mxu0
        %659 = vmatprep.mubr.bf16.mxu0 0
        %660 = vmatmul.mubr.bf16.gmra.mxu0 %v550
        %v661 = vpop.f32.mrf.mxu0
        %v662 = vadd.f32 0.0, %v661
        %v663 = vpop.f32.mrf.mxu0
        %v664 = vpop.f32.mrf.mxu0
        %v665 = vadd.f32 0.0, %v664
        %v666 = vpop.f32.mrf.mxu0
        %667 = vmatprep.mubr.bf16.mxu0 0
        %668 = vmatmul.mubr.bf16.gmra.mxu0 %v553
        %v669 = vpop.f32.mrf.mxu0
        %v670 = vadd.f32 0.0, %v669
        %v671 = vpop.f32.mrf.mxu0
        %v672 = vpop.f32.mrf.mxu0
        %v673 = vadd.f32 0.0, %v672
        %v674 = vpop.f32.mrf.mxu0
        %675 = vdwg.mxu0
        %v676 = vld [vmem:[#allocation2] sm:$0xff]
        %v677 = vld [vmem:[#allocation2 + $0x8] sm:$0xff]
        %v678 = vld [vmem:[#allocation2 + $0x10] sm:$0xff]
        %v679 = vld [vmem:[#allocation2 + $0x18] sm:$0xff]
        %v680 = vld [vmem:[#allocation2 + $0x20] sm:$0xff]
        %v681 = vld [vmem:[#allocation2 + $0x28] sm:$0xff]
        %v682 = vld [vmem:[#allocation2 + $0x30] sm:$0xff]
        %v683 = vld [vmem:[#allocation2 + $0x38] sm:$0xff]
        %v684 = vld [vmem:[#allocation2 + $0x40] sm:$0xff]
        %v685 = vld [vmem:[#allocation2 + $0x48] sm:$0xff]
        %v686 = vld [vmem:[#allocation2 + $0x50] sm:$0xff]
        %v687 = vld [vmem:[#allocation2 + $0x58] sm:$0xff]
        %v688 = vld [vmem:[#allocation2 + $0x60] sm:$0xff]
        %v689 = vld [vmem:[#allocation2 + $0x68] sm:$0xff]
        %v690 = vld [vmem:[#allocation2 + $0x70] sm:$0xff]
        %v691 = vld [vmem:[#allocation2 + $0x78] sm:$0xff]
        %692 = vmax.xlane.f32.xlu0 %v614
        %v693 = vpop.xlane.xlu0 %692
        %694 = vmax.xlane.f32.xlu0 %v617
        %v695 = vpop.xlane.xlu0 %694
        %696 = vmax.xlane.f32.xlu0 %v622
        %v697 = vpop.xlane.xlu0 %696
        %698 = vmax.xlane.f32.xlu0 %v625
        %v699 = vpop.xlane.xlu0 %698
        %700 = vmax.xlane.f32.xlu0 %v630
        %v701 = vpop.xlane.xlu0 %700
        %702 = vmax.xlane.f32.xlu0 %v633
        %v703 = vpop.xlane.xlu0 %702
        %704 = vmax.xlane.f32.xlu0 %v638
        %v705 = vpop.xlane.xlu0 %704
        %706 = vmax.xlane.f32.xlu0 %v641
        %v707 = vpop.xlane.xlu0 %706
        %708 = vmax.xlane.f32.xlu0 %v646
        %v709 = vpop.xlane.xlu0 %708
        %710 = vmax.xlane.f32.xlu0 %v649
        %v711 = vpop.xlane.xlu0 %710
        %712 = vmax.xlane.f32.xlu0 %v654
        %v713 = vpop.xlane.xlu0 %712
        %714 = vmax.xlane.f32.xlu0 %v657
        %v715 = vpop.xlane.xlu0 %714
        %716 = vmax.xlane.f32.xlu0 %v662
        %v717 = vpop.xlane.xlu0 %716
        %718 = vmax.xlane.f32.xlu0 %v665
        %v719 = vpop.xlane.xlu0 %718
        %720 = vmax.xlane.f32.xlu0 %v670
        %v721 = vpop.xlane.xlu0 %720
        %722 = vmax.xlane.f32.xlu0 %v673
        %v723 = vpop.xlane.xlu0 %722
        %v724 = vmax.f32 %v676, %v693
        %v725 = vmax.f32 %v677, %v695
        %v726 = vmax.f32 %v678, %v697
        %v727 = vmax.f32 %v679, %v699
        %v728 = vmax.f32 %v680, %v701
        %v729 = vmax.f32 %v681, %v703
        %v730 = vmax.f32 %v682, %v705
        %v731 = vmax.f32 %v683, %v707
        %v732 = vmax.f32 %v684, %v709
        %v733 = vmax.f32 %v685, %v711
        %v734 = vmax.f32 %v686, %v713
        %v735 = vmax.f32 %v687, %v715
        %v736 = vmax.f32 %v688, %v717
        %v737 = vmax.f32 %v689, %v719
        %v738 = vmax.f32 %v690, %v721
        %v739 = vmax.f32 %v691, %v723
        %v740 = vsub.f32 %v676, %v724
        %v741 = vsub.f32 %v677, %v725
        %v742 = vsub.f32 %v678, %v726
        %v743 = vsub.f32 %v679, %v727
        %v744 = vsub.f32 %v680, %v728
        %v745 = vsub.f32 %v681, %v729
        %v746 = vsub.f32 %v682, %v730
        %v747 = vsub.f32 %v683, %v731
        %v748 = vsub.f32 %v684, %v732
        %v749 = vsub.f32 %v685, %v733
        %v750 = vsub.f32 %v686, %v734
        %v751 = vsub.f32 %v687, %v735
        %v752 = vsub.f32 %v688, %v736
        %v753 = vsub.f32 %v689, %v737
        %v754 = vsub.f32 %v690, %v738
        %v755 = vsub.f32 %v691, %v739
        %v756 = vmul.f32 %v740, 1.442695
        %v757 = vpow.pop %v756
        %v758 = vmul.f32 %v741, 1.442695
        %v759 = vpow.pop %v758
        %v760 = vmul.f32 %v742, 1.442695
        %v761 = vpow.pop %v760
        %v762 = vmul.f32 %v743, 1.442695
        %v763 = vpow.pop %v762
        %v764 = vmul.f32 %v744, 1.442695
        %v765 = vpow.pop %v764
        %v766 = vmul.f32 %v745, 1.442695
        %v767 = vpow.pop %v766
        %v768 = vmul.f32 %v746, 1.442695
        %v769 = vpow.pop %v768
        %v770 = vmul.f32 %v747, 1.442695
        %v771 = vpow.pop %v770
        %v772 = vmul.f32 %v748, 1.442695
        %v773 = vpow.pop %v772
        %v774 = vmul.f32 %v749, 1.442695
        %v775 = vpow.pop %v774
        %v776 = vmul.f32 %v750, 1.442695
        %v777 = vpow.pop %v776
        %v778 = vmul.f32 %v751, 1.442695
        %v779 = vpow.pop %v778
        %v780 = vmul.f32 %v752, 1.442695
        %v781 = vpow.pop %v780
        %v782 = vmul.f32 %v753, 1.442695
        %v783 = vpow.pop %v782
        %v784 = vmul.f32 %v754, 1.442695
        %v785 = vpow.pop %v784
        %v786 = vmul.f32 %v755, 1.442695
        %v787 = vpow.pop %v786
        %789 = vset.pattern.permute.xlu0 0
        %790 = vperm.xlu0 %789, %v724
        %v791 = vpop.permute.xlu0 %790
        %794 = vset.pattern.permute.xlu0 0
        %795 = vperm.xlu0 %794, %v725
        %v796 = vpop.permute.xlu0 %795
        %799 = vset.pattern.permute.xlu0 0
        %800 = vperm.xlu0 %799, %v726
        %v801 = vpop.permute.xlu0 %800
        %804 = vset.pattern.permute.xlu0 0
        %805 = vperm.xlu0 %804, %v727
        %v806 = vpop.permute.xlu0 %805
        %809 = vset.pattern.permute.xlu0 0
        %810 = vperm.xlu0 %809, %v728
        %v811 = vpop.permute.xlu0 %810
        %814 = vset.pattern.permute.xlu0 0
        %815 = vperm.xlu0 %814, %v729
        %v816 = vpop.permute.xlu0 %815
        %819 = vset.pattern.permute.xlu0 0
        %820 = vperm.xlu0 %819, %v730
        %v821 = vpop.permute.xlu0 %820
        %824 = vset.pattern.permute.xlu0 0
        %825 = vperm.xlu0 %824, %v731
        %v826 = vpop.permute.xlu0 %825
        %829 = vset.pattern.permute.xlu0 0
        %830 = vperm.xlu0 %829, %v732
        %v831 = vpop.permute.xlu0 %830
        %834 = vset.pattern.permute.xlu0 0
        %835 = vperm.xlu0 %834, %v733
        %v836 = vpop.permute.xlu0 %835
        %839 = vset.pattern.permute.xlu0 0
        %840 = vperm.xlu0 %839, %v734
        %v841 = vpop.permute.xlu0 %840
        %844 = vset.pattern.permute.xlu0 0
        %845 = vperm.xlu0 %844, %v735
        %v846 = vpop.permute.xlu0 %845
        %849 = vset.pattern.permute.xlu0 0
        %850 = vperm.xlu0 %849, %v736
        %v851 = vpop.permute.xlu0 %850
        %854 = vset.pattern.permute.xlu0 0
        %855 = vperm.xlu0 %854, %v737
        %v856 = vpop.permute.xlu0 %855
        %859 = vset.pattern.permute.xlu0 0
        %860 = vperm.xlu0 %859, %v738
        %v861 = vpop.permute.xlu0 %860
        %864 = vset.pattern.permute.xlu0 0
        %865 = vperm.xlu0 %864, %v739
        %v866 = vpop.permute.xlu0 %865
        %v868 = vsub.f32 %v614, %v791
        %v869 = vsub.f32 %v617, %v796
        %v870 = vsub.f32 %v622, %v801
        %v871 = vsub.f32 %v625, %v806
        %v872 = vsub.f32 %v630, %v811
        %v873 = vsub.f32 %v633, %v816
        %v874 = vsub.f32 %v638, %v821
        %v875 = vsub.f32 %v641, %v826
        %v876 = vsub.f32 %v646, %v831
        %v877 = vsub.f32 %v649, %v836
        %v878 = vsub.f32 %v654, %v841
        %v879 = vsub.f32 %v657, %v846
        %v880 = vsub.f32 %v662, %v851
        %v881 = vsub.f32 %v665, %v856
        %v882 = vsub.f32 %v670, %v861
        %v883 = vsub.f32 %v673, %v866
        %v884 = vmul.f32 %v868, 1.442695
        %v885 = vpow.pop %v884
        %v886 = vmul.f32 %v869, 1.442695
        %v887 = vpow.pop %v886
        %v888 = vmul.f32 %v870, 1.442695
        %v889 = vpow.pop %v888
        %v890 = vmul.f32 %v871, 1.442695
        %v891 = vpow.pop %v890
        %v892 = vmul.f32 %v872, 1.442695
        %v893 = vpow.pop %v892
        %v894 = vmul.f32 %v873, 1.442695
        %v895 = vpow.pop %v894
        %v896 = vmul.f32 %v874, 1.442695
        %v897 = vpow.pop %v896
        %v898 = vmul.f32 %v875, 1.442695
        %v899 = vpow.pop %v898
        %v900 = vmul.f32 %v876, 1.442695
        %v901 = vpow.pop %v900
        %v902 = vmul.f32 %v877, 1.442695
        %v903 = vpow.pop %v902
        %v904 = vmul.f32 %v878, 1.442695
        %v905 = vpow.pop %v904
        %v906 = vmul.f32 %v879, 1.442695
        %v907 = vpow.pop %v906
        %v908 = vmul.f32 %v880, 1.442695
        %v909 = vpow.pop %v908
        %v910 = vmul.f32 %v881, 1.442695
        %v911 = vpow.pop %v910
        %v912 = vmul.f32 %v882, 1.442695
        %v913 = vpow.pop %v912
        %v914 = vmul.f32 %v883, 1.442695
        %v915 = vpow.pop %v914
        %v916 = vld [vmem:[#allocation3] sm:$0xff]
        %v917 = vld [vmem:[#allocation3 + $0x8] sm:$0xff]
        %v918 = vld [vmem:[#allocation3 + $0x10] sm:$0xff]
        %v919 = vld [vmem:[#allocation3 + $0x18] sm:$0xff]
        %v920 = vld [vmem:[#allocation3 + $0x20] sm:$0xff]
        %v921 = vld [vmem:[#allocation3 + $0x28] sm:$0xff]
        %v922 = vld [vmem:[#allocation3 + $0x30] sm:$0xff]
        %v923 = vld [vmem:[#allocation3 + $0x38] sm:$0xff]
        %v924 = vld [vmem:[#allocation3 + $0x40] sm:$0xff]
        %v925 = vld [vmem:[#allocation3 + $0x48] sm:$0xff]
        %v926 = vld [vmem:[#allocation3 + $0x50] sm:$0xff]
        %v927 = vld [vmem:[#allocation3 + $0x58] sm:$0xff]
        %v928 = vld [vmem:[#allocation3 + $0x60] sm:$0xff]
        %v929 = vld [vmem:[#allocation3 + $0x68] sm:$0xff]
        %v930 = vld [vmem:[#allocation3 + $0x70] sm:$0xff]
        %v931 = vld [vmem:[#allocation3 + $0x78] sm:$0xff]
        %v932 = vmul.f32 %v757, %v916
        %v933 = vmul.f32 %v759, %v917
        %v934 = vmul.f32 %v761, %v918
        %v935 = vmul.f32 %v763, %v919
        %v936 = vmul.f32 %v765, %v920
        %v937 = vmul.f32 %v767, %v921
        %v938 = vmul.f32 %v769, %v922
        %v939 = vmul.f32 %v771, %v923
        %v940 = vmul.f32 %v773, %v924
        %v941 = vmul.f32 %v775, %v925
        %v942 = vmul.f32 %v777, %v926
        %v943 = vmul.f32 %v779, %v927
        %v944 = vmul.f32 %v781, %v928
        %v945 = vmul.f32 %v783, %v929
        %v946 = vmul.f32 %v785, %v930
        %v947 = vmul.f32 %v787, %v931
        %948 = vadd.xlane.f32.xlu0 %v885
        %v949 = vpop.xlane.xlu0 %948
        %950 = vadd.xlane.f32.xlu0 %v887
        %v951 = vpop.xlane.xlu0 %950
        %952 = vadd.xlane.f32.xlu0 %v889
        %v953 = vpop.xlane.xlu0 %952
        %954 = vadd.xlane.f32.xlu0 %v891
        %v955 = vpop.xlane.xlu0 %954
        %956 = vadd.xlane.f32.xlu0 %v893
        %v957 = vpop.xlane.xlu0 %956
        %958 = vadd.xlane.f32.xlu0 %v895
        %v959 = vpop.xlane.xlu0 %958
        %960 = vadd.xlane.f32.xlu0 %v897
        %v961 = vpop.xlane.xlu0 %960
        %962 = vadd.xlane.f32.xlu0 %v899
        %v963 = vpop.xlane.xlu0 %962
        %964 = vadd.xlane.f32.xlu0 %v901
        %v965 = vpop.xlane.xlu0 %964
        %966 = vadd.xlane.f32.xlu0 %v903
        %v967 = vpop.xlane.xlu0 %966
        %968 = vadd.xlane.f32.xlu0 %v905
        %v969 = vpop.xlane.xlu0 %968
        %970 = vadd.xlane.f32.xlu0 %v907
        %v971 = vpop.xlane.xlu0 %970
        %972 = vadd.xlane.f32.xlu0 %v909
        %v973 = vpop.xlane.xlu0 %972
        %974 = vadd.xlane.f32.xlu0 %v911
        %v975 = vpop.xlane.xlu0 %974
        %976 = vadd.xlane.f32.xlu0 %v913
        %v977 = vpop.xlane.xlu0 %976
        %978 = vadd.xlane.f32.xlu0 %v915
        %v979 = vpop.xlane.xlu0 %978
        %v980 = vadd.f32 %v932, %v949
        %v981 = vadd.f32 %v933, %v951
        %v982 = vadd.f32 %v934, %v953
        %v983 = vadd.f32 %v935, %v955
        %v984 = vadd.f32 %v936, %v957
        %v985 = vadd.f32 %v937, %v959
        %v986 = vadd.f32 %v938, %v961
        %v987 = vadd.f32 %v939, %v963
        %v988 = vadd.f32 %v940, %v965
        %v989 = vadd.f32 %v941, %v967
        %v990 = vadd.f32 %v942, %v969
        %v991 = vadd.f32 %v943, %v971
        %v992 = vadd.f32 %v944, %v973
        %v993 = vadd.f32 %v945, %v975
        %v994 = vadd.f32 %v946, %v977
        %v995 = vadd.f32 %v947, %v979
        %vm996 = vcmask 7168
        %997 = vst.msk [vmem:[#allocation3] sm:$0xff] %vm996, %v980
        %998 = vst.msk [vmem:[#allocation3 + $0x8] sm:$0xff] %vm996, %v981
        %999 = vst.msk [vmem:[#allocation3 + $0x10] sm:$0xff] %vm996, %v982
        %1000 = vst.msk [vmem:[#allocation3 + $0x18] sm:$0xff] %vm996, %v983
        %1001 = vst.msk [vmem:[#allocation3 + $0x20] sm:$0xff] %vm996, %v984
        %1002 = vst.msk [vmem:[#allocation3 + $0x28] sm:$0xff] %vm996, %v985
        %1003 = vst.msk [vmem:[#allocation3 + $0x30] sm:$0xff] %vm996, %v986
        %1004 = vst.msk [vmem:[#allocation3 + $0x38] sm:$0xff] %vm996, %v987
        %1005 = vst.msk [vmem:[#allocation3 + $0x40] sm:$0xff] %vm996, %v988
        %1006 = vst.msk [vmem:[#allocation3 + $0x48] sm:$0xff] %vm996, %v989
        %1007 = vst.msk [vmem:[#allocation3 + $0x50] sm:$0xff] %vm996, %v990
        %1008 = vst.msk [vmem:[#allocation3 + $0x58] sm:$0xff] %vm996, %v991
        %1009 = vst.msk [vmem:[#allocation3 + $0x60] sm:$0xff] %vm996, %v992
        %1010 = vst.msk [vmem:[#allocation3 + $0x68] sm:$0xff] %vm996, %v993
        %1011 = vst.msk [vmem:[#allocation3 + $0x70] sm:$0xff] %vm996, %v994
        %1012 = vst.msk [vmem:[#allocation3 + $0x78] sm:$0xff] %vm996, %v995
        %v1013 = vld [vmem:[#allocation4] sm:$0xff]
        %v1014 = vld [vmem:[#allocation4 + $0x8] sm:$0xff]
        %v1015 = vld [vmem:[#allocation4 + $0x10] sm:$0xff]
        %v1016 = vld [vmem:[#allocation4 + $0x18] sm:$0xff]
        %v1017 = vld [vmem:[#allocation4 + $0x20] sm:$0xff]
        %v1018 = vld [vmem:[#allocation4 + $0x28] sm:$0xff]
        %v1019 = vld [vmem:[#allocation4 + $0x30] sm:$0xff]
        %v1020 = vld [vmem:[#allocation4 + $0x38] sm:$0xff]
        %v1021 = vld [vmem:[#allocation4 + $0x40] sm:$0xff]
        %v1022 = vld [vmem:[#allocation4 + $0x48] sm:$0xff]
        %v1023 = vld [vmem:[#allocation4 + $0x50] sm:$0xff]
        %v1024 = vld [vmem:[#allocation4 + $0x58] sm:$0xff]
        %v1025 = vld [vmem:[#allocation4 + $0x60] sm:$0xff]
        %v1026 = vld [vmem:[#allocation4 + $0x68] sm:$0xff]
        %v1027 = vld [vmem:[#allocation4 + $0x70] sm:$0xff]
        %v1028 = vld [vmem:[#allocation4 + $0x78] sm:$0xff]
        %v1029 = vld [vmem:[#allocation4 + $0x80] sm:$0xff]
        %v1030 = vld [vmem:[#allocation4 + $0x88] sm:$0xff]
        %v1031 = vld [vmem:[#allocation4 + $0x90] sm:$0xff]
        %v1032 = vld [vmem:[#allocation4 + $0x98] sm:$0xff]
        %v1033 = vld [vmem:[#allocation4 + $0xa0] sm:$0xff]
        %v1034 = vld [vmem:[#allocation4 + $0xa8] sm:$0xff]
        %v1035 = vld [vmem:[#allocation4 + $0xb0] sm:$0xff]
        %v1036 = vld [vmem:[#allocation4 + $0xb8] sm:$0xff]
        %v1037 = vld [vmem:[#allocation4 + $0xc0] sm:$0xff]
        %v1038 = vld [vmem:[#allocation4 + $0xc8] sm:$0xff]
        %v1039 = vld [vmem:[#allocation4 + $0xd0] sm:$0xff]
        %v1040 = vld [vmem:[#allocation4 + $0xd8] sm:$0xff]
        %v1041 = vld [vmem:[#allocation4 + $0xe0] sm:$0xff]
        %v1042 = vld [vmem:[#allocation4 + $0xe8] sm:$0xff]
        %v1043 = vld [vmem:[#allocation4 + $0xf0] sm:$0xff]
        %v1044 = vld [vmem:[#allocation4 + $0xf8] sm:$0xff]
        %1046 = vset.pattern.permute.xlu0 0
        %1047 = vperm.xlu0 %1046, %v757
        %v1048 = vpop.permute.xlu0 %1047
        %1051 = vset.pattern.permute.xlu0 0
        %1052 = vperm.xlu0 %1051, %v759
        %v1053 = vpop.permute.xlu0 %1052
        %1056 = vset.pattern.permute.xlu0 0
        %1057 = vperm.xlu0 %1056, %v761
        %v1058 = vpop.permute.xlu0 %1057
        %1061 = vset.pattern.permute.xlu0 0
        %1062 = vperm.xlu0 %1061, %v763
        %v1063 = vpop.permute.xlu0 %1062
        %1066 = vset.pattern.permute.xlu0 0
        %1067 = vperm.xlu0 %1066, %v765
        %v1068 = vpop.permute.xlu0 %1067
        %1071 = vset.pattern.permute.xlu0 0
        %1072 = vperm.xlu0 %1071, %v767
        %v1073 = vpop.permute.xlu0 %1072
        %1076 = vset.pattern.permute.xlu0 0
        %1077 = vperm.xlu0 %1076, %v769
        %v1078 = vpop.permute.xlu0 %1077
        %1081 = vset.pattern.permute.xlu0 0
        %1082 = vperm.xlu0 %1081, %v771
        %v1083 = vpop.permute.xlu0 %1082
        %1086 = vset.pattern.permute.xlu0 0
        %1087 = vperm.xlu0 %1086, %v773
        %v1088 = vpop.permute.xlu0 %1087
        %1091 = vset.pattern.permute.xlu0 0
        %1092 = vperm.xlu0 %1091, %v775
        %v1093 = vpop.permute.xlu0 %1092
        %1096 = vset.pattern.permute.xlu0 0
        %1097 = vperm.xlu0 %1096, %v777
        %v1098 = vpop.permute.xlu0 %1097
        %1101 = vset.pattern.permute.xlu0 0
        %1102 = vperm.xlu0 %1101, %v779
        %v1103 = vpop.permute.xlu0 %1102
        %1106 = vset.pattern.permute.xlu0 0
        %1107 = vperm.xlu0 %1106, %v781
        %v1108 = vpop.permute.xlu0 %1107
        %1111 = vset.pattern.permute.xlu0 0
        %1112 = vperm.xlu0 %1111, %v783
        %v1113 = vpop.permute.xlu0 %1112
        %1116 = vset.pattern.permute.xlu0 0
        %1117 = vperm.xlu0 %1116, %v785
        %v1118 = vpop.permute.xlu0 %1117
        %1121 = vset.pattern.permute.xlu0 0
        %1122 = vperm.xlu0 %1121, %v787
        %v1123 = vpop.permute.xlu0 %1122
        %v1125 = vmul.f32 %v1048, %v1013
        %v1126 = vmul.f32 %v1048, %v1014
        %v1127 = vmul.f32 %v1053, %v1015
        %v1128 = vmul.f32 %v1053, %v1016
        %v1129 = vmul.f32 %v1058, %v1017
        %v1130 = vmul.f32 %v1058, %v1018
        %v1131 = vmul.f32 %v1063, %v1019
        %v1132 = vmul.f32 %v1063, %v1020
        %v1133 = vmul.f32 %v1068, %v1021
        %v1134 = vmul.f32 %v1068, %v1022
        %v1135 = vmul.f32 %v1073, %v1023
        %v1136 = vmul.f32 %v1073, %v1024
        %v1137 = vmul.f32 %v1078, %v1025
        %v1138 = vmul.f32 %v1078, %v1026
        %v1139 = vmul.f32 %v1083, %v1027
        %v1140 = vmul.f32 %v1083, %v1028
        %v1141 = vmul.f32 %v1088, %v1029
        %v1142 = vmul.f32 %v1088, %v1030
        %v1143 = vmul.f32 %v1093, %v1031
        %v1144 = vmul.f32 %v1093, %v1032
        %v1145 = vmul.f32 %v1098, %v1033
        %v1146 = vmul.f32 %v1098, %v1034
        %v1147 = vmul.f32 %v1103, %v1035
        %v1148 = vmul.f32 %v1103, %v1036
        %v1149 = vmul.f32 %v1108, %v1037
        %v1150 = vmul.f32 %v1108, %v1038
        %v1151 = vmul.f32 %v1113, %v1039
        %v1152 = vmul.f32 %v1113, %v1040
        %v1153 = vmul.f32 %v1118, %v1041
        %v1154 = vmul.f32 %v1118, %v1042
        %v1155 = vmul.f32 %v1123, %v1043
        %v1156 = vmul.f32 %v1123, %v1044
        %v1157 = vpack.c.bf16 %v887, %v885
        %v1158 = vpack.c.bf16 %v891, %v889
        %v1159 = vpack.c.bf16 %v895, %v893
        %v1160 = vpack.c.bf16 %v899, %v897
        %v1161 = vpack.c.bf16 %v903, %v901
        %v1162 = vpack.c.bf16 %v907, %v905
        %v1163 = vpack.c.bf16 %v911, %v909
        %v1164 = vpack.c.bf16 %v915, %v913
        %v1165 = vld [vmem:[%s334] sm:$0xff]
        %v1166 = vld [vmem:[%s334 + $0x8] sm:$0xff]
        %v1167 = vld [vmem:[%s334 + $0x10] sm:$0xff]
        %v1168 = vld [vmem:[%s334 + $0x18] sm:$0xff]
        %v1169 = vld [vmem:[%s334 + $0x20] sm:$0xff]
        %v1170 = vld [vmem:[%s334 + $0x28] sm:$0xff]
        %v1171 = vld [vmem:[%s334 + $0x30] sm:$0xff]
        %v1172 = vld [vmem:[%s334 + $0x38] sm:$0xff]
        %v1173 = vld [vmem:[%s334 + $0x40] sm:$0xff]
        %v1174 = vld [vmem:[%s334 + $0x48] sm:$0xff]
        %v1175 = vld [vmem:[%s334 + $0x50] sm:$0xff]
        %v1176 = vld [vmem:[%s334 + $0x58] sm:$0xff]
        %v1177 = vld [vmem:[%s334 + $0x60] sm:$0xff]
        %v1178 = vld [vmem:[%s334 + $0x68] sm:$0xff]
        %v1179 = vld [vmem:[%s334 + $0x70] sm:$0xff]
        %v1180 = vld [vmem:[%s334 + $0x78] sm:$0xff]
        %v1197 = vunpack.c.l.b16 %v1165
        %v1198 = vunpack.c.h.b16 %v1165
        %v1199 = vunpack.c.l.b16 %v1166
        %v1200 = vunpack.c.h.b16 %v1166
        %v1201 = vunpack.c.l.b16 %v1167
        %v1202 = vunpack.c.h.b16 %v1167
        %v1203 = vunpack.c.l.b16 %v1168
        %v1204 = vunpack.c.h.b16 %v1168
        %v1205 = vunpack.c.l.b16 %v1169
        %v1206 = vunpack.c.h.b16 %v1169
        %v1207 = vunpack.c.l.b16 %v1170
        %v1208 = vunpack.c.h.b16 %v1170
        %v1209 = vunpack.c.l.b16 %v1171
        %v1210 = vunpack.c.h.b16 %v1171
        %v1211 = vunpack.c.l.b16 %v1172
        %v1212 = vunpack.c.h.b16 %v1172
        %v1213 = vunpack.c.l.b16 %v1173
        %v1214 = vunpack.c.h.b16 %v1173
        %v1215 = vunpack.c.l.b16 %v1174
        %v1216 = vunpack.c.h.b16 %v1174
        %v1217 = vunpack.c.l.b16 %v1175
        %v1218 = vunpack.c.h.b16 %v1175
        %v1219 = vunpack.c.l.b16 %v1176
        %v1220 = vunpack.c.h.b16 %v1176
        %v1221 = vunpack.c.l.b16 %v1177
        %v1222 = vunpack.c.h.b16 %v1177
        %v1223 = vunpack.c.l.b16 %v1178
        %v1224 = vunpack.c.h.b16 %v1178
        %v1225 = vunpack.c.l.b16 %v1179
        %v1226 = vunpack.c.h.b16 %v1179
        %v1227 = vunpack.c.l.b16 %v1180
        %v1228 = vunpack.c.h.b16 %v1180
        %v1229 = vpack.c.b16 %v1199, %v1197
        %v1230 = vpack.c.b16 %v1200, %v1198
        %v1231 = vpack.c.b16 %v1203, %v1201
        %v1232 = vpack.c.b16 %v1204, %v1202
        %v1233 = vpack.c.b16 %v1207, %v1205
        %v1234 = vpack.c.b16 %v1208, %v1206
        %v1235 = vpack.c.b16 %v1211, %v1209
        %v1236 = vpack.c.b16 %v1212, %v1210
        %v1237 = vpack.c.b16 %v1215, %v1213
        %v1238 = vpack.c.b16 %v1216, %v1214
        %v1239 = vpack.c.b16 %v1219, %v1217
        %v1240 = vpack.c.b16 %v1220, %v1218
        %v1241 = vpack.c.b16 %v1223, %v1221
        %v1242 = vpack.c.b16 %v1224, %v1222
        %v1243 = vpack.c.b16 %v1227, %v1225
        %v1244 = vpack.c.b16 %v1228, %v1226
        %1261 = vmatprep.subr.bf16.mxu0 %v1244
        %1262 = vmatpush1.bf16.msra.mxu0 %v1243
        %1263 = vmatprep.subr.bf16.mxu0 %v1242
        %1264 = vmatpush1.bf16.msra.mxu0 %v1241
        %1265 = vmatprep.subr.bf16.mxu0 %v1240
        %1266 = vmatpush1.bf16.msra.mxu0 %v1239
        %1267 = vmatprep.subr.bf16.mxu0 %v1238
        %1268 = vmatpush1.bf16.msra.mxu0 %v1237
        %1269 = vmatprep.subr.bf16.mxu0 %v1236
        %1270 = vmatpush1.bf16.msra.mxu0 %v1235
        %1271 = vmatprep.subr.bf16.mxu0 %v1234
        %1272 = vmatpush1.bf16.msra.mxu0 %v1233
        %1273 = vmatprep.subr.bf16.mxu0 %v1232
        %1274 = vmatpush1.bf16.msra.mxu0 %v1231
        %1275 = vmatprep.subr.bf16.mxu0 %v1230
        %1276 = vmatpush1.bf16.msra.mxu0 %v1229
        %1277 = vmatprep.subr.bf16.mxu0 0
        %1278 = vmatpush2.bf16.msra.mxu0 0
        %1279 = vmatprep.subr.bf16.mxu0 0
        %1280 = vmatpush2.bf16.msra.mxu0 0
        %1281 = vmatprep.subr.bf16.mxu0 0
        %1282 = vmatpush2.bf16.msra.mxu0 0
        %1283 = vmatprep.subr.bf16.mxu0 0
        %1284 = vmatpush2.bf16.msra.mxu0 0
        %1285 = vmatprep.subr.bf16.mxu0 0
        %1286 = vmatpush2.bf16.msra.mxu0 0
        %1287 = vmatprep.subr.bf16.mxu0 0
        %1288 = vmatpush2.bf16.msra.mxu0 0
        %1289 = vmatprep.subr.bf16.mxu0 0
        %1290 = vmatpush2.bf16.msra.mxu0 0
        %1291 = vmatprep.subr.bf16.mxu0 0
        %1292 = vmatpush2.bf16.msra.mxu0 0
        %1293 = vmatprep.mubr.bf16.mxu0 0
        %1294 = vmatmul.mubr.bf16.gmra.mxu0 %v1157
        %v1295 = vpop.f32.mrf.mxu0
        %v1296 = vadd.f32 0.0, %v1295
        %v1297 = vpop.f32.mrf.mxu0
        %v1298 = vadd.f32 0.0, %v1297
        %v1299 = vpop.f32.mrf.mxu0
        %v1300 = vadd.f32 0.0, %v1299
        %v1301 = vpop.f32.mrf.mxu0
        %v1302 = vadd.f32 0.0, %v1301
        %1303 = vmatprep.mubr.bf16.mxu0 0
        %1304 = vmatmul.mubr.bf16.gmra.mxu0 %v1158
        %v1305 = vpop.f32.mrf.mxu0
        %v1306 = vadd.f32 0.0, %v1305
        %v1307 = vpop.f32.mrf.mxu0
        %v1308 = vadd.f32 0.0, %v1307
        %v1309 = vpop.f32.mrf.mxu0
        %v1310 = vadd.f32 0.0, %v1309
        %v1311 = vpop.f32.mrf.mxu0
        %v1312 = vadd.f32 0.0, %v1311
        %1313 = vmatprep.mubr.bf16.mxu0 0
        %1314 = vmatmul.mubr.bf16.gmra.mxu0 %v1159
        %v1315 = vpop.f32.mrf.mxu0
        %v1316 = vadd.f32 0.0, %v1315
        %v1317 = vpop.f32.mrf.mxu0
        %v1318 = vadd.f32 0.0, %v1317
        %v1319 = vpop.f32.mrf.mxu0
        %v1320 = vadd.f32 0.0, %v1319
        %v1321 = vpop.f32.mrf.mxu0
        %v1322 = vadd.f32 0.0, %v1321
        %1323 = vmatprep.mubr.bf16.mxu0 0
        %1324 = vmatmul.mubr.bf16.gmra.mxu0 %v1160
        %v1325 = vpop.f32.mrf.mxu0
        %v1326 = vadd.f32 0.0, %v1325
        %v1327 = vpop.f32.mrf.mxu0
        %v1328 = vadd.f32 0.0, %v1327
        %v1329 = vpop.f32.mrf.mxu0
        %v1330 = vadd.f32 0.0, %v1329
        %v1331 = vpop.f32.mrf.mxu0
        %v1332 = vadd.f32 0.0, %v1331
        %1333 = vmatprep.mubr.bf16.mxu0 0
        %1334 = vmatmul.mubr.bf16.gmra.mxu0 %v1161
        %v1335 = vpop.f32.mrf.mxu0
        %v1336 = vadd.f32 0.0, %v1335
        %v1337 = vpop.f32.mrf.mxu0
        %v1338 = vadd.f32 0.0, %v1337
        %v1339 = vpop.f32.mrf.mxu0
        %v1340 = vadd.f32 0.0, %v1339
        %v1341 = vpop.f32.mrf.mxu0
        %v1342 = vadd.f32 0.0, %v1341
        %1343 = vmatprep.mubr.bf16.mxu0 0
        %1344 = vmatmul.mubr.bf16.gmra.mxu0 %v1162
        %v1345 = vpop.f32.mrf.mxu0
        %v1346 = vadd.f32 0.0, %v1345
        %v1347 = vpop.f32.mrf.mxu0
        %v1348 = vadd.f32 0.0, %v1347
        %v1349 = vpop.f32.mrf.mxu0
        %v1350 = vadd.f32 0.0, %v1349
        %v1351 = vpop.f32.mrf.mxu0
        %v1352 = vadd.f32 0.0, %v1351
        %1353 = vmatprep.mubr.bf16.mxu0 0
        %1354 = vmatmul.mubr.bf16.gmra.mxu0 %v1163
        %v1355 = vpop.f32.mrf.mxu0
        %v1356 = vadd.f32 0.0, %v1355
        %v1357 = vpop.f32.mrf.mxu0
        %v1358 = vadd.f32 0.0, %v1357
        %v1359 = vpop.f32.mrf.mxu0
        %v1360 = vadd.f32 0.0, %v1359
        %v1361 = vpop.f32.mrf.mxu0
        %v1362 = vadd.f32 0.0, %v1361
        %1363 = vmatprep.mubr.bf16.mxu0 0
        %1364 = vmatmul.mubr.bf16.gmra.mxu0 %v1164
        %v1365 = vpop.f32.mrf.mxu0
        %v1366 = vadd.f32 0.0, %v1365
        %v1367 = vpop.f32.mrf.mxu0
        %v1368 = vadd.f32 0.0, %v1367
        %v1369 = vpop.f32.mrf.mxu0
        %v1370 = vadd.f32 0.0, %v1369
        %v1371 = vpop.f32.mrf.mxu0
        %v1372 = vadd.f32 0.0, %v1371
        %1373 = vdwg.mxu0
        %v1374 = vadd.f32 %v1125, %v1296
        %v1375 = vadd.f32 %v1126, %v1298
        %v1376 = vadd.f32 %v1127, %v1300
        %v1377 = vadd.f32 %v1128, %v1302
        %v1378 = vadd.f32 %v1129, %v1306
        %v1379 = vadd.f32 %v1130, %v1308
        %v1380 = vadd.f32 %v1131, %v1310
        %v1381 = vadd.f32 %v1132, %v1312
        %v1382 = vadd.f32 %v1133, %v1316
        %v1383 = vadd.f32 %v1134, %v1318
        %v1384 = vadd.f32 %v1135, %v1320
        %v1385 = vadd.f32 %v1136, %v1322
        %v1386 = vadd.f32 %v1137, %v1326
        %v1387 = vadd.f32 %v1138, %v1328
        %v1388 = vadd.f32 %v1139, %v1330
        %v1389 = vadd.f32 %v1140, %v1332
        %v1390 = vadd.f32 %v1141, %v1336
        %v1391 = vadd.f32 %v1142, %v1338
        %v1392 = vadd.f32 %v1143, %v1340
        %v1393 = vadd.f32 %v1144, %v1342
        %v1394 = vadd.f32 %v1145, %v1346
        %v1395 = vadd.f32 %v1146, %v1348
        %v1396 = vadd.f32 %v1147, %v1350
        %v1397 = vadd.f32 %v1148, %v1352
        %v1398 = vadd.f32 %v1149, %v1356
        %v1399 = vadd.f32 %v1150, %v1358
        %v1400 = vadd.f32 %v1151, %v1360
        %v1401 = vadd.f32 %v1152, %v1362
        %v1402 = vadd.f32 %v1153, %v1366
        %v1403 = vadd.f32 %v1154, %v1368
        %v1404 = vadd.f32 %v1155, %v1370
        %v1405 = vadd.f32 %v1156, %v1372
        %1406 = vst [vmem:[#allocation4] sm:$0xff] %v1374
        %1407 = vst [vmem:[#allocation4 + $0x8] sm:$0xff] %v1375
        %1408 = vst [vmem:[#allocation4 + $0x10] sm:$0xff] %v1376
        %1409 = vst [vmem:[#allocation4 + $0x18] sm:$0xff] %v1377
        %1410 = vst [vmem:[#allocation4 + $0x20] sm:$0xff] %v1378
        %1411 = vst [vmem:[#allocation4 + $0x28] sm:$0xff] %v1379
        %1412 = vst [vmem:[#allocation4 + $0x30] sm:$0xff] %v1380
        %1413 = vst [vmem:[#allocation4 + $0x38] sm:$0xff] %v1381
        %1414 = vst [vmem:[#allocation4 + $0x40] sm:$0xff] %v1382
        %1415 = vst [vmem:[#allocation4 + $0x48] sm:$0xff] %v1383
        %1416 = vst [vmem:[#allocation4 + $0x50] sm:$0xff] %v1384
        %1417 = vst [vmem:[#allocation4 + $0x58] sm:$0xff] %v1385
        %1418 = vst [vmem:[#allocation4 + $0x60] sm:$0xff] %v1386
        %1419 = vst [vmem:[#allocation4 + $0x68] sm:$0xff] %v1387
        %1420 = vst [vmem:[#allocation4 + $0x70] sm:$0xff] %v1388
        %1421 = vst [vmem:[#allocation4 + $0x78] sm:$0xff] %v1389
        %1422 = vst [vmem:[#allocation4 + $0x80] sm:$0xff] %v1390
        %1423 = vst [vmem:[#allocation4 + $0x88] sm:$0xff] %v1391
        %1424 = vst [vmem:[#allocation4 + $0x90] sm:$0xff] %v1392
        %1425 = vst [vmem:[#allocation4 + $0x98] sm:$0xff] %v1393
        %1426 = vst [vmem:[#allocation4 + $0xa0] sm:$0xff] %v1394
        %1427 = vst [vmem:[#allocation4 + $0xa8] sm:$0xff] %v1395
        %1428 = vst [vmem:[#allocation4 + $0xb0] sm:$0xff] %v1396
        %1429 = vst [vmem:[#allocation4 + $0xb8] sm:$0xff] %v1397
        %1430 = vst [vmem:[#allocation4 + $0xc0] sm:$0xff] %v1398
        %1431 = vst [vmem:[#allocation4 + $0xc8] sm:$0xff] %v1399
        %1432 = vst [vmem:[#allocation4 + $0xd0] sm:$0xff] %v1400
        %1433 = vst [vmem:[#allocation4 + $0xd8] sm:$0xff] %v1401
        %1434 = vst [vmem:[#allocation4 + $0xe0] sm:$0xff] %v1402
        %1435 = vst [vmem:[#allocation4 + $0xe8] sm:$0xff] %v1403
        %1436 = vst [vmem:[#allocation4 + $0xf0] sm:$0xff] %v1404
        %1437 = vst [vmem:[#allocation4 + $0xf8] sm:$0xff] %v1405
        %1438 = vst.msk [vmem:[#allocation2] sm:$0xff] %vm996, %v724
        %1439 = vst.msk [vmem:[#allocation2 + $0x8] sm:$0xff] %vm996, %v725
        %1440 = vst.msk [vmem:[#allocation2 + $0x10] sm:$0xff] %vm996, %v726
        %1441 = vst.msk [vmem:[#allocation2 + $0x18] sm:$0xff] %vm996, %v727
        %1442 = vst.msk [vmem:[#allocation2 + $0x20] sm:$0xff] %vm996, %v728
        %1443 = vst.msk [vmem:[#allocation2 + $0x28] sm:$0xff] %vm996, %v729
        %1444 = vst.msk [vmem:[#allocation2 + $0x30] sm:$0xff] %vm996, %v730
        %1445 = vst.msk [vmem:[#allocation2 + $0x38] sm:$0xff] %vm996, %v731
        %1446 = vst.msk [vmem:[#allocation2 + $0x40] sm:$0xff] %vm996, %v732
        %1447 = vst.msk [vmem:[#allocation2 + $0x48] sm:$0xff] %vm996, %v733
        %1448 = vst.msk [vmem:[#allocation2 + $0x50] sm:$0xff] %vm996, %v734
        %1449 = vst.msk [vmem:[#allocation2 + $0x58] sm:$0xff] %vm996, %v735
        %1450 = vst.msk [vmem:[#allocation2 + $0x60] sm:$0xff] %vm996, %v736
        %1451 = vst.msk [vmem:[#allocation2 + $0x68] sm:$0xff] %vm996, %v737
        %1452 = vst.msk [vmem:[#allocation2 + $0x70] sm:$0xff] %vm996, %v738
        %1453 = vst.msk [vmem:[#allocation2 + $0x78] sm:$0xff] %vm996, %v739
        %p1454 = scmp.eq.s32.totalorder %s25, 1
        // Predicated region
        $region41: #{pam_forward.7} parent=35 // pred_check
          %p1455 = pneg %p1454
        $region42: #{pam_forward.7} parent=35 // pred_check_branch
          %1457 = sbr.rel (%p1455) target = $region44
        $region43: #{pam_forward.7} parent=35 // pred_region
          %v1458 = vld [vmem:[#allocation3] sm:$0xff]
          %v1459 = vld [vmem:[#allocation3 + $0x8] sm:$0xff]
          %v1460 = vld [vmem:[#allocation3 + $0x10] sm:$0xff]
          %v1461 = vld [vmem:[#allocation3 + $0x18] sm:$0xff]
          %v1462 = vld [vmem:[#allocation3 + $0x20] sm:$0xff]
          %v1463 = vld [vmem:[#allocation3 + $0x28] sm:$0xff]
          %v1464 = vld [vmem:[#allocation3 + $0x30] sm:$0xff]
          %v1465 = vld [vmem:[#allocation3 + $0x38] sm:$0xff]
          %v1466 = vld [vmem:[#allocation3 + $0x40] sm:$0xff]
          %v1467 = vld [vmem:[#allocation3 + $0x48] sm:$0xff]
          %v1468 = vld [vmem:[#allocation3 + $0x50] sm:$0xff]
          %v1469 = vld [vmem:[#allocation3 + $0x58] sm:$0xff]
          %v1470 = vld [vmem:[#allocation3 + $0x60] sm:$0xff]
          %v1471 = vld [vmem:[#allocation3 + $0x68] sm:$0xff]
          %v1472 = vld [vmem:[#allocation3 + $0x70] sm:$0xff]
          %v1473 = vld [vmem:[#allocation3 + $0x78] sm:$0xff]
          %v1474 = vrcp.pop %v1458
          %v1475 = vrcp.pop %v1459
          %v1476 = vrcp.pop %v1460
          %v1477 = vrcp.pop %v1461
          %v1478 = vrcp.pop %v1462
          %v1479 = vrcp.pop %v1463
          %v1480 = vrcp.pop %v1464
          %v1481 = vrcp.pop %v1465
          %v1482 = vrcp.pop %v1466
          %v1483 = vrcp.pop %v1467
          %v1484 = vrcp.pop %v1468
          %v1485 = vrcp.pop %v1469
          %v1486 = vrcp.pop %v1470
          %v1487 = vrcp.pop %v1471
          %v1488 = vrcp.pop %v1472
          %v1489 = vrcp.pop %v1473
          %v1490 = vld [vmem:[#allocation4] sm:$0xff]
          %v1491 = vld [vmem:[#allocation4 + $0x8] sm:$0xff]
          %v1492 = vld [vmem:[#allocation4 + $0x10] sm:$0xff]
          %v1493 = vld [vmem:[#allocation4 + $0x18] sm:$0xff]
          %v1494 = vld [vmem:[#allocation4 + $0x20] sm:$0xff]
          %v1495 = vld [vmem:[#allocation4 + $0x28] sm:$0xff]
          %v1496 = vld [vmem:[#allocation4 + $0x30] sm:$0xff]
          %v1497 = vld [vmem:[#allocation4 + $0x38] sm:$0xff]
          %v1498 = vld [vmem:[#allocation4 + $0x40] sm:$0xff]
          %v1499 = vld [vmem:[#allocation4 + $0x48] sm:$0xff]
          %v1500 = vld [vmem:[#allocation4 + $0x50] sm:$0xff]
          %v1501 = vld [vmem:[#allocation4 + $0x58] sm:$0xff]
          %v1502 = vld [vmem:[#allocation4 + $0x60] sm:$0xff]
          %v1503 = vld [vmem:[#allocation4 + $0x68] sm:$0xff]
          %v1504 = vld [vmem:[#allocation4 + $0x70] sm:$0xff]
          %v1505 = vld [vmem:[#allocation4 + $0x78] sm:$0xff]
          %v1506 = vld [vmem:[#allocation4 + $0x80] sm:$0xff]
          %v1507 = vld [vmem:[#allocation4 + $0x88] sm:$0xff]
          %v1508 = vld [vmem:[#allocation4 + $0x90] sm:$0xff]
          %v1509 = vld [vmem:[#allocation4 + $0x98] sm:$0xff]
          %v1510 = vld [vmem:[#allocation4 + $0xa0] sm:$0xff]
          %v1511 = vld [vmem:[#allocation4 + $0xa8] sm:$0xff]
          %v1512 = vld [vmem:[#allocation4 + $0xb0] sm:$0xff]
          %v1513 = vld [vmem:[#allocation4 + $0xb8] sm:$0xff]
          %v1514 = vld [vmem:[#allocation4 + $0xc0] sm:$0xff]
          %v1515 = vld [vmem:[#allocation4 + $0xc8] sm:$0xff]
          %v1516 = vld [vmem:[#allocation4 + $0xd0] sm:$0xff]
          %v1517 = vld [vmem:[#allocation4 + $0xd8] sm:$0xff]
          %v1518 = vld [vmem:[#allocation4 + $0xe0] sm:$0xff]
          %v1519 = vld [vmem:[#allocation4 + $0xe8] sm:$0xff]
          %v1520 = vld [vmem:[#allocation4 + $0xf0] sm:$0xff]
          %v1521 = vld [vmem:[#allocation4 + $0xf8] sm:$0xff]
          %1523 = vset.pattern.permute.xlu0 0
          %1524 = vperm.xlu0 %1523, %v1474
          %v1525 = vpop.permute.xlu0 %1524
          %1528 = vset.pattern.permute.xlu0 0
          %1529 = vperm.xlu0 %1528, %v1475
          %v1530 = vpop.permute.xlu0 %1529
          %1533 = vset.pattern.permute.xlu0 0
          %1534 = vperm.xlu0 %1533, %v1476
          %v1535 = vpop.permute.xlu0 %1534
          %1538 = vset.pattern.permute.xlu0 0
          %1539 = vperm.xlu0 %1538, %v1477
          %v1540 = vpop.permute.xlu0 %1539
          %1543 = vset.pattern.permute.xlu0 0
          %1544 = vperm.xlu0 %1543, %v1478
          %v1545 = vpop.permute.xlu0 %1544
          %1548 = vset.pattern.permute.xlu0 0
          %1549 = vperm.xlu0 %1548, %v1479
          %v1550 = vpop.permute.xlu0 %1549
          %1553 = vset.pattern.permute.xlu0 0
          %1554 = vperm.xlu0 %1553, %v1480
          %v1555 = vpop.permute.xlu0 %1554
          %1558 = vset.pattern.permute.xlu0 0
          %1559 = vperm.xlu0 %1558, %v1481
          %v1560 = vpop.permute.xlu0 %1559
          %1563 = vset.pattern.permute.xlu0 0
          %1564 = vperm.xlu0 %1563, %v1482
          %v1565 = vpop.permute.xlu0 %1564
          %1568 = vset.pattern.permute.xlu0 0
          %1569 = vperm.xlu0 %1568, %v1483
          %v1570 = vpop.permute.xlu0 %1569
          %1573 = vset.pattern.permute.xlu0 0
          %1574 = vperm.xlu0 %1573, %v1484
          %v1575 = vpop.permute.xlu0 %1574
          %1578 = vset.pattern.permute.xlu0 0
          %1579 = vperm.xlu0 %1578, %v1485
          %v1580 = vpop.permute.xlu0 %1579
          %1583 = vset.pattern.permute.xlu0 0
          %1584 = vperm.xlu0 %1583, %v1486
          %v1585 = vpop.permute.xlu0 %1584
          %1588 = vset.pattern.permute.xlu0 0
          %1589 = vperm.xlu0 %1588, %v1487
          %v1590 = vpop.permute.xlu0 %1589
          %1593 = vset.pattern.permute.xlu0 0
          %1594 = vperm.xlu0 %1593, %v1488
          %v1595 = vpop.permute.xlu0 %1594
          %1598 = vset.pattern.permute.xlu0 0
          %1599 = vperm.xlu0 %1598, %v1489
          %v1600 = vpop.permute.xlu0 %1599
          %v1602 = vmul.f32 %v1490, %v1525
          %v1603 = vmul.f32 %v1491, %v1525
          %v1604 = vmul.f32 %v1492, %v1530
          %v1605 = vmul.f32 %v1493, %v1530
          %v1606 = vmul.f32 %v1494, %v1535
          %v1607 = vmul.f32 %v1495, %v1535
          %v1608 = vmul.f32 %v1496, %v1540
          %v1609 = vmul.f32 %v1497, %v1540
          %v1610 = vmul.f32 %v1498, %v1545
          %v1611 = vmul.f32 %v1499, %v1545
          %v1612 = vmul.f32 %v1500, %v1550
          %v1613 = vmul.f32 %v1501, %v1550
          %v1614 = vmul.f32 %v1502, %v1555
          %v1615 = vmul.f32 %v1503, %v1555
          %v1616 = vmul.f32 %v1504, %v1560
          %v1617 = vmul.f32 %v1505, %v1560
          %v1618 = vmul.f32 %v1506, %v1565
          %v1619 = vmul.f32 %v1507, %v1565
          %v1620 = vmul.f32 %v1508, %v1570
          %v1621 = vmul.f32 %v1509, %v1570
          %v1622 = vmul.f32 %v1510, %v1575
          %v1623 = vmul.f32 %v1511, %v1575
          %v1624 = vmul.f32 %v1512, %v1580
          %v1625 = vmul.f32 %v1513, %v1580
          %v1626 = vmul.f32 %v1514, %v1585
          %v1627 = vmul.f32 %v1515, %v1585
          %v1628 = vmul.f32 %v1516, %v1590
          %v1629 = vmul.f32 %v1517, %v1590
          %v1630 = vmul.f32 %v1518, %v1595
          %v1631 = vmul.f32 %v1519, %v1595
          %v1632 = vmul.f32 %v1520, %v1600
          %v1633 = vmul.f32 %v1521, %v1600
          %v1634 = vld [vmem:[%s345] sm:$0xff]
          %v1635 = vld [vmem:[%s345 + $0x8] sm:$0xff]
          %v1636 = vld [vmem:[%s345 + $0x10] sm:$0xff]
          %v1637 = vld [vmem:[%s345 + $0x18] sm:$0xff]
          %v1638 = vld [vmem:[%s345 + $0x20] sm:$0xff]
          %v1639 = vld [vmem:[%s345 + $0x28] sm:$0xff]
          %v1640 = vld [vmem:[%s345 + $0x30] sm:$0xff]
          %v1641 = vld [vmem:[%s345 + $0x38] sm:$0xff]
          %v1642 = vld [vmem:[%s345 + $0x40] sm:$0xff]
          %v1643 = vld [vmem:[%s345 + $0x48] sm:$0xff]
          %v1644 = vld [vmem:[%s345 + $0x50] sm:$0xff]
          %v1645 = vld [vmem:[%s345 + $0x58] sm:$0xff]
          %v1646 = vld [vmem:[%s345 + $0x60] sm:$0xff]
          %v1647 = vld [vmem:[%s345 + $0x68] sm:$0xff]
          %v1648 = vld [vmem:[%s345 + $0x70] sm:$0xff]
          %v1649 = vld [vmem:[%s345 + $0x78] sm:$0xff]
          %v1650 = vld [vmem:[%s345 + $0x80] sm:$0xff]
          %v1651 = vld [vmem:[%s345 + $0x88] sm:$0xff]
          %v1652 = vld [vmem:[%s345 + $0x90] sm:$0xff]
          %v1653 = vld [vmem:[%s345 + $0x98] sm:$0xff]
          %v1654 = vld [vmem:[%s345 + $0xa0] sm:$0xff]
          %v1655 = vld [vmem:[%s345 + $0xa8] sm:$0xff]
          %v1656 = vld [vmem:[%s345 + $0xb0] sm:$0xff]
          %v1657 = vld [vmem:[%s345 + $0xb8] sm:$0xff]
          %v1658 = vld [vmem:[%s345 + $0xc0] sm:$0xff]
          %v1659 = vld [vmem:[%s345 + $0xc8] sm:$0xff]
          %v1660 = vld [vmem:[%s345 + $0xd0] sm:$0xff]
          %v1661 = vld [vmem:[%s345 + $0xd8] sm:$0xff]
          %v1662 = vld [vmem:[%s345 + $0xe0] sm:$0xff]
          %v1663 = vld [vmem:[%s345 + $0xe8] sm:$0xff]
          %v1664 = vld [vmem:[%s345 + $0xf0] sm:$0xff]
          %v1665 = vld [vmem:[%s345 + $0xf8] sm:$0xff]
          %v1666 = vadd.f32 %v1602, %v1634
          %v1667 = vadd.f32 %v1603, %v1635
          %v1668 = vadd.f32 %v1604, %v1636
          %v1669 = vadd.f32 %v1605, %v1637
          %v1670 = vadd.f32 %v1606, %v1638
          %v1671 = vadd.f32 %v1607, %v1639
          %v1672 = vadd.f32 %v1608, %v1640
          %v1673 = vadd.f32 %v1609, %v1641
          %v1674 = vadd.f32 %v1610, %v1642
          %v1675 = vadd.f32 %v1611, %v1643
          %v1676 = vadd.f32 %v1612, %v1644
          %v1677 = vadd.f32 %v1613, %v1645
          %v1678 = vadd.f32 %v1614, %v1646
          %v1679 = vadd.f32 %v1615, %v1647
          %v1680 = vadd.f32 %v1616, %v1648
          %v1681 = vadd.f32 %v1617, %v1649
          %v1682 = vadd.f32 %v1618, %v1650
          %v1683 = vadd.f32 %v1619, %v1651
          %v1684 = vadd.f32 %v1620, %v1652
          %v1685 = vadd.f32 %v1621, %v1653
          %v1686 = vadd.f32 %v1622, %v1654
          %v1687 = vadd.f32 %v1623, %v1655
          %v1688 = vadd.f32 %v1624, %v1656
          %v1689 = vadd.f32 %v1625, %v1657
          %v1690 = vadd.f32 %v1626, %v1658
          %v1691 = vadd.f32 %v1627, %v1659
          %v1692 = vadd.f32 %v1628, %v1660
          %v1693 = vadd.f32 %v1629, %v1661
          %v1694 = vadd.f32 %v1630, %v1662
          %v1695 = vadd.f32 %v1631, %v1663
          %v1696 = vadd.f32 %v1632, %v1664
          %v1697 = vadd.f32 %v1633, %v1665
          %1698 = vst [vmem:[%s304] sm:$0xff] %v1666
          %1699 = vst [vmem:[%s304 + $0x8] sm:$0xff] %v1667
          %1700 = vst [vmem:[%s304 + $0x10] sm:$0xff] %v1668
          %1701 = vst [vmem:[%s304 + $0x18] sm:$0xff] %v1669
          %1702 = vst [vmem:[%s304 + $0x20] sm:$0xff] %v1670
          %1703 = vst [vmem:[%s304 + $0x28] sm:$0xff] %v1671
          %1704 = vst [vmem:[%s304 + $0x30] sm:$0xff] %v1672
          %1705 = vst [vmem:[%s304 + $0x38] sm:$0xff] %v1673
          %1706 = vst [vmem:[%s304 + $0x40] sm:$0xff] %v1674
          %1707 = vst [vmem:[%s304 + $0x48] sm:$0xff] %v1675
          %1708 = vst [vmem:[%s304 + $0x50] sm:$0xff] %v1676
          %1709 = vst [vmem:[%s304 + $0x58] sm:$0xff] %v1677
          %1710 = vst [vmem:[%s304 + $0x60] sm:$0xff] %v1678
          %1711 = vst [vmem:[%s304 + $0x68] sm:$0xff] %v1679
          %1712 = vst [vmem:[%s304 + $0x70] sm:$0xff] %v1680
          %1713 = vst [vmem:[%s304 + $0x78] sm:$0xff] %v1681
          %1714 = vst [vmem:[%s304 + $0x80] sm:$0xff] %v1682
          %1715 = vst [vmem:[%s304 + $0x88] sm:$0xff] %v1683
          %1716 = vst [vmem:[%s304 + $0x90] sm:$0xff] %v1684
          %1717 = vst [vmem:[%s304 + $0x98] sm:$0xff] %v1685
          %1718 = vst [vmem:[%s304 + $0xa0] sm:$0xff] %v1686
          %1719 = vst [vmem:[%s304 + $0xa8] sm:$0xff] %v1687
          %1720 = vst [vmem:[%s304 + $0xb0] sm:$0xff] %v1688
          %1721 = vst [vmem:[%s304 + $0xb8] sm:$0xff] %v1689
          %1722 = vst [vmem:[%s304 + $0xc0] sm:$0xff] %v1690
          %1723 = vst [vmem:[%s304 + $0xc8] sm:$0xff] %v1691
          %1724 = vst [vmem:[%s304 + $0xd0] sm:$0xff] %v1692
          %1725 = vst [vmem:[%s304 + $0xd8] sm:$0xff] %v1693
          %1726 = vst [vmem:[%s304 + $0xe0] sm:$0xff] %v1694
          %1727 = vst [vmem:[%s304 + $0xe8] sm:$0xff] %v1695
          %1728 = vst [vmem:[%s304 + $0xf0] sm:$0xff] %v1696
          %1729 = vst [vmem:[%s304 + $0xf8] sm:$0xff] %v1697
        $region44: #{pam_forward.7} parent=35 // pred_fallthru
          _
        %s1730 = sand.u32 %s159, 1
        %s1731 = scalar_lea.sflag [#allocation6], %s1730
        %s1732 = sand.u32 %s159, 1
        %s1733 = smul.addr %s1732, 256
        %s1734 = scalar_lea.vmem [#allocation5], %s1733
        // Predicated region
        $region45: #{pam_forward.7} parent=35 // pred_check
          %p1735 = pneg %p169
        $region46: #{pam_forward.7} parent=35 // pred_check_branch
          %1737 = sbr.rel (%p1735) target = $region48
        $region47: #{pam_forward.7} parent=35 // pred_region
          %s1738 = smul.u32 16, %s24
          %s1740 = ssub.s32 4096, 4096
          %1741 = vsyncadd %s1731, %s1740
          %s1742 = smul.addr %s1738, 2
          %s1743 = smul.addr %s23, 64
          %s1744 = sadd.s32 %s1742, %s1743
          %s1745 = smul.addr %s1744, 128
          %s1746 = scalar_lea.hbm %s4, %s1745
          %s1747 = sshll.u32 %s1734, 4
          %s1748 = int_to_ptr.vmem [resolvable:$true] %s1747
          %1753 = dma.vmem_to_hbm [thread:$0]  %s1748, 4096, %s1746, %s1731, 256, 256, 16
        $region48: #{pam_forward.7} parent=35 // pred_fallthru
          _
      $region36: #{pam_forward.7} parent=5 // pred_fallthru
        _
      %p1754 = scmp.le.s32.totalorder 2, %s13
      // Predicated region
      $region49: #{pam_forward.7} parent=5 // pred_check
        %p1755 = pneg %p1754
      $region50: #{pam_forward.7} parent=5 // pred_check_branch
        %1757 = sbr.rel (%p1755) target = $region52
      $region51: #{pam_forward.7} parent=5 // pred_region
        %s1758 = ssub.s32 %s13, 2
        // Predicated region
        $region53: #{pam_forward.7} parent=51 // pred_check
          %p1759 = pneg %p175
        $region54: #{pam_forward.7} parent=51 // pred_check_branch
          %1761 = sbr.rel (%p1759) target = $region56
        $region55: #{pam_forward.7} parent=51 // pred_region
          %s1762 = sand.u32 %s160, 1
          %s1763 = scalar_lea.sflag [#allocation6], %s1762
          %s1764 = sand.u32 %s160, 1
          %s1765 = smul.addr %s1764, 256
          %s1766 = scalar_lea.vmem [#allocation5], %s1765
          %1767 = dma.done %s1763, 4096
        $region56: #{pam_forward.7} parent=51 // pred_fallthru
          _
      $region52: #{pam_forward.7} parent=5 // pred_fallthru
        _
    $region6: #{pam_forward.7} parent=1 // loop_footer
      %s17 = sadd.s32 1, %s13
    $region7: #{pam_forward.7} parent=1 // loop_footer_branch
      %12 = sbr.rel target = $region3
    $region8: #{pam_forward.7} parent=1 // loop_exit
      _
    %1768 = vsyncpa [#allocation6], 1
    %s1769 = scalar_lea.sflag [#allocation6], 1
    %1770 = vsyncpa %s1769, 1

</llo_original>
